<compile_context>
chip_gen: v6e
topology: v6e:2x2x1
jax: 0.10.0
libtpu: 0.0.40
codegen_flags: <defaults>
</compile_context>

<pallas_src>
import functools

import jax
import jax.numpy as jnp
from jax import lax
from jax.experimental import pallas as pl
from jax.experimental.pallas import tpu as pltpu


def _basic_block_kernel(xpad_ref, w1_ref, s1_ref, b1_ref,
                        w2_ref, s2_ref, b2_ref, o_ref,
                        slab_ref, mid_ref, ident_ref, *, B, H, W, Cp):
    HW = H * W
    HP = H + 2   # padded height

    # ---- re-zero only the 1-pixel halo ring of the conv2 staging buffer ----
    # (kept per-step: a program_id==0-only zero would leave the halo
    #  uninitialized on the second TensorCore when the batch axis is sharded
    #  on v7x; these 4 stores are ~34 KB vs ~2.6 MB of per-image traffic.)
    zrow = jnp.zeros((1, W + 2, Cp), jnp.float32)
    zcol = jnp.zeros((H, 1, Cp), jnp.float32)
    mid_ref[0:1, :, :] = zrow
    mid_ref[H + 1:H + 2, :, :] = zrow
    mid_ref[1:1 + H, 0:1, :] = zcol
    mid_ref[1:1 + H, W + 1:W + 2, :] = zcol

    for b in range(B):   # B is small & static; unrolled per-image processing
        # ---------------- conv1 ----------------
        # 3 kw-shifted full-height slabs: the ONLY unaligned relayouts here.
        for kw in range(3):
            col = xpad_ref[b, :, kw:kw + W, :].reshape(HP * W, Cp)   # f32
            slab_ref[:, kw * Cp:(kw + 1) * Cp] = col.astype(jnp.bfloat16)
            if kw == 1:
                # residual = interior rows of the centre tap (already loaded,
                # kept in f32) — no separate identity relayout needed.
                ident_ref[...] = col[W:W + HW, :]

        # 3 matmuls (K = 3*Cp); LHS row offsets kh*W are sublane-aligned.
        acc1 = jnp.dot(slab_ref[0:HW, :], w1_ref[0],
                       preferred_element_type=jnp.float32)
        for kh in (1, 2):
            acc1 = acc1 + jnp.dot(slab_ref[kh * W:kh * W + HW, :], w1_ref[kh],
                                  preferred_element_type=jnp.float32)
        out1 = jnp.maximum(acc1 * s1_ref[...] + b1_ref[...], 0.0)   # bn1+relu

        # ---- stage intermediate inside its zero halo ----
        mid_ref[1:1 + H, 1:1 + W, :] = out1.reshape(H, W, Cp)

        # ---------------- conv2 (same 3-slab / 3-matmul structure) ----------
        for kw in range(3):
            col2 = mid_ref[:, kw:kw + W, :].reshape(HP * W, Cp)     # f32
            slab_ref[:, kw * Cp:(kw + 1) * Cp] = col2.astype(jnp.bfloat16)

        acc2 = jnp.dot(slab_ref[0:HW, :], w2_ref[0],
                       preferred_element_type=jnp.float32)
        for kh in (1, 2):
            acc2 = acc2 + jnp.dot(slab_ref[kh * W:kh * W + HW, :], w2_ref[kh],
                                  preferred_element_type=jnp.float32)

        # bn2 + residual (f32) + relu, lane-dense store
        out2 = acc2 * s2_ref[...] + b2_ref[...] + ident_ref[...]
        o_ref[b, :, :] = jnp.maximum(out2, 0.0)


def _round_up(x, m):
    return (x + m - 1) // m * m


def _pick_batch_block(N, max_b=8):
    """Largest divisor B of N (capped) that keeps the grid length >= 2."""
    if N <= 1:
        return 1
    best = 1
    for b in range(1, min(N, max_b) + 1):
        if N % b == 0 and (N // b) >= 2:
            best = b
    return best


def _fold_bn(bn, C, Cp, eps):
    scale = bn["gamma"] / jnp.sqrt(bn["var"] + eps)
    shift = bn["beta"] - bn["mean"] * scale
    scale = jnp.pad(scale.astype(jnp.float32), (0, Cp - C)).reshape(1, Cp)
    shift = jnp.pad(shift.astype(jnp.float32), (0, Cp - C)).reshape(1, Cp)
    return scale, shift


def _prep_weight(w, Cp):
    # torch (Cout, Cin, 3, 3) -> (kh, kw, Cin, Cout), zero-pad channels to Cp,
    # reshape to per-kh contraction matrices (3, 3*Cp, Cp) matching the
    # kw-major / cin-minor layout of the kw-shifted slabs.  bf16 for the MXU.
    Cout, Cin = w.shape[0], w.shape[1]
    w = jnp.transpose(w, (2, 3, 1, 0)).astype(jnp.float32)
    w = jnp.pad(w, ((0, 0), (0, 0), (0, Cp - Cin), (0, Cp - Cout)))
    return w.reshape(3, 3 * Cp, Cp).astype(jnp.bfloat16)


def basic_block_forward(x_nchw, w1, bn1, w2, bn2, eps=1e-5):
    """x_nchw: (N, C, H, W) f32.  w*: (Cout, Cin, 3, 3) torch layout.
    bn*: dict(gamma, beta, mean, var), each shape (Cout,).
    Implements BasicBlock with stride=1 and no downsample (module defaults)."""
    # TODO(synk): stride=2 / downsample branch of BasicBlock not implemented
    # (unused by the given module configuration).
    N, C, H, W = x_nchw.shape
    P = w1.shape[0]
    assert w1.shape[1] == C and tuple(w2.shape) == (P, P, 3, 3)
    assert C == P, "identity add requires inplanes == planes (no downsample)"
    assert W % 8 == 0, "sublane-aligned im2col row views require W % 8 == 0"

    Cp = _round_up(C, 128)               # lane-dense channel padding
    B = _pick_batch_block(N)             # images per grid step
    G = N // B

    x = jnp.transpose(x_nchw, (0, 2, 3, 1)).astype(jnp.float32)       # NHWC
    x_pad = jnp.pad(x, ((0, 0), (1, 1), (1, 1), (0, Cp - C)))         # spatial+channel pad

    w1k = _prep_weight(w1, Cp)
    w2k = _prep_weight(w2, Cp)
    s1, b1 = _fold_bn(bn1, C, Cp, eps)
    s2, b2 = _fold_bn(bn2, C, Cp, eps)

    kernel = functools.partial(_basic_block_kernel, B=B, H=H, W=W, Cp=Cp)

    # Footprint per step (double-buffered ins/outs + slab/mid/ident scratch)
    # is a few MB at these shapes; 32 MiB is an explicit cap that also fits
    # v7x's 64 MiB physical VMEM with headroom.
    vmem_limit = 32 * 1024 * 1024

    const3 = lambda n: (0, 0, 0)
    const2 = lambda n: (0, 0)

    out_flat = pl.pallas_call(
        kernel,
        out_shape=jax.ShapeDtypeStruct((N, H * W, Cp), jnp.float32),
        grid_spec=pltpu.PrefetchScalarGridSpec(
            num_scalar_prefetch=0,
            grid=(G,),
            in_specs=[
                pl.BlockSpec((B, H + 2, W + 2, Cp), lambda n: (n, 0, 0, 0)),
                # grid-invariant operands; at real ResNet widths add
                # pipeline_mode=pl.Buffered(1) to single-buffer them.
                pl.BlockSpec((3, 3 * Cp, Cp), const3),
                pl.BlockSpec((1, Cp), const2),
                pl.BlockSpec((1, Cp), const2),
                pl.BlockSpec((3, 3 * Cp, Cp), const3),
                pl.BlockSpec((1, Cp), const2),
                pl.BlockSpec((1, Cp), const2),
            ],
            out_specs=pl.BlockSpec((B, H * W, Cp), lambda n: (n, 0, 0)),
            scratch_shapes=[
                pltpu.VMEM(((H + 2) * W, 3 * Cp), jnp.bfloat16),   # kw-shifted slab (shared by both convs)
                pltpu.VMEM((H + 2, W + 2, Cp), jnp.float32),       # padded intermediate (zero halo)
                pltpu.VMEM((H * W, Cp), jnp.float32),              # f32 residual stash
            ],
        ),
        compiler_params=pltpu.CompilerParams(
            dimension_semantics=("parallel",),
            vmem_limit_bytes=vmem_limit),
    )(x_pad, w1k, s1, b1, w2k, s2, b2)

    out = out_flat.reshape(N, H, W, Cp)[:, :, :, :C]
    return jnp.transpose(out, (0, 3, 1, 2))                   # back to NCHW


# ---------------- reference (plain JAX) for sanity check ----------------
def _ref_forward(x_nchw, w1, bn1, w2, bn2, eps=1e-5, matmul_dtype=jnp.float32):
    def conv(a, w):
        return lax.conv_general_dilated(
            a.astype(matmul_dtype), w.astype(matmul_dtype),
            window_strides=(1, 1), padding=((1, 1), (1, 1)),
            dimension_numbers=("NCHW", "OIHW", "NCHW"),
            preferred_element_type=jnp.float32)

    def bn(a, p):
        scale = (p["gamma"] / jnp.sqrt(p["var"] + eps)).reshape(1, -1, 1, 1)
        shift = (p["beta"] - p["mean"] * p["gamma"] / jnp.sqrt(p["var"] + eps)).reshape(1, -1, 1, 1)
        return a * scale + shift

    out = jnp.maximum(bn(conv(x_nchw, w1), bn1), 0.0)
    out = bn(conv(out, w2), bn2) + x_nchw
    return jnp.maximum(out, 0.0)


if __name__ == "__main__":
    key = jax.random.PRNGKey(0)
    k_x, k_w1, k_w2, k_g1, k_b1, k_m1, k_v1, k_g2, k_b2, k_m2, k_v2 = jax.random.split(key, 11)

    N, C, H, W = 2, 4, 16, 16        # inplanes = planes = 4, stride = 1
    x = jax.random.normal(k_x, (N, C, H, W), jnp.float32)

    w1 = jax.random.normal(k_w1, (C, C, 3, 3), jnp.float32) * 0.1
    w2 = jax.random.normal(k_w2, (C, C, 3, 3), jnp.float32) * 0.1
    bn1 = dict(gamma=1.0 + 0.1 * jax.random.normal(k_g1, (C,), jnp.float32),
               beta=0.1 * jax.random.normal(k_b1, (C,), jnp.float32),
               mean=0.1 * jax.random.normal(k_m1, (C,), jnp.float32),
               var=jnp.abs(jax.random.normal(k_v1, (C,), jnp.float32)) + 0.5)
    bn2 = dict(gamma=1.0 + 0.1 * jax.random.normal(k_g2, (C,), jnp.float32),
               beta=0.1 * jax.random.normal(k_b2, (C,), jnp.float32),
               mean=0.1 * jax.random.normal(k_m2, (C,), jnp.float32),
               var=jnp.abs(jax.random.normal(k_v2, (C,), jnp.float32)) + 0.5)

    out = basic_block_forward(x, w1, bn1, w2, bn2)
    out = jax.block_until_ready(out)

    ref_bf16 = _ref_forward(x, w1, bn1, w2, bn2, matmul_dtype=jnp.bfloat16)
    ref_f32 = _ref_forward(x, w1, bn1, w2, bn2)

    assert out.shape == (N, C, H, W)
    # Tight check vs a reference using the same bf16-input / f32-accumulate matmul precision.
    assert jnp.allclose(out, ref_bf16, atol=2e-2, rtol=2e-2), "mismatch vs bf16-matmul reference"
    # Loose sanity check vs the pure-f32 reference (difference is bf16 MXU rounding only).
    assert jnp.allclose(out, ref_f32, atol=1e-1, rtol=1e-1), "mismatch vs f32 reference"

    print("KERNEL_OK")
</pallas_src>

<mosaic_0001>
module attributes {stable_mosaic.version = 11 : i64} {
  func.func @_basic_block_kernel(%arg0: i32, %arg1: memref<1x18x18x128xf32, #tpu.memory_space<vmem>>, %arg2: memref<3x384x128xbf16, #tpu.memory_space<vmem>>, %arg3: memref<1x128xf32, #tpu.memory_space<vmem>>, %arg4: memref<1x128xf32, #tpu.memory_space<vmem>>, %arg5: memref<3x384x128xbf16, #tpu.memory_space<vmem>>, %arg6: memref<1x128xf32, #tpu.memory_space<vmem>>, %arg7: memref<1x128xf32, #tpu.memory_space<vmem>>, %arg8: memref<1x256x128xf32, #tpu.memory_space<vmem>>, %arg9: memref<288x384xbf16, #tpu.memory_space<vmem>>, %arg10: memref<18x18x128xf32, #tpu.memory_space<vmem>>, %arg11: memref<256x128xf32, #tpu.memory_space<vmem>>) attributes {dimension_semantics = [#tpu.dimension_semantics<parallel>], iteration_bounds = array<i64: 2>, scalar_prefetch = 0 : i64, scratch_operands = 3 : i64, tpu.core_type = #tpu.core_type<tc>, window_params = [{transform_indices = @transform_0, window_bounds = array<i64: 1, 18, 18, 128>}, {pipeline_mode = #tpu.pipeline_mode<synchronous>, transform_indices = @transform_1, window_bounds = array<i64: 3, 384, 128>}, {pipeline_mode = #tpu.pipeline_mode<synchronous>, transform_indices = @transform_2, window_bounds = array<i64: 1, 128>}, {pipeline_mode = #tpu.pipeline_mode<synchronous>, transform_indices = @transform_3, window_bounds = array<i64: 1, 128>}, {pipeline_mode = #tpu.pipeline_mode<synchronous>, transform_indices = @transform_4, window_bounds = array<i64: 3, 384, 128>}, {pipeline_mode = #tpu.pipeline_mode<synchronous>, transform_indices = @transform_5, window_bounds = array<i64: 1, 128>}, {pipeline_mode = #tpu.pipeline_mode<synchronous>, transform_indices = @transform_6, window_bounds = array<i64: 1, 128>}, {transform_indices = @transform_7, window_bounds = array<i64: 1, 256, 128>}]} {
    %cst = arith.constant 0.000000e+00 : f32
    %0 = vector.broadcast %cst : f32 to vector<1x18x128xf32>
    %cst_0 = arith.constant 0.000000e+00 : f32
    %1 = vector.broadcast %cst_0 : f32 to vector<16x1x128xf32>
    %c0 = arith.constant 0 : index
    %c0_1 = arith.constant 0 : index
    %c0_2 = arith.constant 0 : index
    %2 = vector.load %arg10[%c0, %c0_1, %c0_2] : memref<18x18x128xf32, #tpu.memory_space<vmem>>, vector<1x18x128xf32>
    tpu.vector_store %arg10[%c0, %c0_1, %c0_2], %0 {strides = array<i32>} : memref<18x18x128xf32, #tpu.memory_space<vmem>>, vector<1x18x128xf32>,
    %c17 = arith.constant 17 : index
    %c0_3 = arith.constant 0 : index
    %c0_4 = arith.constant 0 : index
    %3 = vector.load %arg10[%c17, %c0_3, %c0_4] : memref<18x18x128xf32, #tpu.memory_space<vmem>>, vector<1x18x128xf32>
    tpu.vector_store %arg10[%c17, %c0_3, %c0_4], %0 {strides = array<i32>} : memref<18x18x128xf32, #tpu.memory_space<vmem>>, vector<1x18x128xf32>,
    %c1 = arith.constant 1 : index
    %c0_5 = arith.constant 0 : index
    %c0_6 = arith.constant 0 : index
    %4 = vector.load %arg10[%c1, %c0_5, %c0_6] : memref<18x18x128xf32, #tpu.memory_space<vmem>>, vector<16x1x128xf32>
    tpu.vector_store %arg10[%c1, %c0_5, %c0_6], %1 {strides = array<i32>} : memref<18x18x128xf32, #tpu.memory_space<vmem>>, vector<16x1x128xf32>,
    %c1_7 = arith.constant 1 : index
    %c17_8 = arith.constant 17 : index
    %c0_9 = arith.constant 0 : index
    %5 = vector.load %arg10[%c1_7, %c17_8, %c0_9] : memref<18x18x128xf32, #tpu.memory_space<vmem>>, vector<16x1x128xf32>
    tpu.vector_store %arg10[%c1_7, %c17_8, %c0_9], %1 {strides = array<i32>} : memref<18x18x128xf32, #tpu.memory_space<vmem>>, vector<16x1x128xf32>,
    %c0_10 = arith.constant 0 : index
    %c0_11 = arith.constant 0 : index
    %c0_12 = arith.constant 0 : index
    %c0_13 = arith.constant 0 : index
    %6 = vector.load %arg1[%c0_10, %c0_11, %c0_12, %c0_13] : memref<1x18x18x128xf32, #tpu.memory_space<vmem>>, vector<1x18x16x128xf32>
    %7 = vector.shape_cast %6 : vector<1x18x16x128xf32> to vector<18x16x128xf32>
    %8 = vector.shape_cast %7 : vector<18x16x128xf32> to vector<288x128xf32>
    %9 = arith.truncf %8 : vector<288x128xf32> to vector<288x128xbf16>
    %c0_14 = arith.constant 0 : index
    %c0_15 = arith.constant 0 : index
    %10 = vector.load %arg9[%c0_14, %c0_15] : memref<288x384xbf16, #tpu.memory_space<vmem>>, vector<288x128xbf16>
    tpu.vector_store %arg9[%c0_14, %c0_15], %9 {strides = array<i32>} : memref<288x384xbf16, #tpu.memory_space<vmem>>, vector<288x128xbf16>,
    %c0_16 = arith.constant 0 : index
    %c0_17 = arith.constant 0 : index
    %c1_18 = arith.constant 1 : index
    %c0_19 = arith.constant 0 : index
    %11 = vector.load %arg1[%c0_16, %c0_17, %c1_18, %c0_19] : memref<1x18x18x128xf32, #tpu.memory_space<vmem>>, vector<1x18x16x128xf32>
    %12 = vector.shape_cast %11 : vector<1x18x16x128xf32> to vector<18x16x128xf32>
    %13 = vector.shape_cast %12 : vector<18x16x128xf32> to vector<288x128xf32>
    %14 = arith.truncf %13 : vector<288x128xf32> to vector<288x128xbf16>
    %c0_20 = arith.constant 0 : index
    %c128 = arith.constant 128 : index
    %15 = vector.load %arg9[%c0_20, %c128] : memref<288x384xbf16, #tpu.memory_space<vmem>>, vector<288x128xbf16>
    tpu.vector_store %arg9[%c0_20, %c128], %14 {strides = array<i32>} : memref<288x384xbf16, #tpu.memory_space<vmem>>, vector<288x128xbf16>,
    %16 = vector.extract_strided_slice %13 {offsets = [16, 0], sizes = [256, 128], strides = [1, 1]} : vector<288x128xf32> to vector<256x128xf32>
    %c0_21 = arith.constant 0 : index
    %c0_22 = arith.constant 0 : index
    %17 = vector.load %arg11[%c0_21, %c0_22] : memref<256x128xf32, #tpu.memory_space<vmem>>, vector<256x128xf32>
    tpu.vector_store %arg11[%c0_21, %c0_22], %16 {strides = array<i32>} : memref<256x128xf32, #tpu.memory_space<vmem>>, vector<256x128xf32>,
    %c0_23 = arith.constant 0 : index
    %c0_24 = arith.constant 0 : index
    %c2 = arith.constant 2 : index
    %c0_25 = arith.constant 0 : index
    %18 = vector.load %arg1[%c0_23, %c0_24, %c2, %c0_25] : memref<1x18x18x128xf32, #tpu.memory_space<vmem>>, vector<1x18x16x128xf32>
    %19 = vector.shape_cast %18 : vector<1x18x16x128xf32> to vector<18x16x128xf32>
    %20 = vector.shape_cast %19 : vector<18x16x128xf32> to vector<288x128xf32>
    %21 = arith.truncf %20 : vector<288x128xf32> to vector<288x128xbf16>
    %c0_26 = arith.constant 0 : index
    %c256 = arith.constant 256 : index
    %22 = vector.load %arg9[%c0_26, %c256] : memref<288x384xbf16, #tpu.memory_space<vmem>>, vector<288x128xbf16>
    tpu.vector_store %arg9[%c0_26, %c256], %21 {strides = array<i32>} : memref<288x384xbf16, #tpu.memory_space<vmem>>, vector<288x128xbf16>,
    %c0_27 = arith.constant 0 : index
    %c0_28 = arith.constant 0 : index
    %23 = vector.load %arg9[%c0_27, %c0_28] : memref<288x384xbf16, #tpu.memory_space<vmem>>, vector<256x384xbf16>
    %c0_29 = arith.constant 0 : index
    %c0_30 = arith.constant 0 : index
    %c0_31 = arith.constant 0 : index
    %24 = vector.load %arg2[%c0_29, %c0_30, %c0_31] : memref<3x384x128xbf16, #tpu.memory_space<vmem>>, vector<1x384x128xbf16>
    %25 = vector.shape_cast %24 : vector<1x384x128xbf16> to vector<384x128xbf16>
    %cst_32 = arith.constant dense<0.000000e+00> : vector<256x128xf32>
    %26 = tpu.matmul %23, %25, %cst_32 {dimension_numbers = #tpu.dot_dimension_numbers<[1], [0], [0], [1], [0, 0, 1, 1], [], []>} : vector<256x384xbf16>, vector<384x128xbf16>, vector<256x128xf32> -> vector<256x128xf32>
    %c16 = arith.constant 16 : index
    %c0_33 = arith.constant 0 : index
    %27 = vector.load %arg9[%c16, %c0_33] : memref<288x384xbf16, #tpu.memory_space<vmem>>, vector<256x384xbf16>
    %c1_34 = arith.constant 1 : index
    %c0_35 = arith.constant 0 : index
    %c0_36 = arith.constant 0 : index
    %28 = vector.load %arg2[%c1_34, %c0_35, %c0_36] : memref<3x384x128xbf16, #tpu.memory_space<vmem>>, vector<1x384x128xbf16>
    %29 = vector.shape_cast %28 : vector<1x384x128xbf16> to vector<384x128xbf16>
    %cst_37 = arith.constant dense<0.000000e+00> : vector<256x128xf32>
    %30 = tpu.matmul %27, %29, %cst_37 {dimension_numbers = #tpu.dot_dimension_numbers<[1], [0], [0], [1], [0, 0, 1, 1], [], []>} : vector<256x384xbf16>, vector<384x128xbf16>, vector<256x128xf32> -> vector<256x128xf32>
    %31 = arith.addf %26, %30 : vector<256x128xf32>
    %c32 = arith.constant 32 : index
    %c0_38 = arith.constant 0 : index
    %32 = vector.load %arg9[%c32, %c0_38] : memref<288x384xbf16, #tpu.memory_space<vmem>>, vector<256x384xbf16>
    %c2_39 = arith.constant 2 : index
    %c0_40 = arith.constant 0 : index
    %c0_41 = arith.constant 0 : index
    %33 = vector.load %arg2[%c2_39, %c0_40, %c0_41] : memref<3x384x128xbf16, #tpu.memory_space<vmem>>, vector<1x384x128xbf16>
    %34 = vector.shape_cast %33 : vector<1x384x128xbf16> to vector<384x128xbf16>
    %cst_42 = arith.constant dense<0.000000e+00> : vector<256x128xf32>
    %35 = tpu.matmul %32, %34, %cst_42 {dimension_numbers = #tpu.dot_dimension_numbers<[1], [0], [0], [1], [0, 0, 1, 1], [], []>} : vector<256x384xbf16>, vector<384x128xbf16>, vector<256x128xf32> -> vector<256x128xf32>
    %36 = arith.addf %31, %35 : vector<256x128xf32>
    %c0_43 = arith.constant 0 : index
    %c0_44 = arith.constant 0 : index
    %37 = vector.load %arg3[%c0_43, %c0_44] : memref<1x128xf32, #tpu.memory_space<vmem>>, vector<1x128xf32>
    %38 = vector.broadcast %37 : vector<1x128xf32> to vector<256x128xf32>
    %39 = arith.mulf %36, %38 : vector<256x128xf32>
    %c0_45 = arith.constant 0 : index
    %c0_46 = arith.constant 0 : index
    %40 = vector.load %arg4[%c0_45, %c0_46] : memref<1x128xf32, #tpu.memory_space<vmem>>, vector<1x128xf32>
    %41 = vector.broadcast %40 : vector<1x128xf32> to vector<256x128xf32>
    %42 = arith.addf %39, %41 : vector<256x128xf32>
    %cst_47 = arith.constant 0.000000e+00 : f32
    %43 = vector.broadcast %cst_47 : f32 to vector<256x128xf32>
    %44 = arith.maximumf %42, %43 : vector<256x128xf32>
    %45 = vector.shape_cast %44 : vector<256x128xf32> to vector<16x16x128xf32>
    %c1_48 = arith.constant 1 : index
    %c1_49 = arith.constant 1 : index
    %c0_50 = arith.constant 0 : index
    %46 = vector.load %arg10[%c1_48, %c1_49, %c0_50] : memref<18x18x128xf32, #tpu.memory_space<vmem>>, vector<16x16x128xf32>
    tpu.vector_store %arg10[%c1_48, %c1_49, %c0_50], %45 {strides = array<i32>} : memref<18x18x128xf32, #tpu.memory_space<vmem>>, vector<16x16x128xf32>,
    %c0_51 = arith.constant 0 : index
    %c0_52 = arith.constant 0 : index
    %c0_53 = arith.constant 0 : index
    %47 = vector.load %arg10[%c0_51, %c0_52, %c0_53] : memref<18x18x128xf32, #tpu.memory_space<vmem>>, vector<18x16x128xf32>
    %48 = vector.shape_cast %47 : vector<18x16x128xf32> to vector<288x128xf32>
    %49 = arith.truncf %48 : vector<288x128xf32> to vector<288x128xbf16>
    %c0_54 = arith.constant 0 : index
    %c0_55 = arith.constant 0 : index
    %50 = vector.load %arg9[%c0_54, %c0_55] : memref<288x384xbf16, #tpu.memory_space<vmem>>, vector<288x128xbf16>
    tpu.vector_store %arg9[%c0_54, %c0_55], %49 {strides = array<i32>} : memref<288x384xbf16, #tpu.memory_space<vmem>>, vector<288x128xbf16>,
    %c0_56 = arith.constant 0 : index
    %c1_57 = arith.constant 1 : index
    %c0_58 = arith.constant 0 : index
    %51 = vector.load %arg10[%c0_56, %c1_57, %c0_58] : memref<18x18x128xf32, #tpu.memory_space<vmem>>, vector<18x16x128xf32>
    %52 = vector.shape_cast %51 : vector<18x16x128xf32> to vector<288x128xf32>
    %53 = arith.truncf %52 : vector<288x128xf32> to vector<288x128xbf16>
    %c0_59 = arith.constant 0 : index
    %c128_60 = arith.constant 128 : index
    %54 = vector.load %arg9[%c0_59, %c128_60] : memref<288x384xbf16, #tpu.memory_space<vmem>>, vector<288x128xbf16>
    tpu.vector_store %arg9[%c0_59, %c128_60], %53 {strides = array<i32>} : memref<288x384xbf16, #tpu.memory_space<vmem>>, vector<288x128xbf16>,
    %c0_61 = arith.constant 0 : index
    %c2_62 = arith.constant 2 : index
    %c0_63 = arith.constant 0 : index
    %55 = vector.load %arg10[%c0_61, %c2_62, %c0_63] : memref<18x18x128xf32, #tpu.memory_space<vmem>>, vector<18x16x128xf32>
    %56 = vector.shape_cast %55 : vector<18x16x128xf32> to vector<288x128xf32>
    %57 = arith.truncf %56 : vector<288x128xf32> to vector<288x128xbf16>
    %c0_64 = arith.constant 0 : index
    %c256_65 = arith.constant 256 : index
    %58 = vector.load %arg9[%c0_64, %c256_65] : memref<288x384xbf16, #tpu.memory_space<vmem>>, vector<288x128xbf16>
    tpu.vector_store %arg9[%c0_64, %c256_65], %57 {strides = array<i32>} : memref<288x384xbf16, #tpu.memory_space<vmem>>, vector<288x128xbf16>,
    %c0_66 = arith.constant 0 : index
    %c0_67 = arith.constant 0 : index
    %59 = vector.load %arg9[%c0_66, %c0_67] : memref<288x384xbf16, #tpu.memory_space<vmem>>, vector<256x384xbf16>
    %c0_68 = arith.constant 0 : index
    %c0_69 = arith.constant 0 : index
    %c0_70 = arith.constant 0 : index
    %60 = vector.load %arg5[%c0_68, %c0_69, %c0_70] : memref<3x384x128xbf16, #tpu.memory_space<vmem>>, vector<1x384x128xbf16>
    %61 = vector.shape_cast %60 : vector<1x384x128xbf16> to vector<384x128xbf16>
    %cst_71 = arith.constant dense<0.000000e+00> : vector<256x128xf32>
    %62 = tpu.matmul %59, %61, %cst_71 {dimension_numbers = #tpu.dot_dimension_numbers<[1], [0], [0], [1], [0, 0, 1, 1], [], []>} : vector<256x384xbf16>, vector<384x128xbf16>, vector<256x128xf32> -> vector<256x128xf32>
    %c16_72 = arith.constant 16 : index
    %c0_73 = arith.constant 0 : index
    %63 = vector.load %arg9[%c16_72, %c0_73] : memref<288x384xbf16, #tpu.memory_space<vmem>>, vector<256x384xbf16>
    %c1_74 = arith.constant 1 : index
    %c0_75 = arith.constant 0 : index
    %c0_76 = arith.constant 0 : index
    %64 = vector.load %arg5[%c1_74, %c0_75, %c0_76] : memref<3x384x128xbf16, #tpu.memory_space<vmem>>, vector<1x384x128xbf16>
    %65 = vector.shape_cast %64 : vector<1x384x128xbf16> to vector<384x128xbf16>
    %cst_77 = arith.constant dense<0.000000e+00> : vector<256x128xf32>
    %66 = tpu.matmul %63, %65, %cst_77 {dimension_numbers = #tpu.dot_dimension_numbers<[1], [0], [0], [1], [0, 0, 1, 1], [], []>} : vector<256x384xbf16>, vector<384x128xbf16>, vector<256x128xf32> -> vector<256x128xf32>
    %67 = arith.addf %62, %66 : vector<256x128xf32>
    %c32_78 = arith.constant 32 : index
    %c0_79 = arith.constant 0 : index
    %68 = vector.load %arg9[%c32_78, %c0_79] : memref<288x384xbf16, #tpu.memory_space<vmem>>, vector<256x384xbf16>
    %c2_80 = arith.constant 2 : index
    %c0_81 = arith.constant 0 : index
    %c0_82 = arith.constant 0 : index
    %69 = vector.load %arg5[%c2_80, %c0_81, %c0_82] : memref<3x384x128xbf16, #tpu.memory_space<vmem>>, vector<1x384x128xbf16>
    %70 = vector.shape_cast %69 : vector<1x384x128xbf16> to vector<384x128xbf16>
    %cst_83 = arith.constant dense<0.000000e+00> : vector<256x128xf32>
    %71 = tpu.matmul %68, %70, %cst_83 {dimension_numbers = #tpu.dot_dimension_numbers<[1], [0], [0], [1], [0, 0, 1, 1], [], []>} : vector<256x384xbf16>, vector<384x128xbf16>, vector<256x128xf32> -> vector<256x128xf32>
    %72 = arith.addf %67, %71 : vector<256x128xf32>
    %c0_84 = arith.constant 0 : index
    %c0_85 = arith.constant 0 : index
    %73 = vector.load %arg6[%c0_84, %c0_85] : memref<1x128xf32, #tpu.memory_space<vmem>>, vector<1x128xf32>
    %74 = vector.broadcast %73 : vector<1x128xf32> to vector<256x128xf32>
    %75 = arith.mulf %72, %74 : vector<256x128xf32>
    %c0_86 = arith.constant 0 : index
    %c0_87 = arith.constant 0 : index
    %76 = vector.load %arg7[%c0_86, %c0_87] : memref<1x128xf32, #tpu.memory_space<vmem>>, vector<1x128xf32>
    %77 = vector.broadcast %76 : vector<1x128xf32> to vector<256x128xf32>
    %78 = arith.addf %75, %77 : vector<256x128xf32>
    %c0_88 = arith.constant 0 : index
    %c0_89 = arith.constant 0 : index
    %79 = vector.load %arg11[%c0_88, %c0_89] : memref<256x128xf32, #tpu.memory_space<vmem>>, vector<256x128xf32>
    %80 = arith.addf %78, %79 : vector<256x128xf32>
    %cst_90 = arith.constant 0.000000e+00 : f32
    %81 = vector.broadcast %cst_90 : f32 to vector<256x128xf32>
    %82 = arith.maximumf %80, %81 : vector<256x128xf32>
    %c0_91 = arith.constant 0 : index
    %c0_92 = arith.constant 0 : index
    %c0_93 = arith.constant 0 : index
    %83 = vector.load %arg8[%c0_91, %c0_92, %c0_93] : memref<1x256x128xf32, #tpu.memory_space<vmem>>, vector<1x256x128xf32>
    %84 = vector.shape_cast %83 : vector<1x256x128xf32> to vector<256x128xf32>
    %85 = vector.shape_cast %82 : vector<256x128xf32> to vector<1x256x128xf32>
    tpu.vector_store %arg8[%c0_91, %c0_92, %c0_93], %85 {strides = array<i32>} : memref<1x256x128xf32, #tpu.memory_space<vmem>>, vector<1x256x128xf32>,
    return
  }
  func.func @transform_0(%arg0: i32) -> (i32, i32, i32, i32) {
    %c0_i32 = arith.constant 0 : i32
    %c0_i32_0 = arith.constant 0 : i32
    %c0_i32_1 = arith.constant 0 : i32
    %c0_i32_2 = arith.constant 0 : i32
    return %arg0, %c0_i32, %c0_i32_0, %c0_i32_1 : i32, i32, i32, i32
  }
  func.func @transform_1(%arg0: i32) -> (i32, i32, i32) {
    %c0_i32 = arith.constant 0 : i32
    %c0_i32_0 = arith.constant 0 : i32
    %c0_i32_1 = arith.constant 0 : i32
    %c0_i32_2 = arith.constant 0 : i32
    return %c0_i32, %c0_i32_0, %c0_i32_1 : i32, i32, i32
  }
  func.func @transform_2(%arg0: i32) -> (i32, i32) {
    %c0_i32 = arith.constant 0 : i32
    %c0_i32_0 = arith.constant 0 : i32
    %c0_i32_1 = arith.constant 0 : i32
    return %c0_i32, %c0_i32_0 : i32, i32
  }
  func.func @transform_3(%arg0: i32) -> (i32, i32) {
    %c0_i32 = arith.constant 0 : i32
    %c0_i32_0 = arith.constant 0 : i32
    %c0_i32_1 = arith.constant 0 : i32
    return %c0_i32, %c0_i32_0 : i32, i32
  }
  func.func @transform_4(%arg0: i32) -> (i32, i32, i32) {
    %c0_i32 = arith.constant 0 : i32
    %c0_i32_0 = arith.constant 0 : i32
    %c0_i32_1 = arith.constant 0 : i32
    %c0_i32_2 = arith.constant 0 : i32
    return %c0_i32, %c0_i32_0, %c0_i32_1 : i32, i32, i32
  }
  func.func @transform_5(%arg0: i32) -> (i32, i32) {
    %c0_i32 = arith.constant 0 : i32
    %c0_i32_0 = arith.constant 0 : i32
    %c0_i32_1 = arith.constant 0 : i32
    return %c0_i32, %c0_i32_0 : i32, i32
  }
  func.func @transform_6(%arg0: i32) -> (i32, i32) {
    %c0_i32 = arith.constant 0 : i32
    %c0_i32_0 = arith.constant 0 : i32
    %c0_i32_1 = arith.constant 0 : i32
    return %c0_i32, %c0_i32_0 : i32, i32
  }
  func.func @transform_7(%arg0: i32) -> (i32, i32, i32) {
    %c0_i32 = arith.constant 0 : i32
    %c0_i32_0 = arith.constant 0 : i32
    %c0_i32_1 = arith.constant 0 : i32
    return %arg0, %c0_i32, %c0_i32_0 : i32, i32, i32
  }
}

</mosaic_0001>

<llo_original>
// kernel: tpu_custom_call.1
$region0: #{tpu_custom_call.1}
  #allocation0 [shape = 'u32[]', space=smem, size = 0x4, offset = 0x4, fixed_abs, tag = 'smem constant byte address 0x4 - core index']
  #allocation1 [shape = 'u32[144,128]{1,0:T(1,128)}', space=vmem, size = 0x12000, scoped, tag = 'internal scratch']
  #allocation2 [shape = 'bf16[288,384]{1,0:T(8,128)(2,1)}', space=vmem, size = 0x36000, scoped, tag = 'scratch operand']
  #allocation3 [shape = 'f32[18,18,128]{2,1,0:T(8,128)}', space=vmem, size = 0x36000, scoped, tag = 'scratch operand']
  #allocation4 [shape = 'f32[256,128]{1,0:T(8,128)}', space=vmem, size = 0x20000, scoped, tag = 'scratch operand']
  %s0 = inlined_call_operand.vmem [shape: f32[2,18,18,128], index: 0, kind: input, shape index: {}]
  %s1 = inlined_call_operand.vmem [shape: bf16[3,384,128], index: 1, kind: input, shape index: {}]
  %s2 = inlined_call_operand.vmem [shape: f32[1,128], index: 2, kind: input, shape index: {}]
  %s3 = inlined_call_operand.vmem [shape: f32[1,128], index: 3, kind: input, shape index: {}]
  %s4 = inlined_call_operand.vmem [shape: bf16[3,384,128], index: 4, kind: input, shape index: {}]
  %s5 = inlined_call_operand.vmem [shape: f32[1,128], index: 5, kind: input, shape index: {}]
  %s6 = inlined_call_operand.vmem [shape: f32[1,128], index: 6, kind: input, shape index: {}]
  %s7 = inlined_call_operand.hbm [shape: f32[2,256,128], index: 7, kind: output, shape index: {}]
  %s8 = sld [smem:[#allocation0]]
  $region61: #{tpu_custom_call.1} parent=0
    _
  %s10 = ssub.s32 1, %s8
  %s11 = scalar_select 0, %s10, %s8
  $region1: #{tpu_custom_call.1} parent=0
    #allocation5 [shape = 'u8[262144]{0}', space=vmem, size = 0x40000, scoped, tag = 'output window, operand 0']
    #allocation6 [shape = 's32[2]{0}', space=sflag, size = 0x8, scoped, tag = 'scoped memory for tpu_custom_call.1']
    %12 = vsyncpa [#allocation6], 0
    %s13 = scalar_lea.sflag [#allocation6], 1
    %14 = vsyncpa %s13, 0
    loop: start=0, step=1, limit=4
    $region2: #{tpu_custom_call.1} parent=1 // loop_pre_header
      _
    $region3: #{tpu_custom_call.1} parent=1 // loop_header
      %s16 = sphi 0, %s20
      %p17 = scmp.ge.s32.totalorder %s16, 4
      %s26 = sphi 0, %s28
      %s29 = sphi 0, %s26
      %s30 = sphi 0, %s29
      %s46 = sphi 0, %s30
      %s50 = sphi 0, %s50
      %s52 = sphi 0, %s50
      %s53 = sphi 0, %s52
      %s67 = sphi 0, %s53
      %s71 = sphi 0, %s71
      %s73 = sphi 0, %s71
      %s74 = sphi 0, %s73
      %s88 = sphi 0, %s74
      %s92 = sphi 0, %s92
      %s94 = sphi 0, %s92
      %s95 = sphi 0, %s94
      %s109 = sphi 0, %s95
      %s113 = sphi 0, %s113
      %s115 = sphi 0, %s113
      %s116 = sphi 0, %s115
      %s130 = sphi 0, %s116
      %s134 = sphi 0, %s134
      %s136 = sphi 0, %s134
      %s137 = sphi 0, %s136
      %s151 = sphi 0, %s137
      %s155 = sphi 0, %s155
      %s157 = sphi 0, %s155
      %s158 = sphi 0, %s157
      %s172 = sphi 0, %s158
      %s178 = sphi 0, %s180
      %s181 = sphi 0, %s178
      %s182 = sphi 0, %s181
      %s198 = sphi 0, %s182
    $region4: #{tpu_custom_call.1} parent=1 // loop_header_branch
      %19 = sbr.rel (%p17) target = $region8
    $region5: #{tpu_custom_call.1} parent=1 // loop_body
      %s21 = ssub.s32 %s16, 1
      %s22 = ssub.s32 %s16, 2
      %s23 = sadd.s32 %s16, 1
      %s24 = ssub.s32 %s16, %s23
      %p25 = scmp.eq.s32.totalorder %s24, 0
      %s27 = sadd.s32 %s26, 1
      %s28 = scalar_select %p25, %s26, %s27
      %p31 = pneg %p25
      %p32 = scmp.eq.s32.totalorder %s16, 1
      %p33 = por %p31, %p32
      %p34 = scmp.ne.s32.totalorder %s26, %s29
      %p35 = scmp.eq.s32.totalorder %s16, 0
      %p36 = por %p34, %p35
      %p37 = scmp.ne.s32.totalorder %s26, %s29
      %p38 = scmp.eq.s32.totalorder %s21, 1
      %p39 = por %p37, %p38
      %p40 = scmp.ne.s32.totalorder %s29, %s30
      %p41 = scmp.eq.s32.totalorder %s21, 0
      %p42 = por %p40, %p41
      %p43 = scmp.ne.s32.totalorder %s29, %s30
      %p44 = scmp.eq.s32.totalorder %s22, 1
      %p45 = por %p43, %p44
      %p47 = scmp.ne.s32.totalorder %s30, %s46
      %p48 = scmp.eq.s32.totalorder %s22, 0
      %p49 = por %p47, %p48
      %s51 = sadd.s32 %s50, 1
      %p54 = scmp.eq.s32.totalorder %s16, 1
      %p55 = scmp.ne.s32.totalorder %s50, %s52
      %p56 = scmp.eq.s32.totalorder %s16, 0
      %p57 = por %p55, %p56
      %p58 = scmp.ne.s32.totalorder %s50, %s52
      %p59 = scmp.eq.s32.totalorder %s21, 1
      %p60 = por %p58, %p59
      %p61 = scmp.ne.s32.totalorder %s52, %s53
      %p62 = scmp.eq.s32.totalorder %s21, 0
      %p63 = por %p61, %p62
      %p64 = scmp.ne.s32.totalorder %s52, %s53
      %p65 = scmp.eq.s32.totalorder %s22, 1
      %p66 = por %p64, %p65
      %p68 = scmp.ne.s32.totalorder %s53, %s67
      %p69 = scmp.eq.s32.totalorder %s22, 0
      %p70 = por %p68, %p69
      %s72 = sadd.s32 %s71, 1
      %p75 = scmp.eq.s32.totalorder %s16, 1
      %p76 = scmp.ne.s32.totalorder %s71, %s73
      %p77 = scmp.eq.s32.totalorder %s16, 0
      %p78 = por %p76, %p77
      %p79 = scmp.ne.s32.totalorder %s71, %s73
      %p80 = scmp.eq.s32.totalorder %s21, 1
      %p81 = por %p79, %p80
      %p82 = scmp.ne.s32.totalorder %s73, %s74
      %p83 = scmp.eq.s32.totalorder %s21, 0
      %p84 = por %p82, %p83
      %p85 = scmp.ne.s32.totalorder %s73, %s74
      %p86 = scmp.eq.s32.totalorder %s22, 1
      %p87 = por %p85, %p86
      %p89 = scmp.ne.s32.totalorder %s74, %s88
      %p90 = scmp.eq.s32.totalorder %s22, 0
      %p91 = por %p89, %p90
      %s93 = sadd.s32 %s92, 1
      %p96 = scmp.eq.s32.totalorder %s16, 1
      %p97 = scmp.ne.s32.totalorder %s92, %s94
      %p98 = scmp.eq.s32.totalorder %s16, 0
      %p99 = por %p97, %p98
      %p100 = scmp.ne.s32.totalorder %s92, %s94
      %p101 = scmp.eq.s32.totalorder %s21, 1
      %p102 = por %p100, %p101
      %p103 = scmp.ne.s32.totalorder %s94, %s95
      %p104 = scmp.eq.s32.totalorder %s21, 0
      %p105 = por %p103, %p104
      %p106 = scmp.ne.s32.totalorder %s94, %s95
      %p107 = scmp.eq.s32.totalorder %s22, 1
      %p108 = por %p106, %p107
      %p110 = scmp.ne.s32.totalorder %s95, %s109
      %p111 = scmp.eq.s32.totalorder %s22, 0
      %p112 = por %p110, %p111
      %s114 = sadd.s32 %s113, 1
      %p117 = scmp.eq.s32.totalorder %s16, 1
      %p118 = scmp.ne.s32.totalorder %s113, %s115
      %p119 = scmp.eq.s32.totalorder %s16, 0
      %p120 = por %p118, %p119
      %p121 = scmp.ne.s32.totalorder %s113, %s115
      %p122 = scmp.eq.s32.totalorder %s21, 1
      %p123 = por %p121, %p122
      %p124 = scmp.ne.s32.totalorder %s115, %s116
      %p125 = scmp.eq.s32.totalorder %s21, 0
      %p126 = por %p124, %p125
      %p127 = scmp.ne.s32.totalorder %s115, %s116
      %p128 = scmp.eq.s32.totalorder %s22, 1
      %p129 = por %p127, %p128
      %p131 = scmp.ne.s32.totalorder %s116, %s130
      %p132 = scmp.eq.s32.totalorder %s22, 0
      %p133 = por %p131, %p132
      %s135 = sadd.s32 %s134, 1
      %p138 = scmp.eq.s32.totalorder %s16, 1
      %p139 = scmp.ne.s32.totalorder %s134, %s136
      %p140 = scmp.eq.s32.totalorder %s16, 0
      %p141 = por %p139, %p140
      %p142 = scmp.ne.s32.totalorder %s134, %s136
      %p143 = scmp.eq.s32.totalorder %s21, 1
      %p144 = por %p142, %p143
      %p145 = scmp.ne.s32.totalorder %s136, %s137
      %p146 = scmp.eq.s32.totalorder %s21, 0
      %p147 = por %p145, %p146
      %p148 = scmp.ne.s32.totalorder %s136, %s137
      %p149 = scmp.eq.s32.totalorder %s22, 1
      %p150 = por %p148, %p149
      %p152 = scmp.ne.s32.totalorder %s137, %s151
      %p153 = scmp.eq.s32.totalorder %s22, 0
      %p154 = por %p152, %p153
      %s156 = sadd.s32 %s155, 1
      %p159 = scmp.eq.s32.totalorder %s16, 1
      %p160 = scmp.ne.s32.totalorder %s155, %s157
      %p161 = scmp.eq.s32.totalorder %s16, 0
      %p162 = por %p160, %p161
      %p163 = scmp.ne.s32.totalorder %s155, %s157
      %p164 = scmp.eq.s32.totalorder %s21, 1
      %p165 = por %p163, %p164
      %p166 = scmp.ne.s32.totalorder %s157, %s158
      %p167 = scmp.eq.s32.totalorder %s21, 0
      %p168 = por %p166, %p167
      %p169 = scmp.ne.s32.totalorder %s157, %s158
      %p170 = scmp.eq.s32.totalorder %s22, 1
      %p171 = por %p169, %p170
      %p173 = scmp.ne.s32.totalorder %s158, %s172
      %p174 = scmp.eq.s32.totalorder %s22, 0
      %p175 = por %p173, %p174
      %s176 = ssub.s32 %s16, %s23
      %p177 = scmp.eq.s32.totalorder %s176, 0
      %s179 = sadd.s32 %s178, 1
      %s180 = scalar_select %p177, %s178, %s179
      %p183 = pneg %p177
      %p184 = scmp.eq.s32.totalorder %s16, 1
      %p185 = por %p183, %p184
      %p186 = scmp.ne.s32.totalorder %s178, %s181
      %p187 = scmp.eq.s32.totalorder %s16, 0
      %p188 = por %p186, %p187
      %p189 = scmp.ne.s32.totalorder %s178, %s181
      %p190 = scmp.eq.s32.totalorder %s21, 1
      %p191 = por %p189, %p190
      %p192 = scmp.ne.s32.totalorder %s181, %s182
      %p193 = scmp.eq.s32.totalorder %s21, 0
      %p194 = por %p192, %p193
      %p195 = scmp.ne.s32.totalorder %s181, %s182
      %p196 = scmp.eq.s32.totalorder %s22, 1
      %p197 = por %p195, %p196
      %p199 = scmp.ne.s32.totalorder %s182, %s198
      %p200 = scmp.eq.s32.totalorder %s22, 0
      %p201 = por %p199, %p200
      %p202 = scmp.le.s32.totalorder 1, %s16
      %p203 = scmp.lt.s32.totalorder %s16, 3
      %p204 = pnand %p202, %p203
      %p205 = pneg %p204
      // Predicated region
      $region9: #{tpu_custom_call.1} parent=5 // pred_check
        _
      $region10: #{tpu_custom_call.1} parent=5 // pred_check_branch
        %207 = sbr.rel (%p204) target = $region12
      $region11: #{tpu_custom_call.1} parent=5 // pred_region
        %s208 = ssub.s32 %s16, 1
        // Predicated region
        $region13: #{tpu_custom_call.1} parent=11 // pred_check
          %p209 = pneg %p63
        $region14: #{tpu_custom_call.1} parent=11 // pred_check_branch
          %211 = sbr.rel (%p209) target = $region16
        $region15: #{tpu_custom_call.1} parent=11 // pred_region
          _
        $region16: #{tpu_custom_call.1} parent=11 // pred_fallthru
          _
        // Predicated region
        $region17: #{tpu_custom_call.1} parent=11 // pred_check
          %p212 = pneg %p84
        $region18: #{tpu_custom_call.1} parent=11 // pred_check_branch
          %214 = sbr.rel (%p212) target = $region20
        $region19: #{tpu_custom_call.1} parent=11 // pred_region
          _
        $region20: #{tpu_custom_call.1} parent=11 // pred_fallthru
          _
        // Predicated region
        $region21: #{tpu_custom_call.1} parent=11 // pred_check
          %p215 = pneg %p105
        $region22: #{tpu_custom_call.1} parent=11 // pred_check_branch
          %217 = sbr.rel (%p215) target = $region24
        $region23: #{tpu_custom_call.1} parent=11 // pred_region
          _
        $region24: #{tpu_custom_call.1} parent=11 // pred_fallthru
          _
        // Predicated region
        $region25: #{tpu_custom_call.1} parent=11 // pred_check
          %p218 = pneg %p126
        $region26: #{tpu_custom_call.1} parent=11 // pred_check_branch
          %220 = sbr.rel (%p218) target = $region28
        $region27: #{tpu_custom_call.1} parent=11 // pred_region
          _
        $region28: #{tpu_custom_call.1} parent=11 // pred_fallthru
          _
        // Predicated region
        $region29: #{tpu_custom_call.1} parent=11 // pred_check
          %p221 = pneg %p147
        $region30: #{tpu_custom_call.1} parent=11 // pred_check_branch
          %223 = sbr.rel (%p221) target = $region32
        $region31: #{tpu_custom_call.1} parent=11 // pred_region
          _
        $region32: #{tpu_custom_call.1} parent=11 // pred_fallthru
          _
        // Predicated region
        $region33: #{tpu_custom_call.1} parent=11 // pred_check
          %p224 = pneg %p168
        $region34: #{tpu_custom_call.1} parent=11 // pred_check_branch
          %226 = sbr.rel (%p224) target = $region36
        $region35: #{tpu_custom_call.1} parent=11 // pred_region
          _
        $region36: #{tpu_custom_call.1} parent=11 // pred_fallthru
          _
      $region12: #{tpu_custom_call.1} parent=5 // pred_fallthru
        _
      %p227 = scmp.lt.s32.totalorder %s16, 2
      // Predicated region
      $region37: #{tpu_custom_call.1} parent=5 // pred_check
        %p228 = pneg %p227
      $region38: #{tpu_custom_call.1} parent=5 // pred_check_branch
        %230 = sbr.rel (%p228) target = $region40
      $region39: #{tpu_custom_call.1} parent=5 // pred_region
        // Predicated region
        $region41: #{tpu_custom_call.1} parent=39 // pred_check
          %p231 = pneg %p36
        $region42: #{tpu_custom_call.1} parent=39 // pred_check_branch
          %233 = sbr.rel (%p231) target = $region44
        $region43: #{tpu_custom_call.1} parent=39 // pred_region
          %p234 = scmp.lt.s32.totalorder %s16, 1
          %s235 = scalar_select %p234, %s16, 1
          %s236 = smul.addr %s235, 54
          %s237 = smul.addr %s236, 8
          %s238 = scalar_lea.vmem %s0, %s237
        $region44: #{tpu_custom_call.1} parent=39 // pred_fallthru
          _
      $region40: #{tpu_custom_call.1} parent=5 // pred_fallthru
        _
      %p239 = scmp.le.s32.totalorder 1, %s16
      %p240 = scmp.lt.s32.totalorder %s16, 3
      %p241 = pnand %p239, %p240
      %p242 = pneg %p241
      // Predicated region
      $region45: #{tpu_custom_call.1} parent=5 // pred_check
        _
      $region46: #{tpu_custom_call.1} parent=5 // pred_check_branch
        %244 = sbr.rel (%p241) target = $region48
      $region47: #{tpu_custom_call.1} parent=5 // pred_region
        %s245 = ssub.s32 %s16, 1
        %p246 = scmp.lt.s32.totalorder %s21, 1
        %s247 = scalar_select %p246, %s21, 1
        %s248 = smul.addr %s247, 54
        %s249 = smul.addr %s248, 8
        %s250 = scalar_lea.vmem %s0, %s249
        %p251 = pneg %p42
        %p252 = pneg %p39
        %p253 = pneg %p63
        %p254 = pneg %p60
        %p255 = pneg %p84
        %p256 = pneg %p81
        %p257 = pneg %p105
        %p258 = pneg %p102
        %p259 = pneg %p126
        %p260 = pneg %p123
        %p261 = pneg %p147
        %p262 = pneg %p144
        %p263 = pneg %p168
        %p264 = pneg %p165
        %p265 = pneg %p194
        %p266 = pneg %p191
        %s267 = sand.u32 %s181, 1
        %s268 = scalar_lea.sflag [#allocation6], %s267
        %s269 = sand.u32 %s181, 1
        %s270 = smul.addr %s269, 256
        %s271 = scalar_lea.vmem [#allocation5], %s270
        %p272 = scmp.lt.s32.totalorder %s21, 1
        %s273 = scalar_select %p272, %s21, 1
        %s274 = smul.addr %s273, 54
        %s275 = smul.addr %s274, 8
        %s276 = scalar_lea.vmem %s0, %s275
        %278 = vst [vmem:[#allocation3] sm:$0xff] 0.0
        %279 = vst [vmem:[#allocation3 + $0x8] sm:$0xff] 0.0
        %280 = vst [vmem:[#allocation3 + $0x10] sm:$0x3] 0.0
        %s281 = scalar_lea.vmem [#allocation3], 408
        %282 = vst [vmem:[%s281] sm:$0xff] 0.0
        %283 = vst [vmem:[%s281 + $0x8] sm:$0xff] 0.0
        %284 = vst [vmem:[%s281 + $0x10] sm:$0x3] 0.0
        %s285 = scalar_lea.vmem [#allocation3], 24
        %286 = vst [vmem:[%s285] sm:$0x1] 0.0
        %287 = vst [vmem:[%s285 + $0x18] sm:$0x1] 0.0
        %288 = vst [vmem:[%s285 + $0x30] sm:$0x1] 0.0
        %289 = vst [vmem:[%s285 + $0x48] sm:$0x1] 0.0
        %290 = vst [vmem:[%s285 + $0x60] sm:$0x1] 0.0
        %291 = vst [vmem:[%s285 + $0x78] sm:$0x1] 0.0
        %292 = vst [vmem:[%s285 + $0x90] sm:$0x1] 0.0
        %293 = vst [vmem:[%s285 + $0xa8] sm:$0x1] 0.0
        %294 = vst [vmem:[%s285 + $0xc0] sm:$0x1] 0.0
        %295 = vst [vmem:[%s285 + $0xd8] sm:$0x1] 0.0
        %296 = vst [vmem:[%s285 + $0xf0] sm:$0x1] 0.0
        %297 = vst [vmem:[%s285 + $0x108] sm:$0x1] 0.0
        %298 = vst [vmem:[%s285 + $0x120] sm:$0x1] 0.0
        %299 = vst [vmem:[%s285 + $0x138] sm:$0x1] 0.0
        %300 = vst [vmem:[%s285 + $0x150] sm:$0x1] 0.0
        %301 = vst [vmem:[%s285 + $0x168] sm:$0x1] 0.0
        %302 = vst [vmem:[%s285 + $0x11] sm:$0x1] 0.0
        %303 = vst [vmem:[%s285 + $0x29] sm:$0x1] 0.0
        %304 = vst [vmem:[%s285 + $0x41] sm:$0x1] 0.0
        %305 = vst [vmem:[%s285 + $0x59] sm:$0x1] 0.0
        %306 = vst [vmem:[%s285 + $0x71] sm:$0x1] 0.0
        %307 = vst [vmem:[%s285 + $0x89] sm:$0x1] 0.0
        %308 = vst [vmem:[%s285 + $0xa1] sm:$0x1] 0.0
        %309 = vst [vmem:[%s285 + $0xb9] sm:$0x1] 0.0
        %310 = vst [vmem:[%s285 + $0xd1] sm:$0x1] 0.0
        %311 = vst [vmem:[%s285 + $0xe9] sm:$0x1] 0.0
        %312 = vst [vmem:[%s285 + $0x101] sm:$0x1] 0.0
        %313 = vst [vmem:[%s285 + $0x119] sm:$0x1] 0.0
        %314 = vst [vmem:[%s285 + $0x131] sm:$0x1] 0.0
        %315 = vst [vmem:[%s285 + $0x149] sm:$0x1] 0.0
        %316 = vst [vmem:[%s285 + $0x161] sm:$0x1] 0.0
        %317 = vst [vmem:[%s285 + $0x179] sm:$0x1] 0.0
        %v318 = vld [vmem:[%s276] sm:$0xff]
        %v319 = vld [vmem:[%s276 + $0x8] sm:$0xff]
        %v320 = vld [vmem:[%s276 + $0x18] sm:$0xff]
        %v321 = vld [vmem:[%s276 + $0x20] sm:$0xff]
        %v322 = vld [vmem:[%s276 + $0x30] sm:$0xff]
        %v323 = vld [vmem:[%s276 + $0x38] sm:$0xff]
        %v324 = vld [vmem:[%s276 + $0x48] sm:$0xff]
        %v325 = vld [vmem:[%s276 + $0x50] sm:$0xff]
        %v326 = vld [vmem:[%s276 + $0x60] sm:$0xff]
        %v327 = vld [vmem:[%s276 + $0x68] sm:$0xff]
        %v328 = vld [vmem:[%s276 + $0x78] sm:$0xff]
        %v329 = vld [vmem:[%s276 + $0x80] sm:$0xff]
        %v330 = vld [vmem:[%s276 + $0x90] sm:$0xff]
        %v331 = vld [vmem:[%s276 + $0x98] sm:$0xff]
        %v332 = vld [vmem:[%s276 + $0xa8] sm:$0xff]
        %v333 = vld [vmem:[%s276 + $0xb0] sm:$0xff]
        %v334 = vld [vmem:[%s276 + $0xc0] sm:$0xff]
        %v335 = vld [vmem:[%s276 + $0xc8] sm:$0xff]
        %v336 = vld [vmem:[%s276 + $0xd8] sm:$0xff]
        %v337 = vld [vmem:[%s276 + $0xe0] sm:$0xff]
        %v338 = vld [vmem:[%s276 + $0xf0] sm:$0xff]
        %v339 = vld [vmem:[%s276 + $0xf8] sm:$0xff]
        %v340 = vld [vmem:[%s276 + $0x108] sm:$0xff]
        %v341 = vld [vmem:[%s276 + $0x110] sm:$0xff]
        %v342 = vld [vmem:[%s276 + $0x120] sm:$0xff]
        %v343 = vld [vmem:[%s276 + $0x128] sm:$0xff]
        %v344 = vld [vmem:[%s276 + $0x138] sm:$0xff]
        %v345 = vld [vmem:[%s276 + $0x140] sm:$0xff]
        %v346 = vld [vmem:[%s276 + $0x150] sm:$0xff]
        %v347 = vld [vmem:[%s276 + $0x158] sm:$0xff]
        %v348 = vld [vmem:[%s276 + $0x168] sm:$0xff]
        %v349 = vld [vmem:[%s276 + $0x170] sm:$0xff]
        %v350 = vld [vmem:[%s276 + $0x180] sm:$0xff]
        %v351 = vld [vmem:[%s276 + $0x188] sm:$0xff]
        %v352 = vld [vmem:[%s276 + $0x198] sm:$0xff]
        %v353 = vld [vmem:[%s276 + $0x1a0] sm:$0xff]
        %v354 = vpack.c.bf16 %v319, %v318
        %v355 = vpack.c.bf16 %v321, %v320
        %v356 = vpack.c.bf16 %v323, %v322
        %v357 = vpack.c.bf16 %v325, %v324
        %v358 = vpack.c.bf16 %v327, %v326
        %v359 = vpack.c.bf16 %v329, %v328
        %v360 = vpack.c.bf16 %v331, %v330
        %v361 = vpack.c.bf16 %v333, %v332
        %v362 = vpack.c.bf16 %v335, %v334
        %v363 = vpack.c.bf16 %v337, %v336
        %v364 = vpack.c.bf16 %v339, %v338
        %v365 = vpack.c.bf16 %v341, %v340
        %v366 = vpack.c.bf16 %v343, %v342
        %v367 = vpack.c.bf16 %v345, %v344
        %v368 = vpack.c.bf16 %v347, %v346
        %v369 = vpack.c.bf16 %v349, %v348
        %v370 = vpack.c.bf16 %v351, %v350
        %v371 = vpack.c.bf16 %v353, %v352
        %v390 = vunpack.c.l.b16 %v354
        %v391 = vunpack.c.h.b16 %v354
        %v392 = vunpack.c.l.b16 %v355
        %v393 = vunpack.c.h.b16 %v355
        %v394 = vunpack.c.l.b16 %v356
        %v395 = vunpack.c.h.b16 %v356
        %v396 = vunpack.c.l.b16 %v357
        %v397 = vunpack.c.h.b16 %v357
        %v398 = vunpack.c.l.b16 %v358
        %v399 = vunpack.c.h.b16 %v358
        %v400 = vunpack.c.l.b16 %v359
        %v401 = vunpack.c.h.b16 %v359
        %v402 = vunpack.c.l.b16 %v360
        %v403 = vunpack.c.h.b16 %v360
        %v404 = vunpack.c.l.b16 %v361
        %v405 = vunpack.c.h.b16 %v361
        %v406 = vunpack.c.l.b16 %v362
        %v407 = vunpack.c.h.b16 %v362
        %v408 = vunpack.c.l.b16 %v363
        %v409 = vunpack.c.h.b16 %v363
        %v410 = vunpack.c.l.b16 %v364
        %v411 = vunpack.c.h.b16 %v364
        %v412 = vunpack.c.l.b16 %v365
        %v413 = vunpack.c.h.b16 %v365
        %v414 = vunpack.c.l.b16 %v366
        %v415 = vunpack.c.h.b16 %v366
        %v416 = vunpack.c.l.b16 %v367
        %v417 = vunpack.c.h.b16 %v367
        %v418 = vunpack.c.l.b16 %v368
        %v419 = vunpack.c.h.b16 %v368
        %v420 = vunpack.c.l.b16 %v369
        %v421 = vunpack.c.h.b16 %v369
        %v422 = vunpack.c.l.b16 %v370
        %v423 = vunpack.c.h.b16 %v370
        %v424 = vunpack.c.l.b16 %v371
        %v425 = vunpack.c.h.b16 %v371
        %v426 = vpack.c.b16 %v390, %v390
        %v427 = vpack.c.b16 %v391, %v391
        %v428 = vpack.c.b16 %v392, %v392
        %v429 = vpack.c.b16 %v393, %v393
        %v430 = vpack.c.b16 %v394, %v394
        %v431 = vpack.c.b16 %v395, %v395
        %v432 = vpack.c.b16 %v396, %v396
        %v433 = vpack.c.b16 %v397, %v397
        %v434 = vpack.c.b16 %v398, %v398
        %v435 = vpack.c.b16 %v399, %v399
        %v436 = vpack.c.b16 %v400, %v400
        %v437 = vpack.c.b16 %v401, %v401
        %v438 = vpack.c.b16 %v402, %v402
        %v439 = vpack.c.b16 %v403, %v403
        %v440 = vpack.c.b16 %v404, %v404
        %v441 = vpack.c.b16 %v405, %v405
        %v442 = vpack.c.b16 %v406, %v406
        %v443 = vpack.c.b16 %v407, %v407
        %v444 = vpack.c.b16 %v408, %v408
        %v445 = vpack.c.b16 %v409, %v409
        %v446 = vpack.c.b16 %v410, %v410
        %v447 = vpack.c.b16 %v411, %v411
        %v448 = vpack.c.b16 %v412, %v412
        %v449 = vpack.c.b16 %v413, %v413
        %v450 = vpack.c.b16 %v414, %v414
        %v451 = vpack.c.b16 %v415, %v415
        %v452 = vpack.c.b16 %v416, %v416
        %v453 = vpack.c.b16 %v417, %v417
        %v454 = vpack.c.b16 %v418, %v418
        %v455 = vpack.c.b16 %v419, %v419
        %v456 = vpack.c.b16 %v420, %v420
        %v457 = vpack.c.b16 %v421, %v421
        %v458 = vpack.c.b16 %v422, %v422
        %v459 = vpack.c.b16 %v423, %v423
        %v460 = vpack.c.b16 %v424, %v424
        %v461 = vpack.c.b16 %v425, %v425
        %498 = vst [vmem:[#allocation2] sm:$0xf] %v426
        %499 = vst [vmem:[#allocation2 + $0xc] sm:$0xf] %v427
        %500 = vst [vmem:[#allocation2 + $0x18] sm:$0xf] %v428
        %501 = vst [vmem:[#allocation2 + $0x24] sm:$0xf] %v429
        %502 = vst [vmem:[#allocation2 + $0x30] sm:$0xf] %v430
        %503 = vst [vmem:[#allocation2 + $0x3c] sm:$0xf] %v431
        %504 = vst [vmem:[#allocation2 + $0x48] sm:$0xf] %v432
        %505 = vst [vmem:[#allocation2 + $0x54] sm:$0xf] %v433
        %506 = vst [vmem:[#allocation2 + $0x60] sm:$0xf] %v434
        %507 = vst [vmem:[#allocation2 + $0x6c] sm:$0xf] %v435
        %508 = vst [vmem:[#allocation2 + $0x78] sm:$0xf] %v436
        %509 = vst [vmem:[#allocation2 + $0x84] sm:$0xf] %v437
        %510 = vst [vmem:[#allocation2 + $0x90] sm:$0xf] %v438
        %511 = vst [vmem:[#allocation2 + $0x9c] sm:$0xf] %v439
        %512 = vst [vmem:[#allocation2 + $0xa8] sm:$0xf] %v440
        %513 = vst [vmem:[#allocation2 + $0xb4] sm:$0xf] %v441
        %514 = vst [vmem:[#allocation2 + $0xc0] sm:$0xf] %v442
        %515 = vst [vmem:[#allocation2 + $0xcc] sm:$0xf] %v443
        %516 = vst [vmem:[#allocation2 + $0xd8] sm:$0xf] %v444
        %517 = vst [vmem:[#allocation2 + $0xe4] sm:$0xf] %v445
        %518 = vst [vmem:[#allocation2 + $0xf0] sm:$0xf] %v446
        %519 = vst [vmem:[#allocation2 + $0xfc] sm:$0xf] %v447
        %520 = vst [vmem:[#allocation2 + $0x108] sm:$0xf] %v448
        %521 = vst [vmem:[#allocation2 + $0x114] sm:$0xf] %v449
        %522 = vst [vmem:[#allocation2 + $0x120] sm:$0xf] %v450
        %523 = vst [vmem:[#allocation2 + $0x12c] sm:$0xf] %v451
        %524 = vst [vmem:[#allocation2 + $0x138] sm:$0xf] %v452
        %525 = vst [vmem:[#allocation2 + $0x144] sm:$0xf] %v453
        %526 = vst [vmem:[#allocation2 + $0x150] sm:$0xf] %v454
        %527 = vst [vmem:[#allocation2 + $0x15c] sm:$0xf] %v455
        %528 = vst [vmem:[#allocation2 + $0x168] sm:$0xf] %v456
        %529 = vst [vmem:[#allocation2 + $0x174] sm:$0xf] %v457
        %530 = vst [vmem:[#allocation2 + $0x180] sm:$0xf] %v458
        %531 = vst [vmem:[#allocation2 + $0x18c] sm:$0xf] %v459
        %532 = vst [vmem:[#allocation2 + $0x198] sm:$0xf] %v460
        %533 = vst [vmem:[#allocation2 + $0x1a4] sm:$0xf] %v461
        %v534 = vld [vmem:[%s276 + $0x1] sm:$0xff]
        %v535 = vld [vmem:[%s276 + $0x9] sm:$0xff]
        %v536 = vld [vmem:[%s276 + $0x19] sm:$0xff]
        %v537 = vld [vmem:[%s276 + $0x21] sm:$0xff]
        %v538 = vld [vmem:[%s276 + $0x31] sm:$0xff]
        %v539 = vld [vmem:[%s276 + $0x39] sm:$0xff]
        %v540 = vld [vmem:[%s276 + $0x49] sm:$0xff]
        %v541 = vld [vmem:[%s276 + $0x51] sm:$0xff]
        %v542 = vld [vmem:[%s276 + $0x61] sm:$0xff]
        %v543 = vld [vmem:[%s276 + $0x69] sm:$0xff]
        %v544 = vld [vmem:[%s276 + $0x79] sm:$0xff]
        %v545 = vld [vmem:[%s276 + $0x81] sm:$0xff]
        %v546 = vld [vmem:[%s276 + $0x91] sm:$0xff]
        %v547 = vld [vmem:[%s276 + $0x99] sm:$0xff]
        %v548 = vld [vmem:[%s276 + $0xa9] sm:$0xff]
        %v549 = vld [vmem:[%s276 + $0xb1] sm:$0xff]
        %v550 = vld [vmem:[%s276 + $0xc1] sm:$0xff]
        %v551 = vld [vmem:[%s276 + $0xc9] sm:$0xff]
        %v552 = vld [vmem:[%s276 + $0xd9] sm:$0xff]
        %v553 = vld [vmem:[%s276 + $0xe1] sm:$0xff]
        %v554 = vld [vmem:[%s276 + $0xf1] sm:$0xff]
        %v555 = vld [vmem:[%s276 + $0xf9] sm:$0xff]
        %v556 = vld [vmem:[%s276 + $0x109] sm:$0xff]
        %v557 = vld [vmem:[%s276 + $0x111] sm:$0xff]
        %v558 = vld [vmem:[%s276 + $0x121] sm:$0xff]
        %v559 = vld [vmem:[%s276 + $0x129] sm:$0xff]
        %v560 = vld [vmem:[%s276 + $0x139] sm:$0xff]
        %v561 = vld [vmem:[%s276 + $0x141] sm:$0xff]
        %v562 = vld [vmem:[%s276 + $0x151] sm:$0xff]
        %v563 = vld [vmem:[%s276 + $0x159] sm:$0xff]
        %v564 = vld [vmem:[%s276 + $0x169] sm:$0xff]
        %v565 = vld [vmem:[%s276 + $0x171] sm:$0xff]
        %v566 = vld [vmem:[%s276 + $0x181] sm:$0xff]
        %v567 = vld [vmem:[%s276 + $0x189] sm:$0xff]
        %v568 = vld [vmem:[%s276 + $0x199] sm:$0xff]
        %v569 = vld [vmem:[%s276 + $0x1a1] sm:$0xff]
        %v570 = vpack.c.bf16 %v535, %v534
        %v571 = vpack.c.bf16 %v537, %v536
        %v572 = vpack.c.bf16 %v539, %v538
        %v573 = vpack.c.bf16 %v541, %v540
        %v574 = vpack.c.bf16 %v543, %v542
        %v575 = vpack.c.bf16 %v545, %v544
        %v576 = vpack.c.bf16 %v547, %v546
        %v577 = vpack.c.bf16 %v549, %v548
        %v578 = vpack.c.bf16 %v551, %v550
        %v579 = vpack.c.bf16 %v553, %v552
        %v580 = vpack.c.bf16 %v555, %v554
        %v581 = vpack.c.bf16 %v557, %v556
        %v582 = vpack.c.bf16 %v559, %v558
        %v583 = vpack.c.bf16 %v561, %v560
        %v584 = vpack.c.bf16 %v563, %v562
        %v585 = vpack.c.bf16 %v565, %v564
        %v586 = vpack.c.bf16 %v567, %v566
        %v587 = vpack.c.bf16 %v569, %v568
        %v606 = vunpack.c.l.b16 %v570
        %v607 = vunpack.c.h.b16 %v570
        %v608 = vunpack.c.l.b16 %v571
        %v609 = vunpack.c.h.b16 %v571
        %v610 = vunpack.c.l.b16 %v572
        %v611 = vunpack.c.h.b16 %v572
        %v612 = vunpack.c.l.b16 %v573
        %v613 = vunpack.c.h.b16 %v573
        %v614 = vunpack.c.l.b16 %v574
        %v615 = vunpack.c.h.b16 %v574
        %v616 = vunpack.c.l.b16 %v575
        %v617 = vunpack.c.h.b16 %v575
        %v618 = vunpack.c.l.b16 %v576
        %v619 = vunpack.c.h.b16 %v576
        %v620 = vunpack.c.l.b16 %v577
        %v621 = vunpack.c.h.b16 %v577
        %v622 = vunpack.c.l.b16 %v578
        %v623 = vunpack.c.h.b16 %v578
        %v624 = vunpack.c.l.b16 %v579
        %v625 = vunpack.c.h.b16 %v579
        %v626 = vunpack.c.l.b16 %v580
        %v627 = vunpack.c.h.b16 %v580
        %v628 = vunpack.c.l.b16 %v581
        %v629 = vunpack.c.h.b16 %v581
        %v630 = vunpack.c.l.b16 %v582
        %v631 = vunpack.c.h.b16 %v582
        %v632 = vunpack.c.l.b16 %v583
        %v633 = vunpack.c.h.b16 %v583
        %v634 = vunpack.c.l.b16 %v584
        %v635 = vunpack.c.h.b16 %v584
        %v636 = vunpack.c.l.b16 %v585
        %v637 = vunpack.c.h.b16 %v585
        %v638 = vunpack.c.l.b16 %v586
        %v639 = vunpack.c.h.b16 %v586
        %v640 = vunpack.c.l.b16 %v587
        %v641 = vunpack.c.h.b16 %v587
        %v642 = vpack.c.b16 %v606, %v606
        %v643 = vpack.c.b16 %v607, %v607
        %v644 = vpack.c.b16 %v608, %v608
        %v645 = vpack.c.b16 %v609, %v609
        %v646 = vpack.c.b16 %v610, %v610
        %v647 = vpack.c.b16 %v611, %v611
        %v648 = vpack.c.b16 %v612, %v612
        %v649 = vpack.c.b16 %v613, %v613
        %v650 = vpack.c.b16 %v614, %v614
        %v651 = vpack.c.b16 %v615, %v615
        %v652 = vpack.c.b16 %v616, %v616
        %v653 = vpack.c.b16 %v617, %v617
        %v654 = vpack.c.b16 %v618, %v618
        %v655 = vpack.c.b16 %v619, %v619
        %v656 = vpack.c.b16 %v620, %v620
        %v657 = vpack.c.b16 %v621, %v621
        %v658 = vpack.c.b16 %v622, %v622
        %v659 = vpack.c.b16 %v623, %v623
        %v660 = vpack.c.b16 %v624, %v624
        %v661 = vpack.c.b16 %v625, %v625
        %v662 = vpack.c.b16 %v626, %v626
        %v663 = vpack.c.b16 %v627, %v627
        %v664 = vpack.c.b16 %v628, %v628
        %v665 = vpack.c.b16 %v629, %v629
        %v666 = vpack.c.b16 %v630, %v630
        %v667 = vpack.c.b16 %v631, %v631
        %v668 = vpack.c.b16 %v632, %v632
        %v669 = vpack.c.b16 %v633, %v633
        %v670 = vpack.c.b16 %v634, %v634
        %v671 = vpack.c.b16 %v635, %v635
        %v672 = vpack.c.b16 %v636, %v636
        %v673 = vpack.c.b16 %v637, %v637
        %v674 = vpack.c.b16 %v638, %v638
        %v675 = vpack.c.b16 %v639, %v639
        %v676 = vpack.c.b16 %v640, %v640
        %v677 = vpack.c.b16 %v641, %v641
        %714 = vst [vmem:[#allocation2 + $0x4] sm:$0xf] %v642
        %715 = vst [vmem:[#allocation2 + $0x10] sm:$0xf] %v643
        %716 = vst [vmem:[#allocation2 + $0x1c] sm:$0xf] %v644
        %717 = vst [vmem:[#allocation2 + $0x28] sm:$0xf] %v645
        %718 = vst [vmem:[#allocation2 + $0x34] sm:$0xf] %v646
        %719 = vst [vmem:[#allocation2 + $0x40] sm:$0xf] %v647
        %720 = vst [vmem:[#allocation2 + $0x4c] sm:$0xf] %v648
        %721 = vst [vmem:[#allocation2 + $0x58] sm:$0xf] %v649
        %722 = vst [vmem:[#allocation2 + $0x64] sm:$0xf] %v650
        %723 = vst [vmem:[#allocation2 + $0x70] sm:$0xf] %v651
        %724 = vst [vmem:[#allocation2 + $0x7c] sm:$0xf] %v652
        %725 = vst [vmem:[#allocation2 + $0x88] sm:$0xf] %v653
        %726 = vst [vmem:[#allocation2 + $0x94] sm:$0xf] %v654
        %727 = vst [vmem:[#allocation2 + $0xa0] sm:$0xf] %v655
        %728 = vst [vmem:[#allocation2 + $0xac] sm:$0xf] %v656
        %729 = vst [vmem:[#allocation2 + $0xb8] sm:$0xf] %v657
        %730 = vst [vmem:[#allocation2 + $0xc4] sm:$0xf] %v658
        %731 = vst [vmem:[#allocation2 + $0xd0] sm:$0xf] %v659
        %732 = vst [vmem:[#allocation2 + $0xdc] sm:$0xf] %v660
        %733 = vst [vmem:[#allocation2 + $0xe8] sm:$0xf] %v661
        %734 = vst [vmem:[#allocation2 + $0xf4] sm:$0xf] %v662
        %735 = vst [vmem:[#allocation2 + $0x100] sm:$0xf] %v663
        %736 = vst [vmem:[#allocation2 + $0x10c] sm:$0xf] %v664
        %737 = vst [vmem:[#allocation2 + $0x118] sm:$0xf] %v665
        %738 = vst [vmem:[#allocation2 + $0x124] sm:$0xf] %v666
        %739 = vst [vmem:[#allocation2 + $0x130] sm:$0xf] %v667
        %740 = vst [vmem:[#allocation2 + $0x13c] sm:$0xf] %v668
        %741 = vst [vmem:[#allocation2 + $0x148] sm:$0xf] %v669
        %742 = vst [vmem:[#allocation2 + $0x154] sm:$0xf] %v670
        %743 = vst [vmem:[#allocation2 + $0x160] sm:$0xf] %v671
        %744 = vst [vmem:[#allocation2 + $0x16c] sm:$0xf] %v672
        %745 = vst [vmem:[#allocation2 + $0x178] sm:$0xf] %v673
        %746 = vst [vmem:[#allocation2 + $0x184] sm:$0xf] %v674
        %747 = vst [vmem:[#allocation2 + $0x190] sm:$0xf] %v675
        %748 = vst [vmem:[#allocation2 + $0x19c] sm:$0xf] %v676
        %749 = vst [vmem:[#allocation2 + $0x1a8] sm:$0xf] %v677
        %750 = vst [vmem:[#allocation4] sm:$0xff] %v536
        %751 = vst [vmem:[#allocation4 + $0x8] sm:$0xff] %v537
        %752 = vst [vmem:[#allocation4 + $0x10] sm:$0xff] %v538
        %753 = vst [vmem:[#allocation4 + $0x18] sm:$0xff] %v539
        %754 = vst [vmem:[#allocation4 + $0x20] sm:$0xff] %v540
        %755 = vst [vmem:[#allocation4 + $0x28] sm:$0xff] %v541
        %756 = vst [vmem:[#allocation4 + $0x30] sm:$0xff] %v542
        %757 = vst [vmem:[#allocation4 + $0x38] sm:$0xff] %v543
        %758 = vst [vmem:[#allocation4 + $0x40] sm:$0xff] %v544
        %759 = vst [vmem:[#allocation4 + $0x48] sm:$0xff] %v545
        %760 = vst [vmem:[#allocation4 + $0x50] sm:$0xff] %v546
        %761 = vst [vmem:[#allocation4 + $0x58] sm:$0xff] %v547
        %762 = vst [vmem:[#allocation4 + $0x60] sm:$0xff] %v548
        %763 = vst [vmem:[#allocation4 + $0x68] sm:$0xff] %v549
        %764 = vst [vmem:[#allocation4 + $0x70] sm:$0xff] %v550
        %765 = vst [vmem:[#allocation4 + $0x78] sm:$0xff] %v551
        %766 = vst [vmem:[#allocation4 + $0x80] sm:$0xff] %v552
        %767 = vst [vmem:[#allocation4 + $0x88] sm:$0xff] %v553
        %768 = vst [vmem:[#allocation4 + $0x90] sm:$0xff] %v554
        %769 = vst [vmem:[#allocation4 + $0x98] sm:$0xff] %v555
        %770 = vst [vmem:[#allocation4 + $0xa0] sm:$0xff] %v556
        %771 = vst [vmem:[#allocation4 + $0xa8] sm:$0xff] %v557
        %772 = vst [vmem:[#allocation4 + $0xb0] sm:$0xff] %v558
        %773 = vst [vmem:[#allocation4 + $0xb8] sm:$0xff] %v559
        %774 = vst [vmem:[#allocation4 + $0xc0] sm:$0xff] %v560
        %775 = vst [vmem:[#allocation4 + $0xc8] sm:$0xff] %v561
        %776 = vst [vmem:[#allocation4 + $0xd0] sm:$0xff] %v562
        %777 = vst [vmem:[#allocation4 + $0xd8] sm:$0xff] %v563
        %778 = vst [vmem:[#allocation4 + $0xe0] sm:$0xff] %v564
        %779 = vst [vmem:[#allocation4 + $0xe8] sm:$0xff] %v565
        %780 = vst [vmem:[#allocation4 + $0xf0] sm:$0xff] %v566
        %781 = vst [vmem:[#allocation4 + $0xf8] sm:$0xff] %v567
        %v782 = vld [vmem:[%s276 + $0x2] sm:$0xff]
        %v783 = vld [vmem:[%s276 + $0xa] sm:$0xff]
        %v784 = vld [vmem:[%s276 + $0x1a] sm:$0xff]
        %v785 = vld [vmem:[%s276 + $0x22] sm:$0xff]
        %v786 = vld [vmem:[%s276 + $0x32] sm:$0xff]
        %v787 = vld [vmem:[%s276 + $0x3a] sm:$0xff]
        %v788 = vld [vmem:[%s276 + $0x4a] sm:$0xff]
        %v789 = vld [vmem:[%s276 + $0x52] sm:$0xff]
        %v790 = vld [vmem:[%s276 + $0x62] sm:$0xff]
        %v791 = vld [vmem:[%s276 + $0x6a] sm:$0xff]
        %v792 = vld [vmem:[%s276 + $0x7a] sm:$0xff]
        %v793 = vld [vmem:[%s276 + $0x82] sm:$0xff]
        %v794 = vld [vmem:[%s276 + $0x92] sm:$0xff]
        %v795 = vld [vmem:[%s276 + $0x9a] sm:$0xff]
        %v796 = vld [vmem:[%s276 + $0xaa] sm:$0xff]
        %v797 = vld [vmem:[%s276 + $0xb2] sm:$0xff]
        %v798 = vld [vmem:[%s276 + $0xc2] sm:$0xff]
        %v799 = vld [vmem:[%s276 + $0xca] sm:$0xff]
        %v800 = vld [vmem:[%s276 + $0xda] sm:$0xff]
        %v801 = vld [vmem:[%s276 + $0xe2] sm:$0xff]
        %v802 = vld [vmem:[%s276 + $0xf2] sm:$0xff]
        %v803 = vld [vmem:[%s276 + $0xfa] sm:$0xff]
        %v804 = vld [vmem:[%s276 + $0x10a] sm:$0xff]
        %v805 = vld [vmem:[%s276 + $0x112] sm:$0xff]
        %v806 = vld [vmem:[%s276 + $0x122] sm:$0xff]
        %v807 = vld [vmem:[%s276 + $0x12a] sm:$0xff]
        %v808 = vld [vmem:[%s276 + $0x13a] sm:$0xff]
        %v809 = vld [vmem:[%s276 + $0x142] sm:$0xff]
        %v810 = vld [vmem:[%s276 + $0x152] sm:$0xff]
        %v811 = vld [vmem:[%s276 + $0x15a] sm:$0xff]
        %v812 = vld [vmem:[%s276 + $0x16a] sm:$0xff]
        %v813 = vld [vmem:[%s276 + $0x172] sm:$0xff]
        %v814 = vld [vmem:[%s276 + $0x182] sm:$0xff]
        %v815 = vld [vmem:[%s276 + $0x18a] sm:$0xff]
        %v816 = vld [vmem:[%s276 + $0x19a] sm:$0xff]
        %v817 = vld [vmem:[%s276 + $0x1a2] sm:$0xff]
        %v818 = vpack.c.bf16 %v783, %v782
        %v819 = vpack.c.bf16 %v785, %v784
        %v820 = vpack.c.bf16 %v787, %v786
        %v821 = vpack.c.bf16 %v789, %v788
        %v822 = vpack.c.bf16 %v791, %v790
        %v823 = vpack.c.bf16 %v793, %v792
        %v824 = vpack.c.bf16 %v795, %v794
        %v825 = vpack.c.bf16 %v797, %v796
        %v826 = vpack.c.bf16 %v799, %v798
        %v827 = vpack.c.bf16 %v801, %v800
        %v828 = vpack.c.bf16 %v803, %v802
        %v829 = vpack.c.bf16 %v805, %v804
        %v830 = vpack.c.bf16 %v807, %v806
        %v831 = vpack.c.bf16 %v809, %v808
        %v832 = vpack.c.bf16 %v811, %v810
        %v833 = vpack.c.bf16 %v813, %v812
        %v834 = vpack.c.bf16 %v815, %v814
        %v835 = vpack.c.bf16 %v817, %v816
        %v854 = vunpack.c.l.b16 %v818
        %v855 = vunpack.c.h.b16 %v818
        %v856 = vunpack.c.l.b16 %v819
        %v857 = vunpack.c.h.b16 %v819
        %v858 = vunpack.c.l.b16 %v820
        %v859 = vunpack.c.h.b16 %v820
        %v860 = vunpack.c.l.b16 %v821
        %v861 = vunpack.c.h.b16 %v821
        %v862 = vunpack.c.l.b16 %v822
        %v863 = vunpack.c.h.b16 %v822
        %v864 = vunpack.c.l.b16 %v823
        %v865 = vunpack.c.h.b16 %v823
        %v866 = vunpack.c.l.b16 %v824
        %v867 = vunpack.c.h.b16 %v824
        %v868 = vunpack.c.l.b16 %v825
        %v869 = vunpack.c.h.b16 %v825
        %v870 = vunpack.c.l.b16 %v826
        %v871 = vunpack.c.h.b16 %v826
        %v872 = vunpack.c.l.b16 %v827
        %v873 = vunpack.c.h.b16 %v827
        %v874 = vunpack.c.l.b16 %v828
        %v875 = vunpack.c.h.b16 %v828
        %v876 = vunpack.c.l.b16 %v829
        %v877 = vunpack.c.h.b16 %v829
        %v878 = vunpack.c.l.b16 %v830
        %v879 = vunpack.c.h.b16 %v830
        %v880 = vunpack.c.l.b16 %v831
        %v881 = vunpack.c.h.b16 %v831
        %v882 = vunpack.c.l.b16 %v832
        %v883 = vunpack.c.h.b16 %v832
        %v884 = vunpack.c.l.b16 %v833
        %v885 = vunpack.c.h.b16 %v833
        %v886 = vunpack.c.l.b16 %v834
        %v887 = vunpack.c.h.b16 %v834
        %v888 = vunpack.c.l.b16 %v835
        %v889 = vunpack.c.h.b16 %v835
        %v890 = vpack.c.b16 %v854, %v854
        %v891 = vpack.c.b16 %v855, %v855
        %v892 = vpack.c.b16 %v856, %v856
        %v893 = vpack.c.b16 %v857, %v857
        %v894 = vpack.c.b16 %v858, %v858
        %v895 = vpack.c.b16 %v859, %v859
        %v896 = vpack.c.b16 %v860, %v860
        %v897 = vpack.c.b16 %v861, %v861
        %v898 = vpack.c.b16 %v862, %v862
        %v899 = vpack.c.b16 %v863, %v863
        %v900 = vpack.c.b16 %v864, %v864
        %v901 = vpack.c.b16 %v865, %v865
        %v902 = vpack.c.b16 %v866, %v866
        %v903 = vpack.c.b16 %v867, %v867
        %v904 = vpack.c.b16 %v868, %v868
        %v905 = vpack.c.b16 %v869, %v869
        %v906 = vpack.c.b16 %v870, %v870
        %v907 = vpack.c.b16 %v871, %v871
        %v908 = vpack.c.b16 %v872, %v872
        %v909 = vpack.c.b16 %v873, %v873
        %v910 = vpack.c.b16 %v874, %v874
        %v911 = vpack.c.b16 %v875, %v875
        %v912 = vpack.c.b16 %v876, %v876
        %v913 = vpack.c.b16 %v877, %v877
        %v914 = vpack.c.b16 %v878, %v878
        %v915 = vpack.c.b16 %v879, %v879
        %v916 = vpack.c.b16 %v880, %v880
        %v917 = vpack.c.b16 %v881, %v881
        %v918 = vpack.c.b16 %v882, %v882
        %v919 = vpack.c.b16 %v883, %v883
        %v920 = vpack.c.b16 %v884, %v884
        %v921 = vpack.c.b16 %v885, %v885
        %v922 = vpack.c.b16 %v886, %v886
        %v923 = vpack.c.b16 %v887, %v887
        %v924 = vpack.c.b16 %v888, %v888
        %v925 = vpack.c.b16 %v889, %v889
        %962 = vst [vmem:[#allocation2 + $0x8] sm:$0xf] %v890
        %963 = vst [vmem:[#allocation2 + $0x14] sm:$0xf] %v891
        %964 = vst [vmem:[#allocation2 + $0x20] sm:$0xf] %v892
        %965 = vst [vmem:[#allocation2 + $0x2c] sm:$0xf] %v893
        %966 = vst [vmem:[#allocation2 + $0x38] sm:$0xf] %v894
        %967 = vst [vmem:[#allocation2 + $0x44] sm:$0xf] %v895
        %968 = vst [vmem:[#allocation2 + $0x50] sm:$0xf] %v896
        %969 = vst [vmem:[#allocation2 + $0x5c] sm:$0xf] %v897
        %970 = vst [vmem:[#allocation2 + $0x68] sm:$0xf] %v898
        %971 = vst [vmem:[#allocation2 + $0x74] sm:$0xf] %v899
        %972 = vst [vmem:[#allocation2 + $0x80] sm:$0xf] %v900
        %973 = vst [vmem:[#allocation2 + $0x8c] sm:$0xf] %v901
        %974 = vst [vmem:[#allocation2 + $0x98] sm:$0xf] %v902
        %975 = vst [vmem:[#allocation2 + $0xa4] sm:$0xf] %v903
        %976 = vst [vmem:[#allocation2 + $0xb0] sm:$0xf] %v904
        %977 = vst [vmem:[#allocation2 + $0xbc] sm:$0xf] %v905
        %978 = vst [vmem:[#allocation2 + $0xc8] sm:$0xf] %v906
        %979 = vst [vmem:[#allocation2 + $0xd4] sm:$0xf] %v907
        %980 = vst [vmem:[#allocation2 + $0xe0] sm:$0xf] %v908
        %981 = vst [vmem:[#allocation2 + $0xec] sm:$0xf] %v909
        %982 = vst [vmem:[#allocation2 + $0xf8] sm:$0xf] %v910
        %983 = vst [vmem:[#allocation2 + $0x104] sm:$0xf] %v911
        %984 = vst [vmem:[#allocation2 + $0x110] sm:$0xf] %v912
        %985 = vst [vmem:[#allocation2 + $0x11c] sm:$0xf] %v913
        %986 = vst [vmem:[#allocation2 + $0x128] sm:$0xf] %v914
        %987 = vst [vmem:[#allocation2 + $0x134] sm:$0xf] %v915
        %988 = vst [vmem:[#allocation2 + $0x140] sm:$0xf] %v916
        %989 = vst [vmem:[#allocation2 + $0x14c] sm:$0xf] %v917
        %990 = vst [vmem:[#allocation2 + $0x158] sm:$0xf] %v918
        %991 = vst [vmem:[#allocation2 + $0x164] sm:$0xf] %v919
        %992 = vst [vmem:[#allocation2 + $0x170] sm:$0xf] %v920
        %993 = vst [vmem:[#allocation2 + $0x17c] sm:$0xf] %v921
        %994 = vst [vmem:[#allocation2 + $0x188] sm:$0xf] %v922
        %995 = vst [vmem:[#allocation2 + $0x194] sm:$0xf] %v923
        %996 = vst [vmem:[#allocation2 + $0x1a0] sm:$0xf] %v924
        %997 = vst [vmem:[#allocation2 + $0x1ac] sm:$0xf] %v925
        %v998 = vld [vmem:[#allocation2] sm:$0xff]
        %v999 = vld [vmem:[#allocation2 + $0x8] sm:$0xf]
        %v1000 = vld [vmem:[#allocation2 + $0xc] sm:$0xff]
        %v1001 = vld [vmem:[#allocation2 + $0x14] sm:$0xf]
        %v1002 = vld [vmem:[#allocation2 + $0x18] sm:$0xff]
        %v1003 = vld [vmem:[#allocation2 + $0x20] sm:$0xf]
        %v1004 = vld [vmem:[#allocation2 + $0x24] sm:$0xff]
        %v1005 = vld [vmem:[#allocation2 + $0x2c] sm:$0xf]
        %v1006 = vld [vmem:[#allocation2 + $0x30] sm:$0xff]
        %v1007 = vld [vmem:[#allocation2 + $0x38] sm:$0xf]
        %v1008 = vld [vmem:[#allocation2 + $0x3c] sm:$0xff]
        %v1009 = vld [vmem:[#allocation2 + $0x44] sm:$0xf]
        %v1010 = vld [vmem:[#allocation2 + $0x48] sm:$0xff]
        %v1011 = vld [vmem:[#allocation2 + $0x50] sm:$0xf]
        %v1012 = vld [vmem:[#allocation2 + $0x54] sm:$0xff]
        %v1013 = vld [vmem:[#allocation2 + $0x5c] sm:$0xf]
        %v1014 = vld [vmem:[#allocation2 + $0x60] sm:$0xff]
        %v1015 = vld [vmem:[#allocation2 + $0x68] sm:$0xf]
        %v1016 = vld [vmem:[#allocation2 + $0x6c] sm:$0xff]
        %v1017 = vld [vmem:[#allocation2 + $0x74] sm:$0xf]
        %v1018 = vld [vmem:[#allocation2 + $0x78] sm:$0xff]
        %v1019 = vld [vmem:[#allocation2 + $0x80] sm:$0xf]
        %v1020 = vld [vmem:[#allocation2 + $0x84] sm:$0xff]
        %v1021 = vld [vmem:[#allocation2 + $0x8c] sm:$0xf]
        %v1022 = vld [vmem:[#allocation2 + $0x90] sm:$0xff]
        %v1023 = vld [vmem:[#allocation2 + $0x98] sm:$0xf]
        %v1024 = vld [vmem:[#allocation2 + $0x9c] sm:$0xff]
        %v1025 = vld [vmem:[#allocation2 + $0xa4] sm:$0xf]
        %v1026 = vld [vmem:[#allocation2 + $0xa8] sm:$0xff]
        %v1027 = vld [vmem:[#allocation2 + $0xb0] sm:$0xf]
        %v1028 = vld [vmem:[#allocation2 + $0xb4] sm:$0xff]
        %v1029 = vld [vmem:[#allocation2 + $0xbc] sm:$0xf]
        %v1030 = vld [vmem:[#allocation2 + $0xc0] sm:$0xff]
        %v1031 = vld [vmem:[#allocation2 + $0xc8] sm:$0xf]
        %v1032 = vld [vmem:[#allocation2 + $0xcc] sm:$0xff]
        %v1033 = vld [vmem:[#allocation2 + $0xd4] sm:$0xf]
        %v1034 = vld [vmem:[#allocation2 + $0xd8] sm:$0xff]
        %v1035 = vld [vmem:[#allocation2 + $0xe0] sm:$0xf]
        %v1036 = vld [vmem:[#allocation2 + $0xe4] sm:$0xff]
        %v1037 = vld [vmem:[#allocation2 + $0xec] sm:$0xf]
        %v1038 = vld [vmem:[#allocation2 + $0xf0] sm:$0xff]
        %v1039 = vld [vmem:[#allocation2 + $0xf8] sm:$0xf]
        %v1040 = vld [vmem:[#allocation2 + $0xfc] sm:$0xff]
        %v1041 = vld [vmem:[#allocation2 + $0x104] sm:$0xf]
        %v1042 = vld [vmem:[#allocation2 + $0x108] sm:$0xff]
        %v1043 = vld [vmem:[#allocation2 + $0x110] sm:$0xf]
        %v1044 = vld [vmem:[#allocation2 + $0x114] sm:$0xff]
        %v1045 = vld [vmem:[#allocation2 + $0x11c] sm:$0xf]
        %v1046 = vld [vmem:[#allocation2 + $0x120] sm:$0xff]
        %v1047 = vld [vmem:[#allocation2 + $0x128] sm:$0xf]
        %v1048 = vld [vmem:[#allocation2 + $0x12c] sm:$0xff]
        %v1049 = vld [vmem:[#allocation2 + $0x134] sm:$0xf]
        %v1050 = vld [vmem:[#allocation2 + $0x138] sm:$0xff]
        %v1051 = vld [vmem:[#allocation2 + $0x140] sm:$0xf]
        %v1052 = vld [vmem:[#allocation2 + $0x144] sm:$0xff]
        %v1053 = vld [vmem:[#allocation2 + $0x14c] sm:$0xf]
        %v1054 = vld [vmem:[#allocation2 + $0x150] sm:$0xff]
        %v1055 = vld [vmem:[#allocation2 + $0x158] sm:$0xf]
        %v1056 = vld [vmem:[#allocation2 + $0x15c] sm:$0xff]
        %v1057 = vld [vmem:[#allocation2 + $0x164] sm:$0xf]
        %v1058 = vld [vmem:[#allocation2 + $0x168] sm:$0xff]
        %v1059 = vld [vmem:[#allocation2 + $0x170] sm:$0xf]
        %v1060 = vld [vmem:[#allocation2 + $0x174] sm:$0xff]
        %v1061 = vld [vmem:[#allocation2 + $0x17c] sm:$0xf]
        %v1062 = vld [vmem:[%s1] sm:$0xf]
        %v1063 = vld [vmem:[%s1 + $0x4] sm:$0xf]
        %v1064 = vld [vmem:[%s1 + $0x8] sm:$0xf]
        %v1065 = vld [vmem:[%s1 + $0xc] sm:$0xf]
        %v1066 = vld [vmem:[%s1 + $0x10] sm:$0xf]
        %v1067 = vld [vmem:[%s1 + $0x14] sm:$0xf]
        %v1068 = vld [vmem:[%s1 + $0x18] sm:$0xf]
        %v1069 = vld [vmem:[%s1 + $0x1c] sm:$0xf]
        %v1070 = vld [vmem:[%s1 + $0x20] sm:$0xf]
        %v1071 = vld [vmem:[%s1 + $0x24] sm:$0xf]
        %v1072 = vld [vmem:[%s1 + $0x28] sm:$0xf]
        %v1073 = vld [vmem:[%s1 + $0x2c] sm:$0xf]
        %v1074 = vld [vmem:[%s1 + $0x30] sm:$0xf]
        %v1075 = vld [vmem:[%s1 + $0x34] sm:$0xf]
        %v1076 = vld [vmem:[%s1 + $0x38] sm:$0xf]
        %v1077 = vld [vmem:[%s1 + $0x3c] sm:$0xf]
        %v1078 = vld [vmem:[%s1 + $0x40] sm:$0xf]
        %v1079 = vld [vmem:[%s1 + $0x44] sm:$0xf]
        %v1080 = vld [vmem:[%s1 + $0x48] sm:$0xf]
        %v1081 = vld [vmem:[%s1 + $0x4c] sm:$0xf]
        %v1082 = vld [vmem:[%s1 + $0x50] sm:$0xf]
        %v1083 = vld [vmem:[%s1 + $0x54] sm:$0xf]
        %v1084 = vld [vmem:[%s1 + $0x58] sm:$0xf]
        %v1085 = vld [vmem:[%s1 + $0x5c] sm:$0xf]
        %v1086 = vld [vmem:[%s1 + $0x60] sm:$0xf]
        %v1087 = vld [vmem:[%s1 + $0x64] sm:$0xf]
        %v1088 = vld [vmem:[%s1 + $0x68] sm:$0xf]
        %v1089 = vld [vmem:[%s1 + $0x6c] sm:$0xf]
        %v1090 = vld [vmem:[%s1 + $0x70] sm:$0xf]
        %v1091 = vld [vmem:[%s1 + $0x74] sm:$0xf]
        %v1092 = vld [vmem:[%s1 + $0x78] sm:$0xf]
        %v1093 = vld [vmem:[%s1 + $0x7c] sm:$0xf]
        %v1094 = vld [vmem:[%s1 + $0x80] sm:$0xf]
        %v1095 = vld [vmem:[%s1 + $0x84] sm:$0xf]
        %v1096 = vld [vmem:[%s1 + $0x88] sm:$0xf]
        %v1097 = vld [vmem:[%s1 + $0x8c] sm:$0xf]
        %v1098 = vld [vmem:[%s1 + $0x90] sm:$0xf]
        %v1099 = vld [vmem:[%s1 + $0x94] sm:$0xf]
        %v1100 = vld [vmem:[%s1 + $0x98] sm:$0xf]
        %v1101 = vld [vmem:[%s1 + $0x9c] sm:$0xf]
        %v1102 = vld [vmem:[%s1 + $0xa0] sm:$0xf]
        %v1103 = vld [vmem:[%s1 + $0xa4] sm:$0xf]
        %v1104 = vld [vmem:[%s1 + $0xa8] sm:$0xf]
        %v1105 = vld [vmem:[%s1 + $0xac] sm:$0xf]
        %v1106 = vld [vmem:[%s1 + $0xb0] sm:$0xf]
        %v1107 = vld [vmem:[%s1 + $0xb4] sm:$0xf]
        %v1108 = vld [vmem:[%s1 + $0xb8] sm:$0xf]
        %v1109 = vld [vmem:[%s1 + $0xbc] sm:$0xf]
        %v1110 = vld [vmem:[#allocation2 + $0x180] sm:$0xff]
        %v1111 = vld [vmem:[#allocation2 + $0x188] sm:$0xf]
        %v1112 = vld [vmem:[#allocation2 + $0x18c] sm:$0xff]
        %v1113 = vld [vmem:[#allocation2 + $0x194] sm:$0xf]
        %s1114 = scalar_lea.vmem %s1, 192
        %v1115 = vld [vmem:[%s1114] sm:$0xf]
        %v1116 = vld [vmem:[%s1114 + $0x4] sm:$0xf]
        %v1117 = vld [vmem:[%s1114 + $0x8] sm:$0xf]
        %v1118 = vld [vmem:[%s1114 + $0xc] sm:$0xf]
        %v1119 = vld [vmem:[%s1114 + $0x10] sm:$0xf]
        %v1120 = vld [vmem:[%s1114 + $0x14] sm:$0xf]
        %v1121 = vld [vmem:[%s1114 + $0x18] sm:$0xf]
        %v1122 = vld [vmem:[%s1114 + $0x1c] sm:$0xf]
        %v1123 = vld [vmem:[%s1114 + $0x20] sm:$0xf]
        %v1124 = vld [vmem:[%s1114 + $0x24] sm:$0xf]
        %v1125 = vld [vmem:[%s1114 + $0x28] sm:$0xf]
        %v1126 = vld [vmem:[%s1114 + $0x2c] sm:$0xf]
        %v1127 = vld [vmem:[%s1114 + $0x30] sm:$0xf]
        %v1128 = vld [vmem:[%s1114 + $0x34] sm:$0xf]
        %v1129 = vld [vmem:[%s1114 + $0x38] sm:$0xf]
        %v1130 = vld [vmem:[%s1114 + $0x3c] sm:$0xf]
        %v1131 = vld [vmem:[%s1114 + $0x40] sm:$0xf]
        %v1132 = vld [vmem:[%s1114 + $0x44] sm:$0xf]
        %v1133 = vld [vmem:[%s1114 + $0x48] sm:$0xf]
        %v1134 = vld [vmem:[%s1114 + $0x4c] sm:$0xf]
        %v1135 = vld [vmem:[%s1114 + $0x50] sm:$0xf]
        %v1136 = vld [vmem:[%s1114 + $0x54] sm:$0xf]
        %v1137 = vld [vmem:[%s1114 + $0x58] sm:$0xf]
        %v1138 = vld [vmem:[%s1114 + $0x5c] sm:$0xf]
        %v1139 = vld [vmem:[%s1114 + $0x60] sm:$0xf]
        %v1140 = vld [vmem:[%s1114 + $0x64] sm:$0xf]
        %v1141 = vld [vmem:[%s1114 + $0x68] sm:$0xf]
        %v1142 = vld [vmem:[%s1114 + $0x6c] sm:$0xf]
        %v1143 = vld [vmem:[%s1114 + $0x70] sm:$0xf]
        %v1144 = vld [vmem:[%s1114 + $0x74] sm:$0xf]
        %v1145 = vld [vmem:[%s1114 + $0x78] sm:$0xf]
        %v1146 = vld [vmem:[%s1114 + $0x7c] sm:$0xf]
        %v1147 = vld [vmem:[%s1114 + $0x80] sm:$0xf]
        %v1148 = vld [vmem:[%s1114 + $0x84] sm:$0xf]
        %v1149 = vld [vmem:[%s1114 + $0x88] sm:$0xf]
        %v1150 = vld [vmem:[%s1114 + $0x8c] sm:$0xf]
        %v1151 = vld [vmem:[%s1114 + $0x90] sm:$0xf]
        %v1152 = vld [vmem:[%s1114 + $0x94] sm:$0xf]
        %v1153 = vld [vmem:[%s1114 + $0x98] sm:$0xf]
        %v1154 = vld [vmem:[%s1114 + $0x9c] sm:$0xf]
        %v1155 = vld [vmem:[%s1114 + $0xa0] sm:$0xf]
        %v1156 = vld [vmem:[%s1114 + $0xa4] sm:$0xf]
        %v1157 = vld [vmem:[%s1114 + $0xa8] sm:$0xf]
        %v1158 = vld [vmem:[%s1114 + $0xac] sm:$0xf]
        %v1159 = vld [vmem:[%s1114 + $0xb0] sm:$0xf]
        %v1160 = vld [vmem:[%s1114 + $0xb4] sm:$0xf]
        %v1161 = vld [vmem:[%s1114 + $0xb8] sm:$0xf]
        %v1162 = vld [vmem:[%s1114 + $0xbc] sm:$0xf]
        %v1227 = vunpack.c.l.b16 %v1002
        %v1228 = vunpack.c.h.b16 %v1002
        %v1229 = vunpack.c.l.b16 %v1003
        %v1230 = vunpack.c.l.b16 %v1004
        %v1231 = vunpack.c.h.b16 %v1004
        %v1232 = vunpack.c.l.b16 %v1005
        %v1233 = vunpack.c.l.b16 %v1006
        %v1234 = vunpack.c.h.b16 %v1006
        %v1235 = vunpack.c.l.b16 %v1007
        %v1236 = vunpack.c.l.b16 %v1008
        %v1237 = vunpack.c.h.b16 %v1008
        %v1238 = vunpack.c.l.b16 %v1009
        %v1239 = vunpack.c.l.b16 %v1010
        %v1240 = vunpack.c.h.b16 %v1010
        %v1241 = vunpack.c.l.b16 %v1011
        %v1242 = vunpack.c.l.b16 %v1012
        %v1243 = vunpack.c.h.b16 %v1012
        %v1244 = vunpack.c.l.b16 %v1013
        %v1245 = vunpack.c.l.b16 %v1014
        %v1246 = vunpack.c.h.b16 %v1014
        %v1247 = vunpack.c.l.b16 %v1015
        %v1248 = vunpack.c.l.b16 %v1016
        %v1249 = vunpack.c.h.b16 %v1016
        %v1250 = vunpack.c.l.b16 %v1017
        %v1251 = vunpack.c.l.b16 %v1018
        %v1252 = vunpack.c.h.b16 %v1018
        %v1253 = vunpack.c.l.b16 %v1019
        %v1254 = vunpack.c.l.b16 %v1020
        %v1255 = vunpack.c.h.b16 %v1020
        %v1256 = vunpack.c.l.b16 %v1021
        %v1257 = vunpack.c.l.b16 %v1022
        %v1258 = vunpack.c.h.b16 %v1022
        %v1259 = vunpack.c.l.b16 %v1023
        %v1260 = vunpack.c.l.b16 %v1024
        %v1261 = vunpack.c.h.b16 %v1024
        %v1262 = vunpack.c.l.b16 %v1025
        %v1263 = vunpack.c.l.b16 %v1026
        %v1264 = vunpack.c.h.b16 %v1026
        %v1265 = vunpack.c.l.b16 %v1027
        %v1266 = vunpack.c.l.b16 %v1028
        %v1267 = vunpack.c.h.b16 %v1028
        %v1268 = vunpack.c.l.b16 %v1029
        %v1269 = vunpack.c.l.b16 %v1030
        %v1270 = vunpack.c.h.b16 %v1030
        %v1271 = vunpack.c.l.b16 %v1031
        %v1272 = vunpack.c.l.b16 %v1032
        %v1273 = vunpack.c.h.b16 %v1032
        %v1274 = vunpack.c.l.b16 %v1033
        %v1275 = vunpack.c.l.b16 %v1034
        %v1276 = vunpack.c.h.b16 %v1034
        %v1277 = vunpack.c.l.b16 %v1035
        %v1278 = vunpack.c.l.b16 %v1036
        %v1279 = vunpack.c.h.b16 %v1036
        %v1280 = vunpack.c.l.b16 %v1037
        %v1281 = vunpack.c.l.b16 %v1038
        %v1282 = vunpack.c.h.b16 %v1038
        %v1283 = vunpack.c.l.b16 %v1039
        %v1284 = vunpack.c.l.b16 %v1040
        %v1285 = vunpack.c.h.b16 %v1040
        %v1286 = vunpack.c.l.b16 %v1041
        %v1287 = vunpack.c.l.b16 %v1042
        %v1288 = vunpack.c.h.b16 %v1042
        %v1289 = vunpack.c.l.b16 %v1043
        %v1290 = vunpack.c.l.b16 %v1044
        %v1291 = vunpack.c.h.b16 %v1044
        %v1292 = vunpack.c.l.b16 %v1045
        %v1293 = vunpack.c.l.b16 %v1046
        %v1294 = vunpack.c.h.b16 %v1046
        %v1295 = vunpack.c.l.b16 %v1047
        %v1296 = vunpack.c.l.b16 %v1048
        %v1297 = vunpack.c.h.b16 %v1048
        %v1298 = vunpack.c.l.b16 %v1049
        %v1299 = vunpack.c.l.b16 %v1050
        %v1300 = vunpack.c.h.b16 %v1050
        %v1301 = vunpack.c.l.b16 %v1051
        %v1302 = vunpack.c.l.b16 %v1052
        %v1303 = vunpack.c.h.b16 %v1052
        %v1304 = vunpack.c.l.b16 %v1053
        %v1305 = vunpack.c.l.b16 %v1054
        %v1306 = vunpack.c.h.b16 %v1054
        %v1307 = vunpack.c.l.b16 %v1055
        %v1308 = vunpack.c.l.b16 %v1056
        %v1309 = vunpack.c.h.b16 %v1056
        %v1310 = vunpack.c.l.b16 %v1057
        %v1311 = vunpack.c.l.b16 %v1058
        %v1312 = vunpack.c.h.b16 %v1058
        %v1313 = vunpack.c.l.b16 %v1059
        %v1314 = vunpack.c.l.b16 %v1060
        %v1315 = vunpack.c.h.b16 %v1060
        %v1316 = vunpack.c.l.b16 %v1061
        %v1317 = vunpack.c.l.b16 %v1110
        %v1318 = vunpack.c.h.b16 %v1110
        %v1319 = vunpack.c.l.b16 %v1111
        %v1320 = vunpack.c.l.b16 %v1112
        %v1321 = vunpack.c.h.b16 %v1112
        %v1322 = vunpack.c.l.b16 %v1113
        %v1323 = vpack.c.b16 %v1230, %v1227
        %v1324 = vpack.c.b16 %v1231, %v1228
        %v1325 = vpack.c.b16 %v1232, %v1229
        %v1326 = vpack.c.b16 %v1236, %v1233
        %v1327 = vpack.c.b16 %v1237, %v1234
        %v1328 = vpack.c.b16 %v1238, %v1235
        %v1329 = vpack.c.b16 %v1242, %v1239
        %v1330 = vpack.c.b16 %v1243, %v1240
        %v1331 = vpack.c.b16 %v1244, %v1241
        %v1332 = vpack.c.b16 %v1248, %v1245
        %v1333 = vpack.c.b16 %v1249, %v1246
        %v1334 = vpack.c.b16 %v1250, %v1247
        %v1335 = vpack.c.b16 %v1254, %v1251
        %v1336 = vpack.c.b16 %v1255, %v1252
        %v1337 = vpack.c.b16 %v1256, %v1253
        %v1338 = vpack.c.b16 %v1260, %v1257
        %v1339 = vpack.c.b16 %v1261, %v1258
        %v1340 = vpack.c.b16 %v1262, %v1259
        %v1341 = vpack.c.b16 %v1266, %v1263
        %v1342 = vpack.c.b16 %v1267, %v1264
        %v1343 = vpack.c.b16 %v1268, %v1265
        %v1344 = vpack.c.b16 %v1272, %v1269
        %v1345 = vpack.c.b16 %v1273, %v1270
        %v1346 = vpack.c.b16 %v1274, %v1271
        %v1347 = vpack.c.b16 %v1278, %v1275
        %v1348 = vpack.c.b16 %v1279, %v1276
        %v1349 = vpack.c.b16 %v1280, %v1277
        %v1350 = vpack.c.b16 %v1284, %v1281
        %v1351 = vpack.c.b16 %v1285, %v1282
        %v1352 = vpack.c.b16 %v1286, %v1283
        %v1353 = vpack.c.b16 %v1290, %v1287
        %v1354 = vpack.c.b16 %v1291, %v1288
        %v1355 = vpack.c.b16 %v1292, %v1289
        %v1356 = vpack.c.b16 %v1296, %v1293
        %v1357 = vpack.c.b16 %v1297, %v1294
        %v1358 = vpack.c.b16 %v1298, %v1295
        %v1359 = vpack.c.b16 %v1302, %v1299
        %v1360 = vpack.c.b16 %v1303, %v1300
        %v1361 = vpack.c.b16 %v1304, %v1301
        %v1362 = vpack.c.b16 %v1308, %v1305
        %v1363 = vpack.c.b16 %v1309, %v1306
        %v1364 = vpack.c.b16 %v1310, %v1307
        %v1365 = vpack.c.b16 %v1314, %v1311
        %v1366 = vpack.c.b16 %v1315, %v1312
        %v1367 = vpack.c.b16 %v1316, %v1313
        %v1368 = vpack.c.b16 %v1320, %v1317
        %v1369 = vpack.c.b16 %v1321, %v1318
        %v1370 = vpack.c.b16 %v1322, %v1319
        %v1467 = vunpack.c.l.b16 %v1115
        %v1468 = vunpack.c.l.b16 %v1116
        %v1469 = vunpack.c.l.b16 %v1117
        %v1470 = vunpack.c.l.b16 %v1118
        %v1471 = vunpack.c.l.b16 %v1119
        %v1472 = vunpack.c.l.b16 %v1120
        %v1473 = vunpack.c.l.b16 %v1121
        %v1474 = vunpack.c.l.b16 %v1122
        %v1475 = vunpack.c.l.b16 %v1123
        %v1476 = vunpack.c.l.b16 %v1124
        %v1477 = vunpack.c.l.b16 %v1125
        %v1478 = vunpack.c.l.b16 %v1126
        %v1479 = vunpack.c.l.b16 %v1127
        %v1480 = vunpack.c.l.b16 %v1128
        %v1481 = vunpack.c.l.b16 %v1129
        %v1482 = vunpack.c.l.b16 %v1130
        %v1483 = vunpack.c.l.b16 %v1131
        %v1484 = vunpack.c.l.b16 %v1132
        %v1485 = vunpack.c.l.b16 %v1133
        %v1486 = vunpack.c.l.b16 %v1134
        %v1487 = vunpack.c.l.b16 %v1135
        %v1488 = vunpack.c.l.b16 %v1136
        %v1489 = vunpack.c.l.b16 %v1137
        %v1490 = vunpack.c.l.b16 %v1138
        %v1491 = vunpack.c.l.b16 %v1139
        %v1492 = vunpack.c.l.b16 %v1140
        %v1493 = vunpack.c.l.b16 %v1141
        %v1494 = vunpack.c.l.b16 %v1142
        %v1495 = vunpack.c.l.b16 %v1143
        %v1496 = vunpack.c.l.b16 %v1144
        %v1497 = vunpack.c.l.b16 %v1145
        %v1498 = vunpack.c.l.b16 %v1146
        %v1499 = vunpack.c.l.b16 %v1147
        %v1500 = vunpack.c.l.b16 %v1148
        %v1501 = vunpack.c.l.b16 %v1149
        %v1502 = vunpack.c.l.b16 %v1150
        %v1503 = vunpack.c.l.b16 %v1151
        %v1504 = vunpack.c.l.b16 %v1152
        %v1505 = vunpack.c.l.b16 %v1153
        %v1506 = vunpack.c.l.b16 %v1154
        %v1507 = vunpack.c.l.b16 %v1155
        %v1508 = vunpack.c.l.b16 %v1156
        %v1509 = vunpack.c.l.b16 %v1157
        %v1510 = vunpack.c.l.b16 %v1158
        %v1511 = vunpack.c.l.b16 %v1159
        %v1512 = vunpack.c.l.b16 %v1160
        %v1513 = vunpack.c.l.b16 %v1161
        %v1514 = vunpack.c.l.b16 %v1162
        %v1515 = vpack.c.b16 %v1468, %v1467
        %v1516 = vpack.c.b16 %v1470, %v1469
        %v1517 = vpack.c.b16 %v1472, %v1471
        %v1518 = vpack.c.b16 %v1474, %v1473
        %v1519 = vpack.c.b16 %v1476, %v1475
        %v1520 = vpack.c.b16 %v1478, %v1477
        %v1521 = vpack.c.b16 %v1480, %v1479
        %v1522 = vpack.c.b16 %v1482, %v1481
        %v1523 = vpack.c.b16 %v1484, %v1483
        %v1524 = vpack.c.b16 %v1486, %v1485
        %v1525 = vpack.c.b16 %v1488, %v1487
        %v1526 = vpack.c.b16 %v1490, %v1489
        %v1527 = vpack.c.b16 %v1492, %v1491
        %v1528 = vpack.c.b16 %v1494, %v1493
        %v1529 = vpack.c.b16 %v1496, %v1495
        %v1530 = vpack.c.b16 %v1498, %v1497
        %v1531 = vpack.c.b16 %v1500, %v1499
        %v1532 = vpack.c.b16 %v1502, %v1501
        %v1533 = vpack.c.b16 %v1504, %v1503
        %v1534 = vpack.c.b16 %v1506, %v1505
        %v1535 = vpack.c.b16 %v1508, %v1507
        %v1536 = vpack.c.b16 %v1510, %v1509
        %v1537 = vpack.c.b16 %v1512, %v1511
        %v1538 = vpack.c.b16 %v1514, %v1513
        %1563 = vmatprep.subr.bf16.mxu0 0
        %1564 = vmatpush1.bf16.msra.mxu0 %v1522
        %1565 = vmatprep.subr.bf16.mxu0 0
        %1566 = vmatpush1.bf16.msra.mxu0 %v1521
        %1567 = vmatprep.subr.bf16.mxu0 0
        %1568 = vmatpush1.bf16.msra.mxu0 %v1520
        %1569 = vmatprep.subr.bf16.mxu0 0
        %1570 = vmatpush1.bf16.msra.mxu0 %v1519
        %1571 = vmatprep.subr.bf16.mxu0 0
        %1572 = vmatpush1.bf16.msra.mxu0 %v1518
        %1573 = vmatprep.subr.bf16.mxu0 0
        %1574 = vmatpush1.bf16.msra.mxu0 %v1517
        %1575 = vmatprep.subr.bf16.mxu0 0
        %1576 = vmatpush1.bf16.msra.mxu0 %v1516
        %1577 = vmatprep.subr.bf16.mxu0 0
        %1578 = vmatpush1.bf16.msra.mxu0 %v1515
        %1579 = vmatprep.subr.bf16.mxu0 0
        %1580 = vmatpush2.bf16.msra.mxu0 %v1530
        %1581 = vmatprep.subr.bf16.mxu0 0
        %1582 = vmatpush2.bf16.msra.mxu0 %v1529
        %1583 = vmatprep.subr.bf16.mxu0 0
        %1584 = vmatpush2.bf16.msra.mxu0 %v1528
        %1585 = vmatprep.subr.bf16.mxu0 0
        %1586 = vmatpush2.bf16.msra.mxu0 %v1527
        %1587 = vmatprep.subr.bf16.mxu0 0
        %1588 = vmatpush2.bf16.msra.mxu0 %v1526
        %1589 = vmatprep.subr.bf16.mxu0 0
        %1590 = vmatpush2.bf16.msra.mxu0 %v1525
        %1591 = vmatprep.subr.bf16.mxu0 0
        %1592 = vmatpush2.bf16.msra.mxu0 %v1524
        %1593 = vmatprep.subr.bf16.mxu0 0
        %1594 = vmatpush2.bf16.msra.mxu0 %v1523
        %1595 = vmatprep.mubr.bf16.mxu0 %v1324
        %1596 = vmatmul.mubr.bf16.gmra.mxu0 %v1323
        %v1597 = vpop.f32.mrf.mxu0
        %v1598 = vadd.f32 0.0, %v1597
        %v1599 = vpop.f32.mrf.mxu0
        %v1600 = vpop.f32.mrf.mxu0
        %v1601 = vadd.f32 0.0, %v1600
        %v1602 = vpop.f32.mrf.mxu0
        %1603 = vmatprep.mubr.bf16.mxu0 %v1327
        %1604 = vmatmul.mubr.bf16.gmra.mxu0 %v1326
        %v1605 = vpop.f32.mrf.mxu0
        %v1606 = vadd.f32 0.0, %v1605
        %v1607 = vpop.f32.mrf.mxu0
        %v1608 = vpop.f32.mrf.mxu0
        %v1609 = vadd.f32 0.0, %v1608
        %v1610 = vpop.f32.mrf.mxu0
        %1611 = vmatprep.mubr.bf16.mxu0 %v1330
        %1612 = vmatmul.mubr.bf16.gmra.mxu0 %v1329
        %v1613 = vpop.f32.mrf.mxu0
        %v1614 = vadd.f32 0.0, %v1613
        %v1615 = vpop.f32.mrf.mxu0
        %v1616 = vpop.f32.mrf.mxu0
        %v1617 = vadd.f32 0.0, %v1616
        %v1618 = vpop.f32.mrf.mxu0
        %1619 = vmatprep.mubr.bf16.mxu0 %v1333
        %1620 = vmatmul.mubr.bf16.gmra.mxu0 %v1332
        %v1621 = vpop.f32.mrf.mxu0
        %v1622 = vadd.f32 0.0, %v1621
        %v1623 = vpop.f32.mrf.mxu0
        %v1624 = vpop.f32.mrf.mxu0
        %v1625 = vadd.f32 0.0, %v1624
        %v1626 = vpop.f32.mrf.mxu0
        %1627 = vmatprep.mubr.bf16.mxu0 %v1336
        %1628 = vmatmul.mubr.bf16.gmra.mxu0 %v1335
        %v1629 = vpop.f32.mrf.mxu0
        %v1630 = vadd.f32 0.0, %v1629
        %v1631 = vpop.f32.mrf.mxu0
        %v1632 = vpop.f32.mrf.mxu0
        %v1633 = vadd.f32 0.0, %v1632
        %v1634 = vpop.f32.mrf.mxu0
        %1635 = vmatprep.mubr.bf16.mxu0 %v1339
        %1636 = vmatmul.mubr.bf16.gmra.mxu0 %v1338
        %v1637 = vpop.f32.mrf.mxu0
        %v1638 = vadd.f32 0.0, %v1637
        %v1639 = vpop.f32.mrf.mxu0
        %v1640 = vpop.f32.mrf.mxu0
        %v1641 = vadd.f32 0.0, %v1640
        %v1642 = vpop.f32.mrf.mxu0
        %1643 = vmatprep.mubr.bf16.mxu0 %v1342
        %1644 = vmatmul.mubr.bf16.gmra.mxu0 %v1341
        %v1645 = vpop.f32.mrf.mxu0
        %v1646 = vadd.f32 0.0, %v1645
        %v1647 = vpop.f32.mrf.mxu0
        %v1648 = vpop.f32.mrf.mxu0
        %v1649 = vadd.f32 0.0, %v1648
        %v1650 = vpop.f32.mrf.mxu0
        %1651 = vmatprep.mubr.bf16.mxu0 %v1345
        %1652 = vmatmul.mubr.bf16.gmra.mxu0 %v1344
        %v1653 = vpop.f32.mrf.mxu0
        %v1654 = vadd.f32 0.0, %v1653
        %v1655 = vpop.f32.mrf.mxu0
        %v1656 = vpop.f32.mrf.mxu0
        %v1657 = vadd.f32 0.0, %v1656
        %v1658 = vpop.f32.mrf.mxu0
        %1659 = vmatprep.mubr.bf16.mxu0 %v1348
        %1660 = vmatmul.mubr.bf16.gmra.mxu0 %v1347
        %v1661 = vpop.f32.mrf.mxu0
        %v1662 = vadd.f32 0.0, %v1661
        %v1663 = vpop.f32.mrf.mxu0
        %v1664 = vpop.f32.mrf.mxu0
        %v1665 = vadd.f32 0.0, %v1664
        %v1666 = vpop.f32.mrf.mxu0
        %1667 = vmatprep.mubr.bf16.mxu0 %v1351
        %1668 = vmatmul.mubr.bf16.gmra.mxu0 %v1350
        %v1669 = vpop.f32.mrf.mxu0
        %v1670 = vadd.f32 0.0, %v1669
        %v1671 = vpop.f32.mrf.mxu0
        %v1672 = vpop.f32.mrf.mxu0
        %v1673 = vadd.f32 0.0, %v1672
        %v1674 = vpop.f32.mrf.mxu0
        %1675 = vmatprep.mubr.bf16.mxu0 %v1354
        %1676 = vmatmul.mubr.bf16.gmra.mxu0 %v1353
        %v1677 = vpop.f32.mrf.mxu0
        %v1678 = vadd.f32 0.0, %v1677
        %v1679 = vpop.f32.mrf.mxu0
        %v1680 = vpop.f32.mrf.mxu0
        %v1681 = vadd.f32 0.0, %v1680
        %v1682 = vpop.f32.mrf.mxu0
        %1683 = vmatprep.mubr.bf16.mxu0 %v1357
        %1684 = vmatmul.mubr.bf16.gmra.mxu0 %v1356
        %v1685 = vpop.f32.mrf.mxu0
        %v1686 = vadd.f32 0.0, %v1685
        %v1687 = vpop.f32.mrf.mxu0
        %v1688 = vpop.f32.mrf.mxu0
        %v1689 = vadd.f32 0.0, %v1688
        %v1690 = vpop.f32.mrf.mxu0
        %1691 = vmatprep.mubr.bf16.mxu0 %v1360
        %1692 = vmatmul.mubr.bf16.gmra.mxu0 %v1359
        %v1693 = vpop.f32.mrf.mxu0
        %v1694 = vadd.f32 0.0, %v1693
        %v1695 = vpop.f32.mrf.mxu0
        %v1696 = vpop.f32.mrf.mxu0
        %v1697 = vadd.f32 0.0, %v1696
        %v1698 = vpop.f32.mrf.mxu0
        %1699 = vmatprep.mubr.bf16.mxu0 %v1363
        %1700 = vmatmul.mubr.bf16.gmra.mxu0 %v1362
        %v1701 = vpop.f32.mrf.mxu0
        %v1702 = vadd.f32 0.0, %v1701
        %v1703 = vpop.f32.mrf.mxu0
        %v1704 = vpop.f32.mrf.mxu0
        %v1705 = vadd.f32 0.0, %v1704
        %v1706 = vpop.f32.mrf.mxu0
        %1707 = vmatprep.mubr.bf16.mxu0 %v1366
        %1708 = vmatmul.mubr.bf16.gmra.mxu0 %v1365
        %v1709 = vpop.f32.mrf.mxu0
        %v1710 = vadd.f32 0.0, %v1709
        %v1711 = vpop.f32.mrf.mxu0
        %v1712 = vpop.f32.mrf.mxu0
        %v1713 = vadd.f32 0.0, %v1712
        %v1714 = vpop.f32.mrf.mxu0
        %1715 = vmatprep.mubr.bf16.mxu0 %v1369
        %1716 = vmatmul.mubr.bf16.gmra.mxu0 %v1368
        %v1717 = vpop.f32.mrf.mxu0
        %v1718 = vadd.f32 0.0, %v1717
        %v1719 = vpop.f32.mrf.mxu0
        %v1720 = vpop.f32.mrf.mxu0
        %v1721 = vadd.f32 0.0, %v1720
        %v1722 = vpop.f32.mrf.mxu0
        %1723 = vdwg.mxu0
        %1724 = vmatprep.subr.bf16.mxu0 0
        %1725 = vmatpush1.bf16.msra.mxu0 %v1538
        %1726 = vmatprep.subr.bf16.mxu0 0
        %1727 = vmatpush1.bf16.msra.mxu0 %v1537
        %1728 = vmatprep.subr.bf16.mxu0 0
        %1729 = vmatpush1.bf16.msra.mxu0 %v1536
        %1730 = vmatprep.subr.bf16.mxu0 0
        %1731 = vmatpush1.bf16.msra.mxu0 %v1535
        %1732 = vmatprep.subr.bf16.mxu0 0
        %1733 = vmatpush1.bf16.msra.mxu0 %v1534
        %1734 = vmatprep.subr.bf16.mxu0 0
        %1735 = vmatpush1.bf16.msra.mxu0 %v1533
        %1736 = vmatprep.subr.bf16.mxu0 0
        %1737 = vmatpush1.bf16.msra.mxu0 %v1532
        %1738 = vmatprep.subr.bf16.mxu0 0
        %1739 = vmatpush1.bf16.msra.mxu0 %v1531
        %1740 = vmatprep.subr.bf16.mxu0 0
        %1741 = vmatpush2.bf16.msra.mxu0 0
        %1742 = vmatprep.subr.bf16.mxu0 0
        %1743 = vmatpush2.bf16.msra.mxu0 0
        %1744 = vmatprep.subr.bf16.mxu0 0
        %1745 = vmatpush2.bf16.msra.mxu0 0
        %1746 = vmatprep.subr.bf16.mxu0 0
        %1747 = vmatpush2.bf16.msra.mxu0 0
        %1748 = vmatprep.subr.bf16.mxu0 0
        %1749 = vmatpush2.bf16.msra.mxu0 0
        %1750 = vmatprep.subr.bf16.mxu0 0
        %1751 = vmatpush2.bf16.msra.mxu0 0
        %1752 = vmatprep.subr.bf16.mxu0 0
        %1753 = vmatpush2.bf16.msra.mxu0 0
        %1754 = vmatprep.subr.bf16.mxu0 0
        %1755 = vmatpush2.bf16.msra.mxu0 0
        %1756 = vmatprep.mubr.bf16.mxu0 0
        %1757 = vmatmul.mubr.bf16.gmra.mxu0 %v1325
        %v1758 = vpop.f32.mrf.mxu0
        %v1759 = vadd.f32 %v1598, %v1758
        %v1760 = vpop.f32.mrf.mxu0
        %v1761 = vpop.f32.mrf.mxu0
        %v1762 = vadd.f32 %v1601, %v1761
        %v1763 = vpop.f32.mrf.mxu0
        %1764 = vmatprep.mubr.bf16.mxu0 0
        %1765 = vmatmul.mubr.bf16.gmra.mxu0 %v1328
        %v1766 = vpop.f32.mrf.mxu0
        %v1767 = vadd.f32 %v1606, %v1766
        %v1768 = vpop.f32.mrf.mxu0
        %v1769 = vpop.f32.mrf.mxu0
        %v1770 = vadd.f32 %v1609, %v1769
        %v1771 = vpop.f32.mrf.mxu0
        %1772 = vmatprep.mubr.bf16.mxu0 0
        %1773 = vmatmul.mubr.bf16.gmra.mxu0 %v1331
        %v1774 = vpop.f32.mrf.mxu0
        %v1775 = vadd.f32 %v1614, %v1774
        %v1776 = vpop.f32.mrf.mxu0
        %v1777 = vpop.f32.mrf.mxu0
        %v1778 = vadd.f32 %v1617, %v1777
        %v1779 = vpop.f32.mrf.mxu0
        %1780 = vmatprep.mubr.bf16.mxu0 0
        %1781 = vmatmul.mubr.bf16.gmra.mxu0 %v1334
        %v1782 = vpop.f32.mrf.mxu0
        %v1783 = vadd.f32 %v1622, %v1782
        %v1784 = vpop.f32.mrf.mxu0
        %v1785 = vpop.f32.mrf.mxu0
        %v1786 = vadd.f32 %v1625, %v1785
        %v1787 = vpop.f32.mrf.mxu0
        %1788 = vmatprep.mubr.bf16.mxu0 0
        %1789 = vmatmul.mubr.bf16.gmra.mxu0 %v1337
        %v1790 = vpop.f32.mrf.mxu0
        %v1791 = vadd.f32 %v1630, %v1790
        %v1792 = vpop.f32.mrf.mxu0
        %v1793 = vpop.f32.mrf.mxu0
        %v1794 = vadd.f32 %v1633, %v1793
        %v1795 = vpop.f32.mrf.mxu0
        %1796 = vmatprep.mubr.bf16.mxu0 0
        %1797 = vmatmul.mubr.bf16.gmra.mxu0 %v1340
        %v1798 = vpop.f32.mrf.mxu0
        %v1799 = vadd.f32 %v1638, %v1798
        %v1800 = vpop.f32.mrf.mxu0
        %v1801 = vpop.f32.mrf.mxu0
        %v1802 = vadd.f32 %v1641, %v1801
        %v1803 = vpop.f32.mrf.mxu0
        %1804 = vmatprep.mubr.bf16.mxu0 0
        %1805 = vmatmul.mubr.bf16.gmra.mxu0 %v1343
        %v1806 = vpop.f32.mrf.mxu0
        %v1807 = vadd.f32 %v1646, %v1806
        %v1808 = vpop.f32.mrf.mxu0
        %v1809 = vpop.f32.mrf.mxu0
        %v1810 = vadd.f32 %v1649, %v1809
        %v1811 = vpop.f32.mrf.mxu0
        %1812 = vmatprep.mubr.bf16.mxu0 0
        %1813 = vmatmul.mubr.bf16.gmra.mxu0 %v1346
        %v1814 = vpop.f32.mrf.mxu0
        %v1815 = vadd.f32 %v1654, %v1814
        %v1816 = vpop.f32.mrf.mxu0
        %v1817 = vpop.f32.mrf.mxu0
        %v1818 = vadd.f32 %v1657, %v1817
        %v1819 = vpop.f32.mrf.mxu0
        %1820 = vmatprep.mubr.bf16.mxu0 0
        %1821 = vmatmul.mubr.bf16.gmra.mxu0 %v1349
        %v1822 = vpop.f32.mrf.mxu0
        %v1823 = vadd.f32 %v1662, %v1822
        %v1824 = vpop.f32.mrf.mxu0
        %v1825 = vpop.f32.mrf.mxu0
        %v1826 = vadd.f32 %v1665, %v1825
        %v1827 = vpop.f32.mrf.mxu0
        %1828 = vmatprep.mubr.bf16.mxu0 0
        %1829 = vmatmul.mubr.bf16.gmra.mxu0 %v1352
        %v1830 = vpop.f32.mrf.mxu0
        %v1831 = vadd.f32 %v1670, %v1830
        %v1832 = vpop.f32.mrf.mxu0
        %v1833 = vpop.f32.mrf.mxu0
        %v1834 = vadd.f32 %v1673, %v1833
        %v1835 = vpop.f32.mrf.mxu0
        %1836 = vmatprep.mubr.bf16.mxu0 0
        %1837 = vmatmul.mubr.bf16.gmra.mxu0 %v1355
        %v1838 = vpop.f32.mrf.mxu0
        %v1839 = vadd.f32 %v1678, %v1838
        %v1840 = vpop.f32.mrf.mxu0
        %v1841 = vpop.f32.mrf.mxu0
        %v1842 = vadd.f32 %v1681, %v1841
        %v1843 = vpop.f32.mrf.mxu0
        %1844 = vmatprep.mubr.bf16.mxu0 0
        %1845 = vmatmul.mubr.bf16.gmra.mxu0 %v1358
        %v1846 = vpop.f32.mrf.mxu0
        %v1847 = vadd.f32 %v1686, %v1846
        %v1848 = vpop.f32.mrf.mxu0
        %v1849 = vpop.f32.mrf.mxu0
        %v1850 = vadd.f32 %v1689, %v1849
        %v1851 = vpop.f32.mrf.mxu0
        %1852 = vmatprep.mubr.bf16.mxu0 0
        %1853 = vmatmul.mubr.bf16.gmra.mxu0 %v1361
        %v1854 = vpop.f32.mrf.mxu0
        %v1855 = vadd.f32 %v1694, %v1854
        %v1856 = vpop.f32.mrf.mxu0
        %v1857 = vpop.f32.mrf.mxu0
        %v1858 = vadd.f32 %v1697, %v1857
        %v1859 = vpop.f32.mrf.mxu0
        %1860 = vmatprep.mubr.bf16.mxu0 0
        %1861 = vmatmul.mubr.bf16.gmra.mxu0 %v1364
        %v1862 = vpop.f32.mrf.mxu0
        %v1863 = vadd.f32 %v1702, %v1862
        %v1864 = vpop.f32.mrf.mxu0
        %v1865 = vpop.f32.mrf.mxu0
        %v1866 = vadd.f32 %v1705, %v1865
        %v1867 = vpop.f32.mrf.mxu0
        %1868 = vmatprep.mubr.bf16.mxu0 0
        %1869 = vmatmul.mubr.bf16.gmra.mxu0 %v1367
        %v1870 = vpop.f32.mrf.mxu0
        %v1871 = vadd.f32 %v1710, %v1870
        %v1872 = vpop.f32.mrf.mxu0
        %v1873 = vpop.f32.mrf.mxu0
        %v1874 = vadd.f32 %v1713, %v1873
        %v1875 = vpop.f32.mrf.mxu0
        %1876 = vmatprep.mubr.bf16.mxu0 0
        %1877 = vmatmul.mubr.bf16.gmra.mxu0 %v1370
        %v1878 = vpop.f32.mrf.mxu0
        %v1879 = vadd.f32 %v1718, %v1878
        %v1880 = vpop.f32.mrf.mxu0
        %v1881 = vpop.f32.mrf.mxu0
        %v1882 = vadd.f32 %v1721, %v1881
        %v1883 = vpop.f32.mrf.mxu0
        %1884 = vdwg.mxu0
        %v1889 = vunpack.c.l.b16 %v998
        %v1890 = vunpack.c.h.b16 %v998
        %v1891 = vunpack.c.l.b16 %v999
        %v1892 = vunpack.c.l.b16 %v1000
        %v1893 = vunpack.c.h.b16 %v1000
        %v1894 = vunpack.c.l.b16 %v1001
        %v1895 = vpack.c.b16 %v1892, %v1889
        %v1896 = vpack.c.b16 %v1893, %v1890
        %v1897 = vpack.c.b16 %v1894, %v1891
        %v1949 = vunpack.c.l.b16 %v1062
        %v1950 = vunpack.c.l.b16 %v1063
        %v1951 = vunpack.c.l.b16 %v1064
        %v1952 = vunpack.c.l.b16 %v1065
        %v1953 = vunpack.c.l.b16 %v1066
        %v1954 = vunpack.c.l.b16 %v1067
        %v1955 = vunpack.c.l.b16 %v1068
        %v1956 = vunpack.c.l.b16 %v1069
        %v1957 = vunpack.c.l.b16 %v1070
        %v1958 = vunpack.c.l.b16 %v1071
        %v1959 = vunpack.c.l.b16 %v1072
        %v1960 = vunpack.c.l.b16 %v1073
        %v1961 = vunpack.c.l.b16 %v1074
        %v1962 = vunpack.c.l.b16 %v1075
        %v1963 = vunpack.c.l.b16 %v1076
        %v1964 = vunpack.c.l.b16 %v1077
        %v1965 = vunpack.c.l.b16 %v1078
        %v1966 = vunpack.c.l.b16 %v1079
        %v1967 = vunpack.c.l.b16 %v1080
        %v1968 = vunpack.c.l.b16 %v1081
        %v1969 = vunpack.c.l.b16 %v1082
        %v1970 = vunpack.c.l.b16 %v1083
        %v1971 = vunpack.c.l.b16 %v1084
        %v1972 = vunpack.c.l.b16 %v1085
        %v1973 = vunpack.c.l.b16 %v1086
        %v1974 = vunpack.c.l.b16 %v1087
        %v1975 = vunpack.c.l.b16 %v1088
        %v1976 = vunpack.c.l.b16 %v1089
        %v1977 = vunpack.c.l.b16 %v1090
        %v1978 = vunpack.c.l.b16 %v1091
        %v1979 = vunpack.c.l.b16 %v1092
        %v1980 = vunpack.c.l.b16 %v1093
        %v1981 = vunpack.c.l.b16 %v1094
        %v1982 = vunpack.c.l.b16 %v1095
        %v1983 = vunpack.c.l.b16 %v1096
        %v1984 = vunpack.c.l.b16 %v1097
        %v1985 = vunpack.c.l.b16 %v1098
        %v1986 = vunpack.c.l.b16 %v1099
        %v1987 = vunpack.c.l.b16 %v1100
        %v1988 = vunpack.c.l.b16 %v1101
        %v1989 = vunpack.c.l.b16 %v1102
        %v1990 = vunpack.c.l.b16 %v1103
        %v1991 = vunpack.c.l.b16 %v1104
        %v1992 = vunpack.c.l.b16 %v1105
        %v1993 = vunpack.c.l.b16 %v1106
        %v1994 = vunpack.c.l.b16 %v1107
        %v1995 = vunpack.c.l.b16 %v1108
        %v1996 = vunpack.c.l.b16 %v1109
        %v1997 = vpack.c.b16 %v1950, %v1949
        %v1998 = vpack.c.b16 %v1952, %v1951
        %v1999 = vpack.c.b16 %v1954, %v1953
        %v2000 = vpack.c.b16 %v1956, %v1955
        %v2001 = vpack.c.b16 %v1958, %v1957
        %v2002 = vpack.c.b16 %v1960, %v1959
        %v2003 = vpack.c.b16 %v1962, %v1961
        %v2004 = vpack.c.b16 %v1964, %v1963
        %v2005 = vpack.c.b16 %v1966, %v1965
        %v2006 = vpack.c.b16 %v1968, %v1967
        %v2007 = vpack.c.b16 %v1970, %v1969
        %v2008 = vpack.c.b16 %v1972, %v1971
        %v2009 = vpack.c.b16 %v1974, %v1973
        %v2010 = vpack.c.b16 %v1976, %v1975
        %v2011 = vpack.c.b16 %v1978, %v1977
        %v2012 = vpack.c.b16 %v1980, %v1979
        %v2013 = vpack.c.b16 %v1982, %v1981
        %v2014 = vpack.c.b16 %v1984, %v1983
        %v2015 = vpack.c.b16 %v1986, %v1985
        %v2016 = vpack.c.b16 %v1988, %v1987
        %v2017 = vpack.c.b16 %v1990, %v1989
        %v2018 = vpack.c.b16 %v1992, %v1991
        %v2019 = vpack.c.b16 %v1994, %v1993
        %v2020 = vpack.c.b16 %v1996, %v1995
        %2045 = vmatprep.subr.bf16.mxu0 0
        %2046 = vmatpush1.bf16.msra.mxu0 %v2004
        %2047 = vmatprep.subr.bf16.mxu0 0
        %2048 = vmatpush1.bf16.msra.mxu0 %v2003
        %2049 = vmatprep.subr.bf16.mxu0 0
        %2050 = vmatpush1.bf16.msra.mxu0 %v2002
        %2051 = vmatprep.subr.bf16.mxu0 0
        %2052 = vmatpush1.bf16.msra.mxu0 %v2001
        %2053 = vmatprep.subr.bf16.mxu0 0
        %2054 = vmatpush1.bf16.msra.mxu0 %v2000
        %2055 = vmatprep.subr.bf16.mxu0 0
        %2056 = vmatpush1.bf16.msra.mxu0 %v1999
        %2057 = vmatprep.subr.bf16.mxu0 0
        %2058 = vmatpush1.bf16.msra.mxu0 %v1998
        %2059 = vmatprep.subr.bf16.mxu0 0
        %2060 = vmatpush1.bf16.msra.mxu0 %v1997
        %2061 = vmatprep.subr.bf16.mxu0 0
        %2062 = vmatpush2.bf16.msra.mxu0 %v2012
        %2063 = vmatprep.subr.bf16.mxu0 0
        %2064 = vmatpush2.bf16.msra.mxu0 %v2011
        %2065 = vmatprep.subr.bf16.mxu0 0
        %2066 = vmatpush2.bf16.msra.mxu0 %v2010
        %2067 = vmatprep.subr.bf16.mxu0 0
        %2068 = vmatpush2.bf16.msra.mxu0 %v2009
        %2069 = vmatprep.subr.bf16.mxu0 0
        %2070 = vmatpush2.bf16.msra.mxu0 %v2008
        %2071 = vmatprep.subr.bf16.mxu0 0
        %2072 = vmatpush2.bf16.msra.mxu0 %v2007
        %2073 = vmatprep.subr.bf16.mxu0 0
        %2074 = vmatpush2.bf16.msra.mxu0 %v2006
        %2075 = vmatprep.subr.bf16.mxu0 0
        %2076 = vmatpush2.bf16.msra.mxu0 %v2005
        %2077 = vmatprep.mubr.bf16.mxu0 %v1896
        %2078 = vmatmul.mubr.bf16.gmra.mxu0 %v1895
        %v2079 = vpop.f32.mrf.mxu0
        %v2080 = vadd.f32 %v1759, %v2079
        %v2081 = vpop.f32.mrf.mxu0
        %v2082 = vpop.f32.mrf.mxu0
        %v2083 = vadd.f32 %v1762, %v2082
        %v2084 = vpop.f32.mrf.mxu0
        %2085 = vmatprep.mubr.bf16.mxu0 %v1324
        %2086 = vmatmul.mubr.bf16.gmra.mxu0 %v1323
        %v2087 = vpop.f32.mrf.mxu0
        %v2088 = vadd.f32 %v1767, %v2087
        %v2089 = vpop.f32.mrf.mxu0
        %v2090 = vpop.f32.mrf.mxu0
        %v2091 = vadd.f32 %v1770, %v2090
        %v2092 = vpop.f32.mrf.mxu0
        %2093 = vmatprep.mubr.bf16.mxu0 %v1327
        %2094 = vmatmul.mubr.bf16.gmra.mxu0 %v1326
        %v2095 = vpop.f32.mrf.mxu0
        %v2096 = vadd.f32 %v1775, %v2095
        %v2097 = vpop.f32.mrf.mxu0
        %v2098 = vpop.f32.mrf.mxu0
        %v2099 = vadd.f32 %v1778, %v2098
        %v2100 = vpop.f32.mrf.mxu0
        %2101 = vmatprep.mubr.bf16.mxu0 %v1330
        %2102 = vmatmul.mubr.bf16.gmra.mxu0 %v1329
        %v2103 = vpop.f32.mrf.mxu0
        %v2104 = vadd.f32 %v1783, %v2103
        %v2105 = vpop.f32.mrf.mxu0
        %v2106 = vpop.f32.mrf.mxu0
        %v2107 = vadd.f32 %v1786, %v2106
        %v2108 = vpop.f32.mrf.mxu0
        %2109 = vmatprep.mubr.bf16.mxu0 %v1333
        %2110 = vmatmul.mubr.bf16.gmra.mxu0 %v1332
        %v2111 = vpop.f32.mrf.mxu0
        %v2112 = vadd.f32 %v1791, %v2111
        %v2113 = vpop.f32.mrf.mxu0
        %v2114 = vpop.f32.mrf.mxu0
        %v2115 = vadd.f32 %v1794, %v2114
        %v2116 = vpop.f32.mrf.mxu0
        %2117 = vmatprep.mubr.bf16.mxu0 %v1336
        %2118 = vmatmul.mubr.bf16.gmra.mxu0 %v1335
        %v2119 = vpop.f32.mrf.mxu0
        %v2120 = vadd.f32 %v1799, %v2119
        %v2121 = vpop.f32.mrf.mxu0
        %v2122 = vpop.f32.mrf.mxu0
        %v2123 = vadd.f32 %v1802, %v2122
        %v2124 = vpop.f32.mrf.mxu0
        %2125 = vmatprep.mubr.bf16.mxu0 %v1339
        %2126 = vmatmul.mubr.bf16.gmra.mxu0 %v1338
        %v2127 = vpop.f32.mrf.mxu0
        %v2128 = vadd.f32 %v1807, %v2127
        %v2129 = vpop.f32.mrf.mxu0
        %v2130 = vpop.f32.mrf.mxu0
        %v2131 = vadd.f32 %v1810, %v2130
        %v2132 = vpop.f32.mrf.mxu0
        %2133 = vmatprep.mubr.bf16.mxu0 %v1342
        %2134 = vmatmul.mubr.bf16.gmra.mxu0 %v1341
        %v2135 = vpop.f32.mrf.mxu0
        %v2136 = vadd.f32 %v1815, %v2135
        %v2137 = vpop.f32.mrf.mxu0
        %v2138 = vpop.f32.mrf.mxu0
        %v2139 = vadd.f32 %v1818, %v2138
        %v2140 = vpop.f32.mrf.mxu0
        %2141 = vmatprep.mubr.bf16.mxu0 %v1345
        %2142 = vmatmul.mubr.bf16.gmra.mxu0 %v1344
        %v2143 = vpop.f32.mrf.mxu0
        %v2144 = vadd.f32 %v1823, %v2143
        %v2145 = vpop.f32.mrf.mxu0
        %v2146 = vpop.f32.mrf.mxu0
        %v2147 = vadd.f32 %v1826, %v2146
        %v2148 = vpop.f32.mrf.mxu0
        %2149 = vmatprep.mubr.bf16.mxu0 %v1348
        %2150 = vmatmul.mubr.bf16.gmra.mxu0 %v1347
        %v2151 = vpop.f32.mrf.mxu0
        %v2152 = vadd.f32 %v1831, %v2151
        %v2153 = vpop.f32.mrf.mxu0
        %v2154 = vpop.f32.mrf.mxu0
        %v2155 = vadd.f32 %v1834, %v2154
        %v2156 = vpop.f32.mrf.mxu0
        %2157 = vmatprep.mubr.bf16.mxu0 %v1351
        %2158 = vmatmul.mubr.bf16.gmra.mxu0 %v1350
        %v2159 = vpop.f32.mrf.mxu0
        %v2160 = vadd.f32 %v1839, %v2159
        %v2161 = vpop.f32.mrf.mxu0
        %v2162 = vpop.f32.mrf.mxu0
        %v2163 = vadd.f32 %v1842, %v2162
        %v2164 = vpop.f32.mrf.mxu0
        %2165 = vmatprep.mubr.bf16.mxu0 %v1354
        %2166 = vmatmul.mubr.bf16.gmra.mxu0 %v1353
        %v2167 = vpop.f32.mrf.mxu0
        %v2168 = vadd.f32 %v1847, %v2167
        %v2169 = vpop.f32.mrf.mxu0
        %v2170 = vpop.f32.mrf.mxu0
        %v2171 = vadd.f32 %v1850, %v2170
        %v2172 = vpop.f32.mrf.mxu0
        %2173 = vmatprep.mubr.bf16.mxu0 %v1357
        %2174 = vmatmul.mubr.bf16.gmra.mxu0 %v1356
        %v2175 = vpop.f32.mrf.mxu0
        %v2176 = vadd.f32 %v1855, %v2175
        %v2177 = vpop.f32.mrf.mxu0
        %v2178 = vpop.f32.mrf.mxu0
        %v2179 = vadd.f32 %v1858, %v2178
        %v2180 = vpop.f32.mrf.mxu0
        %2181 = vmatprep.mubr.bf16.mxu0 %v1360
        %2182 = vmatmul.mubr.bf16.gmra.mxu0 %v1359
        %v2183 = vpop.f32.mrf.mxu0
        %v2184 = vadd.f32 %v1863, %v2183
        %v2185 = vpop.f32.mrf.mxu0
        %v2186 = vpop.f32.mrf.mxu0
        %v2187 = vadd.f32 %v1866, %v2186
        %v2188 = vpop.f32.mrf.mxu0
        %2189 = vmatprep.mubr.bf16.mxu0 %v1363
        %2190 = vmatmul.mubr.bf16.gmra.mxu0 %v1362
        %v2191 = vpop.f32.mrf.mxu0
        %v2192 = vadd.f32 %v1871, %v2191
        %v2193 = vpop.f32.mrf.mxu0
        %v2194 = vpop.f32.mrf.mxu0
        %v2195 = vadd.f32 %v1874, %v2194
        %v2196 = vpop.f32.mrf.mxu0
        %2197 = vmatprep.mubr.bf16.mxu0 %v1366
        %2198 = vmatmul.mubr.bf16.gmra.mxu0 %v1365
        %v2199 = vpop.f32.mrf.mxu0
        %v2200 = vadd.f32 %v1879, %v2199
        %v2201 = vpop.f32.mrf.mxu0
        %v2202 = vpop.f32.mrf.mxu0
        %v2203 = vadd.f32 %v1882, %v2202
        %v2204 = vpop.f32.mrf.mxu0
        %2205 = vdwg.mxu0
        %2206 = vmatprep.subr.bf16.mxu0 0
        %2207 = vmatpush1.bf16.msra.mxu0 %v2020
        %2208 = vmatprep.subr.bf16.mxu0 0
        %2209 = vmatpush1.bf16.msra.mxu0 %v2019
        %2210 = vmatprep.subr.bf16.mxu0 0
        %2211 = vmatpush1.bf16.msra.mxu0 %v2018
        %2212 = vmatprep.subr.bf16.mxu0 0
        %2213 = vmatpush1.bf16.msra.mxu0 %v2017
        %2214 = vmatprep.subr.bf16.mxu0 0
        %2215 = vmatpush1.bf16.msra.mxu0 %v2016
        %2216 = vmatprep.subr.bf16.mxu0 0
        %2217 = vmatpush1.bf16.msra.mxu0 %v2015
        %2218 = vmatprep.subr.bf16.mxu0 0
        %2219 = vmatpush1.bf16.msra.mxu0 %v2014
        %2220 = vmatprep.subr.bf16.mxu0 0
        %2221 = vmatpush1.bf16.msra.mxu0 %v2013
        %2222 = vmatprep.subr.bf16.mxu0 0
        %2223 = vmatpush2.bf16.msra.mxu0 0
        %2224 = vmatprep.subr.bf16.mxu0 0
        %2225 = vmatpush2.bf16.msra.mxu0 0
        %2226 = vmatprep.subr.bf16.mxu0 0
        %2227 = vmatpush2.bf16.msra.mxu0 0
        %2228 = vmatprep.subr.bf16.mxu0 0
        %2229 = vmatpush2.bf16.msra.mxu0 0
        %2230 = vmatprep.subr.bf16.mxu0 0
        %2231 = vmatpush2.bf16.msra.mxu0 0
        %2232 = vmatprep.subr.bf16.mxu0 0
        %2233 = vmatpush2.bf16.msra.mxu0 0
        %2234 = vmatprep.subr.bf16.mxu0 0
        %2235 = vmatpush2.bf16.msra.mxu0 0
        %2236 = vmatprep.subr.bf16.mxu0 0
        %2237 = vmatpush2.bf16.msra.mxu0 0
        %2238 = vmatprep.mubr.bf16.mxu0 0
        %2239 = vmatmul.mubr.bf16.gmra.mxu0 %v1897
        %v2240 = vpop.f32.mrf.mxu0
        %v2241 = vadd.f32 %v2080, %v2240
        %v2242 = vpop.f32.mrf.mxu0
        %v2243 = vpop.f32.mrf.mxu0
        %v2244 = vadd.f32 %v2083, %v2243
        %v2245 = vpop.f32.mrf.mxu0
        %2246 = vmatprep.mubr.bf16.mxu0 0
        %2247 = vmatmul.mubr.bf16.gmra.mxu0 %v1325
        %v2248 = vpop.f32.mrf.mxu0
        %v2249 = vadd.f32 %v2088, %v2248
        %v2250 = vpop.f32.mrf.mxu0
        %v2251 = vpop.f32.mrf.mxu0
        %v2252 = vadd.f32 %v2091, %v2251
        %v2253 = vpop.f32.mrf.mxu0
        %2254 = vmatprep.mubr.bf16.mxu0 0
        %2255 = vmatmul.mubr.bf16.gmra.mxu0 %v1328
        %v2256 = vpop.f32.mrf.mxu0
        %v2257 = vadd.f32 %v2096, %v2256
        %v2258 = vpop.f32.mrf.mxu0
        %v2259 = vpop.f32.mrf.mxu0
        %v2260 = vadd.f32 %v2099, %v2259
        %v2261 = vpop.f32.mrf.mxu0
        %2262 = vmatprep.mubr.bf16.mxu0 0
        %2263 = vmatmul.mubr.bf16.gmra.mxu0 %v1331
        %v2264 = vpop.f32.mrf.mxu0
        %v2265 = vadd.f32 %v2104, %v2264
        %v2266 = vpop.f32.mrf.mxu0
        %v2267 = vpop.f32.mrf.mxu0
        %v2268 = vadd.f32 %v2107, %v2267
        %v2269 = vpop.f32.mrf.mxu0
        %2270 = vmatprep.mubr.bf16.mxu0 0
        %2271 = vmatmul.mubr.bf16.gmra.mxu0 %v1334
        %v2272 = vpop.f32.mrf.mxu0
        %v2273 = vadd.f32 %v2112, %v2272
        %v2274 = vpop.f32.mrf.mxu0
        %v2275 = vpop.f32.mrf.mxu0
        %v2276 = vadd.f32 %v2115, %v2275
        %v2277 = vpop.f32.mrf.mxu0
        %2278 = vmatprep.mubr.bf16.mxu0 0
        %2279 = vmatmul.mubr.bf16.gmra.mxu0 %v1337
        %v2280 = vpop.f32.mrf.mxu0
        %v2281 = vadd.f32 %v2120, %v2280
        %v2282 = vpop.f32.mrf.mxu0
        %v2283 = vpop.f32.mrf.mxu0
        %v2284 = vadd.f32 %v2123, %v2283
        %v2285 = vpop.f32.mrf.mxu0
        %2286 = vmatprep.mubr.bf16.mxu0 0
        %2287 = vmatmul.mubr.bf16.gmra.mxu0 %v1340
        %v2288 = vpop.f32.mrf.mxu0
        %v2289 = vadd.f32 %v2128, %v2288
        %v2290 = vpop.f32.mrf.mxu0
        %v2291 = vpop.f32.mrf.mxu0
        %v2292 = vadd.f32 %v2131, %v2291
        %v2293 = vpop.f32.mrf.mxu0
        %2294 = vmatprep.mubr.bf16.mxu0 0
        %2295 = vmatmul.mubr.bf16.gmra.mxu0 %v1343
        %v2296 = vpop.f32.mrf.mxu0
        %v2297 = vadd.f32 %v2136, %v2296
        %v2298 = vpop.f32.mrf.mxu0
        %v2299 = vpop.f32.mrf.mxu0
        %v2300 = vadd.f32 %v2139, %v2299
        %v2301 = vpop.f32.mrf.mxu0
        %2302 = vmatprep.mubr.bf16.mxu0 0
        %2303 = vmatmul.mubr.bf16.gmra.mxu0 %v1346
        %v2304 = vpop.f32.mrf.mxu0
        %v2305 = vadd.f32 %v2144, %v2304
        %v2306 = vpop.f32.mrf.mxu0
        %v2307 = vpop.f32.mrf.mxu0
        %v2308 = vadd.f32 %v2147, %v2307
        %v2309 = vpop.f32.mrf.mxu0
        %2310 = vmatprep.mubr.bf16.mxu0 0
        %2311 = vmatmul.mubr.bf16.gmra.mxu0 %v1349
        %v2312 = vpop.f32.mrf.mxu0
        %v2313 = vadd.f32 %v2152, %v2312
        %v2314 = vpop.f32.mrf.mxu0
        %v2315 = vpop.f32.mrf.mxu0
        %v2316 = vadd.f32 %v2155, %v2315
        %v2317 = vpop.f32.mrf.mxu0
        %2318 = vmatprep.mubr.bf16.mxu0 0
        %2319 = vmatmul.mubr.bf16.gmra.mxu0 %v1352
        %v2320 = vpop.f32.mrf.mxu0
        %v2321 = vadd.f32 %v2160, %v2320
        %v2322 = vpop.f32.mrf.mxu0
        %v2323 = vpop.f32.mrf.mxu0
        %v2324 = vadd.f32 %v2163, %v2323
        %v2325 = vpop.f32.mrf.mxu0
        %2326 = vmatprep.mubr.bf16.mxu0 0
        %2327 = vmatmul.mubr.bf16.gmra.mxu0 %v1355
        %v2328 = vpop.f32.mrf.mxu0
        %v2329 = vadd.f32 %v2168, %v2328
        %v2330 = vpop.f32.mrf.mxu0
        %v2331 = vpop.f32.mrf.mxu0
        %v2332 = vadd.f32 %v2171, %v2331
        %v2333 = vpop.f32.mrf.mxu0
        %2334 = vmatprep.mubr.bf16.mxu0 0
        %2335 = vmatmul.mubr.bf16.gmra.mxu0 %v1358
        %v2336 = vpop.f32.mrf.mxu0
        %v2337 = vadd.f32 %v2176, %v2336
        %v2338 = vpop.f32.mrf.mxu0
        %v2339 = vpop.f32.mrf.mxu0
        %v2340 = vadd.f32 %v2179, %v2339
        %v2341 = vpop.f32.mrf.mxu0
        %2342 = vmatprep.mubr.bf16.mxu0 0
        %2343 = vmatmul.mubr.bf16.gmra.mxu0 %v1361
        %v2344 = vpop.f32.mrf.mxu0
        %v2345 = vadd.f32 %v2184, %v2344
        %v2346 = vpop.f32.mrf.mxu0
        %v2347 = vpop.f32.mrf.mxu0
        %v2348 = vadd.f32 %v2187, %v2347
        %v2349 = vpop.f32.mrf.mxu0
        %2350 = vmatprep.mubr.bf16.mxu0 0
        %2351 = vmatmul.mubr.bf16.gmra.mxu0 %v1364
        %v2352 = vpop.f32.mrf.mxu0
        %v2353 = vadd.f32 %v2192, %v2352
        %v2354 = vpop.f32.mrf.mxu0
        %v2355 = vpop.f32.mrf.mxu0
        %v2356 = vadd.f32 %v2195, %v2355
        %v2357 = vpop.f32.mrf.mxu0
        %2358 = vmatprep.mubr.bf16.mxu0 0
        %2359 = vmatmul.mubr.bf16.gmra.mxu0 %v1367
        %v2360 = vpop.f32.mrf.mxu0
        %v2361 = vadd.f32 %v2200, %v2360
        %v2362 = vpop.f32.mrf.mxu0
        %v2363 = vpop.f32.mrf.mxu0
        %v2364 = vadd.f32 %v2203, %v2363
        %v2365 = vpop.f32.mrf.mxu0
        %2366 = vdwg.mxu0
        %v2367 = vld [vmem:[#allocation2 + $0x30] sm:$0xff]
        %v2368 = vld [vmem:[#allocation2 + $0x38] sm:$0xf]
        %v2369 = vld [vmem:[#allocation2 + $0x3c] sm:$0xff]
        %v2370 = vld [vmem:[#allocation2 + $0x44] sm:$0xf]
        %v2371 = vld [vmem:[#allocation2 + $0x48] sm:$0xff]
        %v2372 = vld [vmem:[#allocation2 + $0x50] sm:$0xf]
        %v2373 = vld [vmem:[#allocation2 + $0x54] sm:$0xff]
        %v2374 = vld [vmem:[#allocation2 + $0x5c] sm:$0xf]
        %v2375 = vld [vmem:[#allocation2 + $0x60] sm:$0xff]
        %v2376 = vld [vmem:[#allocation2 + $0x68] sm:$0xf]
        %v2377 = vld [vmem:[#allocation2 + $0x6c] sm:$0xff]
        %v2378 = vld [vmem:[#allocation2 + $0x74] sm:$0xf]
        %v2379 = vld [vmem:[#allocation2 + $0x78] sm:$0xff]
        %v2380 = vld [vmem:[#allocation2 + $0x80] sm:$0xf]
        %v2381 = vld [vmem:[#allocation2 + $0x84] sm:$0xff]
        %v2382 = vld [vmem:[#allocation2 + $0x8c] sm:$0xf]
        %v2383 = vld [vmem:[#allocation2 + $0x90] sm:$0xff]
        %v2384 = vld [vmem:[#allocation2 + $0x98] sm:$0xf]
        %v2385 = vld [vmem:[#allocation2 + $0x9c] sm:$0xff]
        %v2386 = vld [vmem:[#allocation2 + $0xa4] sm:$0xf]
        %v2387 = vld [vmem:[#allocation2 + $0xa8] sm:$0xff]
        %v2388 = vld [vmem:[#allocation2 + $0xb0] sm:$0xf]
        %v2389 = vld [vmem:[#allocation2 + $0xb4] sm:$0xff]
        %v2390 = vld [vmem:[#allocation2 + $0xbc] sm:$0xf]
        %v2391 = vld [vmem:[#allocation2 + $0xc0] sm:$0xff]
        %v2392 = vld [vmem:[#allocation2 + $0xc8] sm:$0xf]
        %v2393 = vld [vmem:[#allocation2 + $0xcc] sm:$0xff]
        %v2394 = vld [vmem:[#allocation2 + $0xd4] sm:$0xf]
        %v2395 = vld [vmem:[#allocation2 + $0xd8] sm:$0xff]
        %v2396 = vld [vmem:[#allocation2 + $0xe0] sm:$0xf]
        %v2397 = vld [vmem:[#allocation2 + $0xe4] sm:$0xff]
        %v2398 = vld [vmem:[#allocation2 + $0xec] sm:$0xf]
        %v2399 = vld [vmem:[#allocation2 + $0xf0] sm:$0xff]
        %v2400 = vld [vmem:[#allocation2 + $0xf8] sm:$0xf]
        %v2401 = vld [vmem:[#allocation2 + $0xfc] sm:$0xff]
        %v2402 = vld [vmem:[#allocation2 + $0x104] sm:$0xf]
        %v2403 = vld [vmem:[#allocation2 + $0x108] sm:$0xff]
        %v2404 = vld [vmem:[#allocation2 + $0x110] sm:$0xf]
        %v2405 = vld [vmem:[#allocation2 + $0x114] sm:$0xff]
        %v2406 = vld [vmem:[#allocation2 + $0x11c] sm:$0xf]
        %v2407 = vld [vmem:[#allocation2 + $0x120] sm:$0xff]
        %v2408 = vld [vmem:[#allocation2 + $0x128] sm:$0xf]
        %v2409 = vld [vmem:[#allocation2 + $0x12c] sm:$0xff]
        %v2410 = vld [vmem:[#allocation2 + $0x134] sm:$0xf]
        %v2411 = vld [vmem:[#allocation2 + $0x138] sm:$0xff]
        %v2412 = vld [vmem:[#allocation2 + $0x140] sm:$0xf]
        %v2413 = vld [vmem:[#allocation2 + $0x144] sm:$0xff]
        %v2414 = vld [vmem:[#allocation2 + $0x14c] sm:$0xf]
        %v2415 = vld [vmem:[#allocation2 + $0x150] sm:$0xff]
        %v2416 = vld [vmem:[#allocation2 + $0x158] sm:$0xf]
        %v2417 = vld [vmem:[#allocation2 + $0x15c] sm:$0xff]
        %v2418 = vld [vmem:[#allocation2 + $0x164] sm:$0xf]
        %v2419 = vld [vmem:[#allocation2 + $0x168] sm:$0xff]
        %v2420 = vld [vmem:[#allocation2 + $0x170] sm:$0xf]
        %v2421 = vld [vmem:[#allocation2 + $0x174] sm:$0xff]
        %v2422 = vld [vmem:[#allocation2 + $0x17c] sm:$0xf]
        %v2423 = vld [vmem:[#allocation2 + $0x180] sm:$0xff]
        %v2424 = vld [vmem:[#allocation2 + $0x188] sm:$0xf]
        %v2425 = vld [vmem:[#allocation2 + $0x18c] sm:$0xff]
        %v2426 = vld [vmem:[#allocation2 + $0x194] sm:$0xf]
        %v2427 = vld [vmem:[#allocation2 + $0x198] sm:$0xff]
        %v2428 = vld [vmem:[#allocation2 + $0x1a0] sm:$0xf]
        %v2429 = vld [vmem:[#allocation2 + $0x1a4] sm:$0xff]
        %v2430 = vld [vmem:[#allocation2 + $0x1ac] sm:$0xf]
        %s2431 = scalar_lea.vmem %s1, 384
        %v2432 = vld [vmem:[%s2431] sm:$0xf]
        %v2433 = vld [vmem:[%s2431 + $0x4] sm:$0xf]
        %v2434 = vld [vmem:[%s2431 + $0x8] sm:$0xf]
        %v2435 = vld [vmem:[%s2431 + $0xc] sm:$0xf]
        %v2436 = vld [vmem:[%s2431 + $0x10] sm:$0xf]
        %v2437 = vld [vmem:[%s2431 + $0x14] sm:$0xf]
        %v2438 = vld [vmem:[%s2431 + $0x18] sm:$0xf]
        %v2439 = vld [vmem:[%s2431 + $0x1c] sm:$0xf]
        %v2440 = vld [vmem:[%s2431 + $0x20] sm:$0xf]
        %v2441 = vld [vmem:[%s2431 + $0x24] sm:$0xf]
        %v2442 = vld [vmem:[%s2431 + $0x28] sm:$0xf]
        %v2443 = vld [vmem:[%s2431 + $0x2c] sm:$0xf]
        %v2444 = vld [vmem:[%s2431 + $0x30] sm:$0xf]
        %v2445 = vld [vmem:[%s2431 + $0x34] sm:$0xf]
        %v2446 = vld [vmem:[%s2431 + $0x38] sm:$0xf]
        %v2447 = vld [vmem:[%s2431 + $0x3c] sm:$0xf]
        %v2448 = vld [vmem:[%s2431 + $0x40] sm:$0xf]
        %v2449 = vld [vmem:[%s2431 + $0x44] sm:$0xf]
        %v2450 = vld [vmem:[%s2431 + $0x48] sm:$0xf]
        %v2451 = vld [vmem:[%s2431 + $0x4c] sm:$0xf]
        %v2452 = vld [vmem:[%s2431 + $0x50] sm:$0xf]
        %v2453 = vld [vmem:[%s2431 + $0x54] sm:$0xf]
        %v2454 = vld [vmem:[%s2431 + $0x58] sm:$0xf]
        %v2455 = vld [vmem:[%s2431 + $0x5c] sm:$0xf]
        %v2456 = vld [vmem:[%s2431 + $0x60] sm:$0xf]
        %v2457 = vld [vmem:[%s2431 + $0x64] sm:$0xf]
        %v2458 = vld [vmem:[%s2431 + $0x68] sm:$0xf]
        %v2459 = vld [vmem:[%s2431 + $0x6c] sm:$0xf]
        %v2460 = vld [vmem:[%s2431 + $0x70] sm:$0xf]
        %v2461 = vld [vmem:[%s2431 + $0x74] sm:$0xf]
        %v2462 = vld [vmem:[%s2431 + $0x78] sm:$0xf]
        %v2463 = vld [vmem:[%s2431 + $0x7c] sm:$0xf]
        %v2464 = vld [vmem:[%s2431 + $0x80] sm:$0xf]
        %v2465 = vld [vmem:[%s2431 + $0x84] sm:$0xf]
        %v2466 = vld [vmem:[%s2431 + $0x88] sm:$0xf]
        %v2467 = vld [vmem:[%s2431 + $0x8c] sm:$0xf]
        %v2468 = vld [vmem:[%s2431 + $0x90] sm:$0xf]
        %v2469 = vld [vmem:[%s2431 + $0x94] sm:$0xf]
        %v2470 = vld [vmem:[%s2431 + $0x98] sm:$0xf]
        %v2471 = vld [vmem:[%s2431 + $0x9c] sm:$0xf]
        %v2472 = vld [vmem:[%s2431 + $0xa0] sm:$0xf]
        %v2473 = vld [vmem:[%s2431 + $0xa4] sm:$0xf]
        %v2474 = vld [vmem:[%s2431 + $0xa8] sm:$0xf]
        %v2475 = vld [vmem:[%s2431 + $0xac] sm:$0xf]
        %v2476 = vld [vmem:[%s2431 + $0xb0] sm:$0xf]
        %v2477 = vld [vmem:[%s2431 + $0xb4] sm:$0xf]
        %v2478 = vld [vmem:[%s2431 + $0xb8] sm:$0xf]
        %v2479 = vld [vmem:[%s2431 + $0xbc] sm:$0xf]
        %v2544 = vunpack.c.l.b16 %v2367
        %v2545 = vunpack.c.h.b16 %v2367
        %v2546 = vunpack.c.l.b16 %v2368
        %v2547 = vunpack.c.l.b16 %v2369
        %v2548 = vunpack.c.h.b16 %v2369
        %v2549 = vunpack.c.l.b16 %v2370
        %v2550 = vunpack.c.l.b16 %v2371
        %v2551 = vunpack.c.h.b16 %v2371
        %v2552 = vunpack.c.l.b16 %v2372
        %v2553 = vunpack.c.l.b16 %v2373
        %v2554 = vunpack.c.h.b16 %v2373
        %v2555 = vunpack.c.l.b16 %v2374
        %v2556 = vunpack.c.l.b16 %v2375
        %v2557 = vunpack.c.h.b16 %v2375
        %v2558 = vunpack.c.l.b16 %v2376
        %v2559 = vunpack.c.l.b16 %v2377
        %v2560 = vunpack.c.h.b16 %v2377
        %v2561 = vunpack.c.l.b16 %v2378
        %v2562 = vunpack.c.l.b16 %v2379
        %v2563 = vunpack.c.h.b16 %v2379
        %v2564 = vunpack.c.l.b16 %v2380
        %v2565 = vunpack.c.l.b16 %v2381
        %v2566 = vunpack.c.h.b16 %v2381
        %v2567 = vunpack.c.l.b16 %v2382
        %v2568 = vunpack.c.l.b16 %v2383
        %v2569 = vunpack.c.h.b16 %v2383
        %v2570 = vunpack.c.l.b16 %v2384
        %v2571 = vunpack.c.l.b16 %v2385
        %v2572 = vunpack.c.h.b16 %v2385
        %v2573 = vunpack.c.l.b16 %v2386
        %v2574 = vunpack.c.l.b16 %v2387
        %v2575 = vunpack.c.h.b16 %v2387
        %v2576 = vunpack.c.l.b16 %v2388
        %v2577 = vunpack.c.l.b16 %v2389
        %v2578 = vunpack.c.h.b16 %v2389
        %v2579 = vunpack.c.l.b16 %v2390
        %v2580 = vunpack.c.l.b16 %v2391
        %v2581 = vunpack.c.h.b16 %v2391
        %v2582 = vunpack.c.l.b16 %v2392
        %v2583 = vunpack.c.l.b16 %v2393
        %v2584 = vunpack.c.h.b16 %v2393
        %v2585 = vunpack.c.l.b16 %v2394
        %v2586 = vunpack.c.l.b16 %v2395
        %v2587 = vunpack.c.h.b16 %v2395
        %v2588 = vunpack.c.l.b16 %v2396
        %v2589 = vunpack.c.l.b16 %v2397
        %v2590 = vunpack.c.h.b16 %v2397
        %v2591 = vunpack.c.l.b16 %v2398
        %v2592 = vunpack.c.l.b16 %v2399
        %v2593 = vunpack.c.h.b16 %v2399
        %v2594 = vunpack.c.l.b16 %v2400
        %v2595 = vunpack.c.l.b16 %v2401
        %v2596 = vunpack.c.h.b16 %v2401
        %v2597 = vunpack.c.l.b16 %v2402
        %v2598 = vunpack.c.l.b16 %v2403
        %v2599 = vunpack.c.h.b16 %v2403
        %v2600 = vunpack.c.l.b16 %v2404
        %v2601 = vunpack.c.l.b16 %v2405
        %v2602 = vunpack.c.h.b16 %v2405
        %v2603 = vunpack.c.l.b16 %v2406
        %v2604 = vunpack.c.l.b16 %v2407
        %v2605 = vunpack.c.h.b16 %v2407
        %v2606 = vunpack.c.l.b16 %v2408
        %v2607 = vunpack.c.l.b16 %v2409
        %v2608 = vunpack.c.h.b16 %v2409
        %v2609 = vunpack.c.l.b16 %v2410
        %v2610 = vunpack.c.l.b16 %v2411
        %v2611 = vunpack.c.h.b16 %v2411
        %v2612 = vunpack.c.l.b16 %v2412
        %v2613 = vunpack.c.l.b16 %v2413
        %v2614 = vunpack.c.h.b16 %v2413
        %v2615 = vunpack.c.l.b16 %v2414
        %v2616 = vunpack.c.l.b16 %v2415
        %v2617 = vunpack.c.h.b16 %v2415
        %v2618 = vunpack.c.l.b16 %v2416
        %v2619 = vunpack.c.l.b16 %v2417
        %v2620 = vunpack.c.h.b16 %v2417
        %v2621 = vunpack.c.l.b16 %v2418
        %v2622 = vunpack.c.l.b16 %v2419
        %v2623 = vunpack.c.h.b16 %v2419
        %v2624 = vunpack.c.l.b16 %v2420
        %v2625 = vunpack.c.l.b16 %v2421
        %v2626 = vunpack.c.h.b16 %v2421
        %v2627 = vunpack.c.l.b16 %v2422
        %v2628 = vunpack.c.l.b16 %v2423
        %v2629 = vunpack.c.h.b16 %v2423
        %v2630 = vunpack.c.l.b16 %v2424
        %v2631 = vunpack.c.l.b16 %v2425
        %v2632 = vunpack.c.h.b16 %v2425
        %v2633 = vunpack.c.l.b16 %v2426
        %v2634 = vunpack.c.l.b16 %v2427
        %v2635 = vunpack.c.h.b16 %v2427
        %v2636 = vunpack.c.l.b16 %v2428
        %v2637 = vunpack.c.l.b16 %v2429
        %v2638 = vunpack.c.h.b16 %v2429
        %v2639 = vunpack.c.l.b16 %v2430
        %v2640 = vpack.c.b16 %v2547, %v2544
        %v2641 = vpack.c.b16 %v2548, %v2545
        %v2642 = vpack.c.b16 %v2549, %v2546
        %v2643 = vpack.c.b16 %v2553, %v2550
        %v2644 = vpack.c.b16 %v2554, %v2551
        %v2645 = vpack.c.b16 %v2555, %v2552
        %v2646 = vpack.c.b16 %v2559, %v2556
        %v2647 = vpack.c.b16 %v2560, %v2557
        %v2648 = vpack.c.b16 %v2561, %v2558
        %v2649 = vpack.c.b16 %v2565, %v2562
        %v2650 = vpack.c.b16 %v2566, %v2563
        %v2651 = vpack.c.b16 %v2567, %v2564
        %v2652 = vpack.c.b16 %v2571, %v2568
        %v2653 = vpack.c.b16 %v2572, %v2569
        %v2654 = vpack.c.b16 %v2573, %v2570
        %v2655 = vpack.c.b16 %v2577, %v2574
        %v2656 = vpack.c.b16 %v2578, %v2575
        %v2657 = vpack.c.b16 %v2579, %v2576
        %v2658 = vpack.c.b16 %v2583, %v2580
        %v2659 = vpack.c.b16 %v2584, %v2581
        %v2660 = vpack.c.b16 %v2585, %v2582
        %v2661 = vpack.c.b16 %v2589, %v2586
        %v2662 = vpack.c.b16 %v2590, %v2587
        %v2663 = vpack.c.b16 %v2591, %v2588
        %v2664 = vpack.c.b16 %v2595, %v2592
        %v2665 = vpack.c.b16 %v2596, %v2593
        %v2666 = vpack.c.b16 %v2597, %v2594
        %v2667 = vpack.c.b16 %v2601, %v2598
        %v2668 = vpack.c.b16 %v2602, %v2599
        %v2669 = vpack.c.b16 %v2603, %v2600
        %v2670 = vpack.c.b16 %v2607, %v2604
        %v2671 = vpack.c.b16 %v2608, %v2605
        %v2672 = vpack.c.b16 %v2609, %v2606
        %v2673 = vpack.c.b16 %v2613, %v2610
        %v2674 = vpack.c.b16 %v2614, %v2611
        %v2675 = vpack.c.b16 %v2615, %v2612
        %v2676 = vpack.c.b16 %v2619, %v2616
        %v2677 = vpack.c.b16 %v2620, %v2617
        %v2678 = vpack.c.b16 %v2621, %v2618
        %v2679 = vpack.c.b16 %v2625, %v2622
        %v2680 = vpack.c.b16 %v2626, %v2623
        %v2681 = vpack.c.b16 %v2627, %v2624
        %v2682 = vpack.c.b16 %v2631, %v2628
        %v2683 = vpack.c.b16 %v2632, %v2629
        %v2684 = vpack.c.b16 %v2633, %v2630
        %v2685 = vpack.c.b16 %v2637, %v2634
        %v2686 = vpack.c.b16 %v2638, %v2635
        %v2687 = vpack.c.b16 %v2639, %v2636
        %v2784 = vunpack.c.l.b16 %v2432
        %v2785 = vunpack.c.l.b16 %v2433
        %v2786 = vunpack.c.l.b16 %v2434
        %v2787 = vunpack.c.l.b16 %v2435
        %v2788 = vunpack.c.l.b16 %v2436
        %v2789 = vunpack.c.l.b16 %v2437
        %v2790 = vunpack.c.l.b16 %v2438
        %v2791 = vunpack.c.l.b16 %v2439
        %v2792 = vunpack.c.l.b16 %v2440
        %v2793 = vunpack.c.l.b16 %v2441
        %v2794 = vunpack.c.l.b16 %v2442
        %v2795 = vunpack.c.l.b16 %v2443
        %v2796 = vunpack.c.l.b16 %v2444
        %v2797 = vunpack.c.l.b16 %v2445
        %v2798 = vunpack.c.l.b16 %v2446
        %v2799 = vunpack.c.l.b16 %v2447
        %v2800 = vunpack.c.l.b16 %v2448
        %v2801 = vunpack.c.l.b16 %v2449
        %v2802 = vunpack.c.l.b16 %v2450
        %v2803 = vunpack.c.l.b16 %v2451
        %v2804 = vunpack.c.l.b16 %v2452
        %v2805 = vunpack.c.l.b16 %v2453
        %v2806 = vunpack.c.l.b16 %v2454
        %v2807 = vunpack.c.l.b16 %v2455
        %v2808 = vunpack.c.l.b16 %v2456
        %v2809 = vunpack.c.l.b16 %v2457
        %v2810 = vunpack.c.l.b16 %v2458
        %v2811 = vunpack.c.l.b16 %v2459
        %v2812 = vunpack.c.l.b16 %v2460
        %v2813 = vunpack.c.l.b16 %v2461
        %v2814 = vunpack.c.l.b16 %v2462
        %v2815 = vunpack.c.l.b16 %v2463
        %v2816 = vunpack.c.l.b16 %v2464
        %v2817 = vunpack.c.l.b16 %v2465
        %v2818 = vunpack.c.l.b16 %v2466
        %v2819 = vunpack.c.l.b16 %v2467
        %v2820 = vunpack.c.l.b16 %v2468
        %v2821 = vunpack.c.l.b16 %v2469
        %v2822 = vunpack.c.l.b16 %v2470
        %v2823 = vunpack.c.l.b16 %v2471
        %v2824 = vunpack.c.l.b16 %v2472
        %v2825 = vunpack.c.l.b16 %v2473
        %v2826 = vunpack.c.l.b16 %v2474
        %v2827 = vunpack.c.l.b16 %v2475
        %v2828 = vunpack.c.l.b16 %v2476
        %v2829 = vunpack.c.l.b16 %v2477
        %v2830 = vunpack.c.l.b16 %v2478
        %v2831 = vunpack.c.l.b16 %v2479
        %v2832 = vpack.c.b16 %v2785, %v2784
        %v2833 = vpack.c.b16 %v2787, %v2786
        %v2834 = vpack.c.b16 %v2789, %v2788
        %v2835 = vpack.c.b16 %v2791, %v2790
        %v2836 = vpack.c.b16 %v2793, %v2792
        %v2837 = vpack.c.b16 %v2795, %v2794
        %v2838 = vpack.c.b16 %v2797, %v2796
        %v2839 = vpack.c.b16 %v2799, %v2798
        %v2840 = vpack.c.b16 %v2801, %v2800
        %v2841 = vpack.c.b16 %v2803, %v2802
        %v2842 = vpack.c.b16 %v2805, %v2804
        %v2843 = vpack.c.b16 %v2807, %v2806
        %v2844 = vpack.c.b16 %v2809, %v2808
        %v2845 = vpack.c.b16 %v2811, %v2810
        %v2846 = vpack.c.b16 %v2813, %v2812
        %v2847 = vpack.c.b16 %v2815, %v2814
        %v2848 = vpack.c.b16 %v2817, %v2816
        %v2849 = vpack.c.b16 %v2819, %v2818
        %v2850 = vpack.c.b16 %v2821, %v2820
        %v2851 = vpack.c.b16 %v2823, %v2822
        %v2852 = vpack.c.b16 %v2825, %v2824
        %v2853 = vpack.c.b16 %v2827, %v2826
        %v2854 = vpack.c.b16 %v2829, %v2828
        %v2855 = vpack.c.b16 %v2831, %v2830
        %2880 = vmatprep.subr.bf16.mxu0 0
        %2881 = vmatpush1.bf16.msra.mxu0 %v2839
        %2882 = vmatprep.subr.bf16.mxu0 0
        %2883 = vmatpush1.bf16.msra.mxu0 %v2838
        %2884 = vmatprep.subr.bf16.mxu0 0
        %2885 = vmatpush1.bf16.msra.mxu0 %v2837
        %2886 = vmatprep.subr.bf16.mxu0 0
        %2887 = vmatpush1.bf16.msra.mxu0 %v2836
        %2888 = vmatprep.subr.bf16.mxu0 0
        %2889 = vmatpush1.bf16.msra.mxu0 %v2835
        %2890 = vmatprep.subr.bf16.mxu0 0
        %2891 = vmatpush1.bf16.msra.mxu0 %v2834
        %2892 = vmatprep.subr.bf16.mxu0 0
        %2893 = vmatpush1.bf16.msra.mxu0 %v2833
        %2894 = vmatprep.subr.bf16.mxu0 0
        %2895 = vmatpush1.bf16.msra.mxu0 %v2832
        %2896 = vmatprep.subr.bf16.mxu0 0
        %2897 = vmatpush2.bf16.msra.mxu0 %v2847
        %2898 = vmatprep.subr.bf16.mxu0 0
        %2899 = vmatpush2.bf16.msra.mxu0 %v2846
        %2900 = vmatprep.subr.bf16.mxu0 0
        %2901 = vmatpush2.bf16.msra.mxu0 %v2845
        %2902 = vmatprep.subr.bf16.mxu0 0
        %2903 = vmatpush2.bf16.msra.mxu0 %v2844
        %2904 = vmatprep.subr.bf16.mxu0 0
        %2905 = vmatpush2.bf16.msra.mxu0 %v2843
        %2906 = vmatprep.subr.bf16.mxu0 0
        %2907 = vmatpush2.bf16.msra.mxu0 %v2842
        %2908 = vmatprep.subr.bf16.mxu0 0
        %2909 = vmatpush2.bf16.msra.mxu0 %v2841
        %2910 = vmatprep.subr.bf16.mxu0 0
        %2911 = vmatpush2.bf16.msra.mxu0 %v2840
        %2912 = vmatprep.mubr.bf16.mxu0 %v2641
        %2913 = vmatmul.mubr.bf16.gmra.mxu0 %v2640
        %v2914 = vpop.f32.mrf.mxu0
        %v2915 = vadd.f32 0.0, %v2914
        %v2916 = vpop.f32.mrf.mxu0
        %v2917 = vpop.f32.mrf.mxu0
        %v2918 = vadd.f32 0.0, %v2917
        %v2919 = vpop.f32.mrf.mxu0
        %2920 = vmatprep.mubr.bf16.mxu0 %v2644
        %2921 = vmatmul.mubr.bf16.gmra.mxu0 %v2643
        %v2922 = vpop.f32.mrf.mxu0
        %v2923 = vadd.f32 0.0, %v2922
        %v2924 = vpop.f32.mrf.mxu0
        %v2925 = vpop.f32.mrf.mxu0
        %v2926 = vadd.f32 0.0, %v2925
        %v2927 = vpop.f32.mrf.mxu0
        %2928 = vmatprep.mubr.bf16.mxu0 %v2647
        %2929 = vmatmul.mubr.bf16.gmra.mxu0 %v2646
        %v2930 = vpop.f32.mrf.mxu0
        %v2931 = vadd.f32 0.0, %v2930
        %v2932 = vpop.f32.mrf.mxu0
        %v2933 = vpop.f32.mrf.mxu0
        %v2934 = vadd.f32 0.0, %v2933
        %v2935 = vpop.f32.mrf.mxu0
        %2936 = vmatprep.mubr.bf16.mxu0 %v2650
        %2937 = vmatmul.mubr.bf16.gmra.mxu0 %v2649
        %v2938 = vpop.f32.mrf.mxu0
        %v2939 = vadd.f32 0.0, %v2938
        %v2940 = vpop.f32.mrf.mxu0
        %v2941 = vpop.f32.mrf.mxu0
        %v2942 = vadd.f32 0.0, %v2941
        %v2943 = vpop.f32.mrf.mxu0
        %2944 = vmatprep.mubr.bf16.mxu0 %v2653
        %2945 = vmatmul.mubr.bf16.gmra.mxu0 %v2652
        %v2946 = vpop.f32.mrf.mxu0
        %v2947 = vadd.f32 0.0, %v2946
        %v2948 = vpop.f32.mrf.mxu0
        %v2949 = vpop.f32.mrf.mxu0
        %v2950 = vadd.f32 0.0, %v2949
        %v2951 = vpop.f32.mrf.mxu0
        %2952 = vmatprep.mubr.bf16.mxu0 %v2656
        %2953 = vmatmul.mubr.bf16.gmra.mxu0 %v2655
        %v2954 = vpop.f32.mrf.mxu0
        %v2955 = vadd.f32 0.0, %v2954
        %v2956 = vpop.f32.mrf.mxu0
        %v2957 = vpop.f32.mrf.mxu0
        %v2958 = vadd.f32 0.0, %v2957
        %v2959 = vpop.f32.mrf.mxu0
        %2960 = vmatprep.mubr.bf16.mxu0 %v2659
        %2961 = vmatmul.mubr.bf16.gmra.mxu0 %v2658
        %v2962 = vpop.f32.mrf.mxu0
        %v2963 = vadd.f32 0.0, %v2962
        %v2964 = vpop.f32.mrf.mxu0
        %v2965 = vpop.f32.mrf.mxu0
        %v2966 = vadd.f32 0.0, %v2965
        %v2967 = vpop.f32.mrf.mxu0
        %2968 = vmatprep.mubr.bf16.mxu0 %v2662
        %2969 = vmatmul.mubr.bf16.gmra.mxu0 %v2661
        %v2970 = vpop.f32.mrf.mxu0
        %v2971 = vadd.f32 0.0, %v2970
        %v2972 = vpop.f32.mrf.mxu0
        %v2973 = vpop.f32.mrf.mxu0
        %v2974 = vadd.f32 0.0, %v2973
        %v2975 = vpop.f32.mrf.mxu0
        %2976 = vmatprep.mubr.bf16.mxu0 %v2665
        %2977 = vmatmul.mubr.bf16.gmra.mxu0 %v2664
        %v2978 = vpop.f32.mrf.mxu0
        %v2979 = vadd.f32 0.0, %v2978
        %v2980 = vpop.f32.mrf.mxu0
        %v2981 = vpop.f32.mrf.mxu0
        %v2982 = vadd.f32 0.0, %v2981
        %v2983 = vpop.f32.mrf.mxu0
        %2984 = vmatprep.mubr.bf16.mxu0 %v2668
        %2985 = vmatmul.mubr.bf16.gmra.mxu0 %v2667
        %v2986 = vpop.f32.mrf.mxu0
        %v2987 = vadd.f32 0.0, %v2986
        %v2988 = vpop.f32.mrf.mxu0
        %v2989 = vpop.f32.mrf.mxu0
        %v2990 = vadd.f32 0.0, %v2989
        %v2991 = vpop.f32.mrf.mxu0
        %2992 = vmatprep.mubr.bf16.mxu0 %v2671
        %2993 = vmatmul.mubr.bf16.gmra.mxu0 %v2670
        %v2994 = vpop.f32.mrf.mxu0
        %v2995 = vadd.f32 0.0, %v2994
        %v2996 = vpop.f32.mrf.mxu0
        %v2997 = vpop.f32.mrf.mxu0
        %v2998 = vadd.f32 0.0, %v2997
        %v2999 = vpop.f32.mrf.mxu0
        %3000 = vmatprep.mubr.bf16.mxu0 %v2674
        %3001 = vmatmul.mubr.bf16.gmra.mxu0 %v2673
        %v3002 = vpop.f32.mrf.mxu0
        %v3003 = vadd.f32 0.0, %v3002
        %v3004 = vpop.f32.mrf.mxu0
        %v3005 = vpop.f32.mrf.mxu0
        %v3006 = vadd.f32 0.0, %v3005
        %v3007 = vpop.f32.mrf.mxu0
        %3008 = vmatprep.mubr.bf16.mxu0 %v2677
        %3009 = vmatmul.mubr.bf16.gmra.mxu0 %v2676
        %v3010 = vpop.f32.mrf.mxu0
        %v3011 = vadd.f32 0.0, %v3010
        %v3012 = vpop.f32.mrf.mxu0
        %v3013 = vpop.f32.mrf.mxu0
        %v3014 = vadd.f32 0.0, %v3013
        %v3015 = vpop.f32.mrf.mxu0
        %3016 = vmatprep.mubr.bf16.mxu0 %v2680
        %3017 = vmatmul.mubr.bf16.gmra.mxu0 %v2679
        %v3018 = vpop.f32.mrf.mxu0
        %v3019 = vadd.f32 0.0, %v3018
        %v3020 = vpop.f32.mrf.mxu0
        %v3021 = vpop.f32.mrf.mxu0
        %v3022 = vadd.f32 0.0, %v3021
        %v3023 = vpop.f32.mrf.mxu0
        %3024 = vmatprep.mubr.bf16.mxu0 %v2683
        %3025 = vmatmul.mubr.bf16.gmra.mxu0 %v2682
        %v3026 = vpop.f32.mrf.mxu0
        %v3027 = vadd.f32 0.0, %v3026
        %v3028 = vpop.f32.mrf.mxu0
        %v3029 = vpop.f32.mrf.mxu0
        %v3030 = vadd.f32 0.0, %v3029
        %v3031 = vpop.f32.mrf.mxu0
        %3032 = vmatprep.mubr.bf16.mxu0 %v2686
        %3033 = vmatmul.mubr.bf16.gmra.mxu0 %v2685
        %v3034 = vpop.f32.mrf.mxu0
        %v3035 = vadd.f32 0.0, %v3034
        %v3036 = vpop.f32.mrf.mxu0
        %v3037 = vpop.f32.mrf.mxu0
        %v3038 = vadd.f32 0.0, %v3037
        %v3039 = vpop.f32.mrf.mxu0
        %3040 = vdwg.mxu0
        %3041 = vmatprep.subr.bf16.mxu0 0
        %3042 = vmatpush1.bf16.msra.mxu0 %v2855
        %3043 = vmatprep.subr.bf16.mxu0 0
        %3044 = vmatpush1.bf16.msra.mxu0 %v2854
        %3045 = vmatprep.subr.bf16.mxu0 0
        %3046 = vmatpush1.bf16.msra.mxu0 %v2853
        %3047 = vmatprep.subr.bf16.mxu0 0
        %3048 = vmatpush1.bf16.msra.mxu0 %v2852
        %3049 = vmatprep.subr.bf16.mxu0 0
        %3050 = vmatpush1.bf16.msra.mxu0 %v2851
        %3051 = vmatprep.subr.bf16.mxu0 0
        %3052 = vmatpush1.bf16.msra.mxu0 %v2850
        %3053 = vmatprep.subr.bf16.mxu0 0
        %3054 = vmatpush1.bf16.msra.mxu0 %v2849
        %3055 = vmatprep.subr.bf16.mxu0 0
        %3056 = vmatpush1.bf16.msra.mxu0 %v2848
        %3057 = vmatprep.subr.bf16.mxu0 0
        %3058 = vmatpush2.bf16.msra.mxu0 0
        %3059 = vmatprep.subr.bf16.mxu0 0
        %3060 = vmatpush2.bf16.msra.mxu0 0
        %3061 = vmatprep.subr.bf16.mxu0 0
        %3062 = vmatpush2.bf16.msra.mxu0 0
        %3063 = vmatprep.subr.bf16.mxu0 0
        %3064 = vmatpush2.bf16.msra.mxu0 0
        %3065 = vmatprep.subr.bf16.mxu0 0
        %3066 = vmatpush2.bf16.msra.mxu0 0
        %3067 = vmatprep.subr.bf16.mxu0 0
        %3068 = vmatpush2.bf16.msra.mxu0 0
        %3069 = vmatprep.subr.bf16.mxu0 0
        %3070 = vmatpush2.bf16.msra.mxu0 0
        %3071 = vmatprep.subr.bf16.mxu0 0
        %3072 = vmatpush2.bf16.msra.mxu0 0
        %3073 = vmatprep.mubr.bf16.mxu0 0
        %3074 = vmatmul.mubr.bf16.gmra.mxu0 %v2642
        %v3075 = vpop.f32.mrf.mxu0
        %v3076 = vadd.f32 %v2915, %v3075
        %v3077 = vpop.f32.mrf.mxu0
        %v3078 = vpop.f32.mrf.mxu0
        %v3079 = vadd.f32 %v2918, %v3078
        %v3080 = vpop.f32.mrf.mxu0
        %3081 = vmatprep.mubr.bf16.mxu0 0
        %3082 = vmatmul.mubr.bf16.gmra.mxu0 %v2645
        %v3083 = vpop.f32.mrf.mxu0
        %v3084 = vadd.f32 %v2923, %v3083
        %v3085 = vpop.f32.mrf.mxu0
        %v3086 = vpop.f32.mrf.mxu0
        %v3087 = vadd.f32 %v2926, %v3086
        %v3088 = vpop.f32.mrf.mxu0
        %3089 = vmatprep.mubr.bf16.mxu0 0
        %3090 = vmatmul.mubr.bf16.gmra.mxu0 %v2648
        %v3091 = vpop.f32.mrf.mxu0
        %v3092 = vadd.f32 %v2931, %v3091
        %v3093 = vpop.f32.mrf.mxu0
        %v3094 = vpop.f32.mrf.mxu0
        %v3095 = vadd.f32 %v2934, %v3094
        %v3096 = vpop.f32.mrf.mxu0
        %3097 = vmatprep.mubr.bf16.mxu0 0
        %3098 = vmatmul.mubr.bf16.gmra.mxu0 %v2651
        %v3099 = vpop.f32.mrf.mxu0
        %v3100 = vadd.f32 %v2939, %v3099
        %v3101 = vpop.f32.mrf.mxu0
        %v3102 = vpop.f32.mrf.mxu0
        %v3103 = vadd.f32 %v2942, %v3102
        %v3104 = vpop.f32.mrf.mxu0
        %3105 = vmatprep.mubr.bf16.mxu0 0
        %3106 = vmatmul.mubr.bf16.gmra.mxu0 %v2654
        %v3107 = vpop.f32.mrf.mxu0
        %v3108 = vadd.f32 %v2947, %v3107
        %v3109 = vpop.f32.mrf.mxu0
        %v3110 = vpop.f32.mrf.mxu0
        %v3111 = vadd.f32 %v2950, %v3110
        %v3112 = vpop.f32.mrf.mxu0
        %3113 = vmatprep.mubr.bf16.mxu0 0
        %3114 = vmatmul.mubr.bf16.gmra.mxu0 %v2657
        %v3115 = vpop.f32.mrf.mxu0
        %v3116 = vadd.f32 %v2955, %v3115
        %v3117 = vpop.f32.mrf.mxu0
        %v3118 = vpop.f32.mrf.mxu0
        %v3119 = vadd.f32 %v2958, %v3118
        %v3120 = vpop.f32.mrf.mxu0
        %3121 = vmatprep.mubr.bf16.mxu0 0
        %3122 = vmatmul.mubr.bf16.gmra.mxu0 %v2660
        %v3123 = vpop.f32.mrf.mxu0
        %v3124 = vadd.f32 %v2963, %v3123
        %v3125 = vpop.f32.mrf.mxu0
        %v3126 = vpop.f32.mrf.mxu0
        %v3127 = vadd.f32 %v2966, %v3126
        %v3128 = vpop.f32.mrf.mxu0
        %3129 = vmatprep.mubr.bf16.mxu0 0
        %3130 = vmatmul.mubr.bf16.gmra.mxu0 %v2663
        %v3131 = vpop.f32.mrf.mxu0
        %v3132 = vadd.f32 %v2971, %v3131
        %v3133 = vpop.f32.mrf.mxu0
        %v3134 = vpop.f32.mrf.mxu0
        %v3135 = vadd.f32 %v2974, %v3134
        %v3136 = vpop.f32.mrf.mxu0
        %3137 = vmatprep.mubr.bf16.mxu0 0
        %3138 = vmatmul.mubr.bf16.gmra.mxu0 %v2666
        %v3139 = vpop.f32.mrf.mxu0
        %v3140 = vadd.f32 %v2979, %v3139
        %v3141 = vpop.f32.mrf.mxu0
        %v3142 = vpop.f32.mrf.mxu0
        %v3143 = vadd.f32 %v2982, %v3142
        %v3144 = vpop.f32.mrf.mxu0
        %3145 = vmatprep.mubr.bf16.mxu0 0
        %3146 = vmatmul.mubr.bf16.gmra.mxu0 %v2669
        %v3147 = vpop.f32.mrf.mxu0
        %v3148 = vadd.f32 %v2987, %v3147
        %v3149 = vpop.f32.mrf.mxu0
        %v3150 = vpop.f32.mrf.mxu0
        %v3151 = vadd.f32 %v2990, %v3150
        %v3152 = vpop.f32.mrf.mxu0
        %3153 = vmatprep.mubr.bf16.mxu0 0
        %3154 = vmatmul.mubr.bf16.gmra.mxu0 %v2672
        %v3155 = vpop.f32.mrf.mxu0
        %v3156 = vadd.f32 %v2995, %v3155
        %v3157 = vpop.f32.mrf.mxu0
        %v3158 = vpop.f32.mrf.mxu0
        %v3159 = vadd.f32 %v2998, %v3158
        %v3160 = vpop.f32.mrf.mxu0
        %3161 = vmatprep.mubr.bf16.mxu0 0
        %3162 = vmatmul.mubr.bf16.gmra.mxu0 %v2675
        %v3163 = vpop.f32.mrf.mxu0
        %v3164 = vadd.f32 %v3003, %v3163
        %v3165 = vpop.f32.mrf.mxu0
        %v3166 = vpop.f32.mrf.mxu0
        %v3167 = vadd.f32 %v3006, %v3166
        %v3168 = vpop.f32.mrf.mxu0
        %3169 = vmatprep.mubr.bf16.mxu0 0
        %3170 = vmatmul.mubr.bf16.gmra.mxu0 %v2678
        %v3171 = vpop.f32.mrf.mxu0
        %v3172 = vadd.f32 %v3011, %v3171
        %v3173 = vpop.f32.mrf.mxu0
        %v3174 = vpop.f32.mrf.mxu0
        %v3175 = vadd.f32 %v3014, %v3174
        %v3176 = vpop.f32.mrf.mxu0
        %3177 = vmatprep.mubr.bf16.mxu0 0
        %3178 = vmatmul.mubr.bf16.gmra.mxu0 %v2681
        %v3179 = vpop.f32.mrf.mxu0
        %v3180 = vadd.f32 %v3019, %v3179
        %v3181 = vpop.f32.mrf.mxu0
        %v3182 = vpop.f32.mrf.mxu0
        %v3183 = vadd.f32 %v3022, %v3182
        %v3184 = vpop.f32.mrf.mxu0
        %3185 = vmatprep.mubr.bf16.mxu0 0
        %3186 = vmatmul.mubr.bf16.gmra.mxu0 %v2684
        %v3187 = vpop.f32.mrf.mxu0
        %v3188 = vadd.f32 %v3027, %v3187
        %v3189 = vpop.f32.mrf.mxu0
        %v3190 = vpop.f32.mrf.mxu0
        %v3191 = vadd.f32 %v3030, %v3190
        %v3192 = vpop.f32.mrf.mxu0
        %3193 = vmatprep.mubr.bf16.mxu0 0
        %3194 = vmatmul.mubr.bf16.gmra.mxu0 %v2687
        %v3195 = vpop.f32.mrf.mxu0
        %v3196 = vadd.f32 %v3035, %v3195
        %v3197 = vpop.f32.mrf.mxu0
        %v3198 = vpop.f32.mrf.mxu0
        %v3199 = vadd.f32 %v3038, %v3198
        %v3200 = vpop.f32.mrf.mxu0
        %3201 = vdwg.mxu0
        %v3202 = vadd.f32 %v2241, %v3076
        %v3203 = vadd.f32 %v2244, %v3079
        %v3204 = vadd.f32 %v2249, %v3084
        %v3205 = vadd.f32 %v2252, %v3087
        %v3206 = vadd.f32 %v2257, %v3092
        %v3207 = vadd.f32 %v2260, %v3095
        %v3208 = vadd.f32 %v2265, %v3100
        %v3209 = vadd.f32 %v2268, %v3103
        %v3210 = vadd.f32 %v2273, %v3108
        %v3211 = vadd.f32 %v2276, %v3111
        %v3212 = vadd.f32 %v2281, %v3116
        %v3213 = vadd.f32 %v2284, %v3119
        %v3214 = vadd.f32 %v2289, %v3124
        %v3215 = vadd.f32 %v2292, %v3127
        %v3216 = vadd.f32 %v2297, %v3132
        %v3217 = vadd.f32 %v2300, %v3135
        %v3218 = vadd.f32 %v2305, %v3140
        %v3219 = vadd.f32 %v2308, %v3143
        %v3220 = vadd.f32 %v2313, %v3148
        %v3221 = vadd.f32 %v2316, %v3151
        %v3222 = vadd.f32 %v2321, %v3156
        %v3223 = vadd.f32 %v2324, %v3159
        %v3224 = vadd.f32 %v2329, %v3164
        %v3225 = vadd.f32 %v2332, %v3167
        %v3226 = vadd.f32 %v2337, %v3172
        %v3227 = vadd.f32 %v2340, %v3175
        %v3228 = vadd.f32 %v2345, %v3180
        %v3229 = vadd.f32 %v2348, %v3183
        %v3230 = vadd.f32 %v2353, %v3188
        %v3231 = vadd.f32 %v2356, %v3191
        %v3232 = vadd.f32 %v2361, %v3196
        %v3233 = vadd.f32 %v2364, %v3199
        %v3234 = vld [vmem:[%s2] sm:$0x1]
        %v3236 = vlaneseq
        %v3237 = vshrl.u32 %v3236, 7
        %v3238 = vsub.s32 0, %v3237
        %v3239 = vrot.slane %v3234, %v3238
        %v3241 = vmul.f32 %v3202, %v3239
        %v3242 = vmul.f32 %v3203, %v3239
        %v3243 = vmul.f32 %v3204, %v3239
        %v3244 = vmul.f32 %v3205, %v3239
        %v3245 = vmul.f32 %v3206, %v3239
        %v3246 = vmul.f32 %v3207, %v3239
        %v3247 = vmul.f32 %v3208, %v3239
        %v3248 = vmul.f32 %v3209, %v3239
        %v3249 = vmul.f32 %v3210, %v3239
        %v3250 = vmul.f32 %v3211, %v3239
        %v3251 = vmul.f32 %v3212, %v3239
        %v3252 = vmul.f32 %v3213, %v3239
        %v3253 = vmul.f32 %v3214, %v3239
        %v3254 = vmul.f32 %v3215, %v3239
        %v3255 = vmul.f32 %v3216, %v3239
        %v3256 = vmul.f32 %v3217, %v3239
        %v3257 = vmul.f32 %v3218, %v3239
        %v3258 = vmul.f32 %v3219, %v3239
        %v3259 = vmul.f32 %v3220, %v3239
        %v3260 = vmul.f32 %v3221, %v3239
        %v3261 = vmul.f32 %v3222, %v3239
        %v3262 = vmul.f32 %v3223, %v3239
        %v3263 = vmul.f32 %v3224, %v3239
        %v3264 = vmul.f32 %v3225, %v3239
        %v3265 = vmul.f32 %v3226, %v3239
        %v3266 = vmul.f32 %v3227, %v3239
        %v3267 = vmul.f32 %v3228, %v3239
        %v3268 = vmul.f32 %v3229, %v3239
        %v3269 = vmul.f32 %v3230, %v3239
        %v3270 = vmul.f32 %v3231, %v3239
        %v3271 = vmul.f32 %v3232, %v3239
        %v3272 = vmul.f32 %v3233, %v3239
        %v3273 = vld [vmem:[%s3] sm:$0x1]
        %v3275 = vlaneseq
        %v3276 = vshrl.u32 %v3275, 7
        %v3277 = vsub.s32 0, %v3276
        %v3278 = vrot.slane %v3273, %v3277
        %v3280 = vadd.f32 %v3241, %v3278
        %v3281 = vadd.f32 %v3242, %v3278
        %v3282 = vadd.f32 %v3243, %v3278
        %v3283 = vadd.f32 %v3244, %v3278
        %v3284 = vadd.f32 %v3245, %v3278
        %v3285 = vadd.f32 %v3246, %v3278
        %v3286 = vadd.f32 %v3247, %v3278
        %v3287 = vadd.f32 %v3248, %v3278
        %v3288 = vadd.f32 %v3249, %v3278
        %v3289 = vadd.f32 %v3250, %v3278
        %v3290 = vadd.f32 %v3251, %v3278
        %v3291 = vadd.f32 %v3252, %v3278
        %v3292 = vadd.f32 %v3253, %v3278
        %v3293 = vadd.f32 %v3254, %v3278
        %v3294 = vadd.f32 %v3255, %v3278
        %v3295 = vadd.f32 %v3256, %v3278
        %v3296 = vadd.f32 %v3257, %v3278
        %v3297 = vadd.f32 %v3258, %v3278
        %v3298 = vadd.f32 %v3259, %v3278
        %v3299 = vadd.f32 %v3260, %v3278
        %v3300 = vadd.f32 %v3261, %v3278
        %v3301 = vadd.f32 %v3262, %v3278
        %v3302 = vadd.f32 %v3263, %v3278
        %v3303 = vadd.f32 %v3264, %v3278
        %v3304 = vadd.f32 %v3265, %v3278
        %v3305 = vadd.f32 %v3266, %v3278
        %v3306 = vadd.f32 %v3267, %v3278
        %v3307 = vadd.f32 %v3268, %v3278
        %v3308 = vadd.f32 %v3269, %v3278
        %v3309 = vadd.f32 %v3270, %v3278
        %v3310 = vadd.f32 %v3271, %v3278
        %v3311 = vadd.f32 %v3272, %v3278
        %v3312 = vmax.f32 %v3280, 0.0
        %v3313 = vmax.f32 %v3281, 0.0
        %v3314 = vmax.f32 %v3282, 0.0
        %v3315 = vmax.f32 %v3283, 0.0
        %v3316 = vmax.f32 %v3284, 0.0
        %v3317 = vmax.f32 %v3285, 0.0
        %v3318 = vmax.f32 %v3286, 0.0
        %v3319 = vmax.f32 %v3287, 0.0
        %v3320 = vmax.f32 %v3288, 0.0
        %v3321 = vmax.f32 %v3289, 0.0
        %v3322 = vmax.f32 %v3290, 0.0
        %v3323 = vmax.f32 %v3291, 0.0
        %v3324 = vmax.f32 %v3292, 0.0
        %v3325 = vmax.f32 %v3293, 0.0
        %v3326 = vmax.f32 %v3294, 0.0
        %v3327 = vmax.f32 %v3295, 0.0
        %v3328 = vmax.f32 %v3296, 0.0
        %v3329 = vmax.f32 %v3297, 0.0
        %v3330 = vmax.f32 %v3298, 0.0
        %v3331 = vmax.f32 %v3299, 0.0
        %v3332 = vmax.f32 %v3300, 0.0
        %v3333 = vmax.f32 %v3301, 0.0
        %v3334 = vmax.f32 %v3302, 0.0
        %v3335 = vmax.f32 %v3303, 0.0
        %v3336 = vmax.f32 %v3304, 0.0
        %v3337 = vmax.f32 %v3305, 0.0
        %v3338 = vmax.f32 %v3306, 0.0
        %v3339 = vmax.f32 %v3307, 0.0
        %v3340 = vmax.f32 %v3308, 0.0
        %v3341 = vmax.f32 %v3309, 0.0
        %v3342 = vmax.f32 %v3310, 0.0
        %v3343 = vmax.f32 %v3311, 0.0
        %3344 = vst [vmem:[%s285 + $0x1] sm:$0xff] %v3312
        %3345 = vst [vmem:[%s285 + $0x9] sm:$0xff] %v3313
        %3346 = vst [vmem:[%s285 + $0x19] sm:$0xff] %v3314
        %3347 = vst [vmem:[%s285 + $0x21] sm:$0xff] %v3315
        %3348 = vst [vmem:[%s285 + $0x31] sm:$0xff] %v3316
        %3349 = vst [vmem:[%s285 + $0x39] sm:$0xff] %v3317
        %3350 = vst [vmem:[%s285 + $0x49] sm:$0xff] %v3318
        %3351 = vst [vmem:[%s285 + $0x51] sm:$0xff] %v3319
        %3352 = vst [vmem:[%s285 + $0x61] sm:$0xff] %v3320
        %3353 = vst [vmem:[%s285 + $0x69] sm:$0xff] %v3321
        %3354 = vst [vmem:[%s285 + $0x79] sm:$0xff] %v3322
        %3355 = vst [vmem:[%s285 + $0x81] sm:$0xff] %v3323
        %3356 = vst [vmem:[%s285 + $0x91] sm:$0xff] %v3324
        %3357 = vst [vmem:[%s285 + $0x99] sm:$0xff] %v3325
        %3358 = vst [vmem:[%s285 + $0xa9] sm:$0xff] %v3326
        %3359 = vst [vmem:[%s285 + $0xb1] sm:$0xff] %v3327
        %3360 = vst [vmem:[%s285 + $0xc1] sm:$0xff] %v3328
        %3361 = vst [vmem:[%s285 + $0xc9] sm:$0xff] %v3329
        %3362 = vst [vmem:[%s285 + $0xd9] sm:$0xff] %v3330
        %3363 = vst [vmem:[%s285 + $0xe1] sm:$0xff] %v3331
        %3364 = vst [vmem:[%s285 + $0xf1] sm:$0xff] %v3332
        %3365 = vst [vmem:[%s285 + $0xf9] sm:$0xff] %v3333
        %3366 = vst [vmem:[%s285 + $0x109] sm:$0xff] %v3334
        %3367 = vst [vmem:[%s285 + $0x111] sm:$0xff] %v3335
        %3368 = vst [vmem:[%s285 + $0x121] sm:$0xff] %v3336
        %3369 = vst [vmem:[%s285 + $0x129] sm:$0xff] %v3337
        %3370 = vst [vmem:[%s285 + $0x139] sm:$0xff] %v3338
        %3371 = vst [vmem:[%s285 + $0x141] sm:$0xff] %v3339
        %3372 = vst [vmem:[%s285 + $0x151] sm:$0xff] %v3340
        %3373 = vst [vmem:[%s285 + $0x159] sm:$0xff] %v3341
        %3374 = vst [vmem:[%s285 + $0x169] sm:$0xff] %v3342
        %3375 = vst [vmem:[%s285 + $0x171] sm:$0xff] %v3343
        %v3376 = vld [vmem:[#allocation3] sm:$0xff]
        %v3377 = vld [vmem:[#allocation3 + $0x8] sm:$0xff]
        %v3378 = vld [vmem:[#allocation3 + $0x18] sm:$0xff]
        %v3379 = vld [vmem:[#allocation3 + $0x20] sm:$0xff]
        %v3380 = vld [vmem:[#allocation3 + $0x30] sm:$0xff]
        %v3381 = vld [vmem:[#allocation3 + $0x38] sm:$0xff]
        %v3382 = vld [vmem:[#allocation3 + $0x48] sm:$0xff]
        %v3383 = vld [vmem:[#allocation3 + $0x50] sm:$0xff]
        %v3384 = vld [vmem:[#allocation3 + $0x60] sm:$0xff]
        %v3385 = vld [vmem:[#allocation3 + $0x68] sm:$0xff]
        %v3386 = vld [vmem:[#allocation3 + $0x78] sm:$0xff]
        %v3387 = vld [vmem:[#allocation3 + $0x80] sm:$0xff]
        %v3388 = vld [vmem:[#allocation3 + $0x90] sm:$0xff]
        %v3389 = vld [vmem:[#allocation3 + $0x98] sm:$0xff]
        %v3390 = vld [vmem:[#allocation3 + $0xa8] sm:$0xff]
        %v3391 = vld [vmem:[#allocation3 + $0xb0] sm:$0xff]
        %v3392 = vld [vmem:[#allocation3 + $0xc0] sm:$0xff]
        %v3393 = vld [vmem:[#allocation3 + $0xc8] sm:$0xff]
        %v3394 = vld [vmem:[#allocation3 + $0xd8] sm:$0xff]
        %v3395 = vld [vmem:[#allocation3 + $0xe0] sm:$0xff]
        %v3396 = vld [vmem:[#allocation3 + $0xf0] sm:$0xff]
        %v3397 = vld [vmem:[#allocation3 + $0xf8] sm:$0xff]
        %v3398 = vld [vmem:[#allocation3 + $0x108] sm:$0xff]
        %v3399 = vld [vmem:[#allocation3 + $0x110] sm:$0xff]
        %v3400 = vld [vmem:[#allocation3 + $0x120] sm:$0xff]
        %v3401 = vld [vmem:[#allocation3 + $0x128] sm:$0xff]
        %v3402 = vld [vmem:[#allocation3 + $0x138] sm:$0xff]
        %v3403 = vld [vmem:[#allocation3 + $0x140] sm:$0xff]
        %v3404 = vld [vmem:[#allocation3 + $0x150] sm:$0xff]
        %v3405 = vld [vmem:[#allocation3 + $0x158] sm:$0xff]
        %v3406 = vld [vmem:[#allocation3 + $0x168] sm:$0xff]
        %v3407 = vld [vmem:[#allocation3 + $0x170] sm:$0xff]
        %v3408 = vld [vmem:[#allocation3 + $0x180] sm:$0xff]
        %v3409 = vld [vmem:[#allocation3 + $0x188] sm:$0xff]
        %v3410 = vld [vmem:[#allocation3 + $0x198] sm:$0xff]
        %v3411 = vld [vmem:[#allocation3 + $0x1a0] sm:$0xff]
        %v3412 = vpack.c.bf16 %v3377, %v3376
        %v3413 = vpack.c.bf16 %v3379, %v3378
        %v3414 = vpack.c.bf16 %v3381, %v3380
        %v3415 = vpack.c.bf16 %v3383, %v3382
        %v3416 = vpack.c.bf16 %v3385, %v3384
        %v3417 = vpack.c.bf16 %v3387, %v3386
        %v3418 = vpack.c.bf16 %v3389, %v3388
        %v3419 = vpack.c.bf16 %v3391, %v3390
        %v3420 = vpack.c.bf16 %v3393, %v3392
        %v3421 = vpack.c.bf16 %v3395, %v3394
        %v3422 = vpack.c.bf16 %v3397, %v3396
        %v3423 = vpack.c.bf16 %v3399, %v3398
        %v3424 = vpack.c.bf16 %v3401, %v3400
        %v3425 = vpack.c.bf16 %v3403, %v3402
        %v3426 = vpack.c.bf16 %v3405, %v3404
        %v3427 = vpack.c.bf16 %v3407, %v3406
        %v3428 = vpack.c.bf16 %v3409, %v3408
        %v3429 = vpack.c.bf16 %v3411, %v3410
        %v3448 = vunpack.c.l.b16 %v3412
        %v3449 = vunpack.c.h.b16 %v3412
        %v3450 = vunpack.c.l.b16 %v3413
        %v3451 = vunpack.c.h.b16 %v3413
        %v3452 = vunpack.c.l.b16 %v3414
        %v3453 = vunpack.c.h.b16 %v3414
        %v3454 = vunpack.c.l.b16 %v3415
        %v3455 = vunpack.c.h.b16 %v3415
        %v3456 = vunpack.c.l.b16 %v3416
        %v3457 = vunpack.c.h.b16 %v3416
        %v3458 = vunpack.c.l.b16 %v3417
        %v3459 = vunpack.c.h.b16 %v3417
        %v3460 = vunpack.c.l.b16 %v3418
        %v3461 = vunpack.c.h.b16 %v3418
        %v3462 = vunpack.c.l.b16 %v3419
        %v3463 = vunpack.c.h.b16 %v3419
        %v3464 = vunpack.c.l.b16 %v3420
        %v3465 = vunpack.c.h.b16 %v3420
        %v3466 = vunpack.c.l.b16 %v3421
        %v3467 = vunpack.c.h.b16 %v3421
        %v3468 = vunpack.c.l.b16 %v3422
        %v3469 = vunpack.c.h.b16 %v3422
        %v3470 = vunpack.c.l.b16 %v3423
        %v3471 = vunpack.c.h.b16 %v3423
        %v3472 = vunpack.c.l.b16 %v3424
        %v3473 = vunpack.c.h.b16 %v3424
        %v3474 = vunpack.c.l.b16 %v3425
        %v3475 = vunpack.c.h.b16 %v3425
        %v3476 = vunpack.c.l.b16 %v3426
        %v3477 = vunpack.c.h.b16 %v3426
        %v3478 = vunpack.c.l.b16 %v3427
        %v3479 = vunpack.c.h.b16 %v3427
        %v3480 = vunpack.c.l.b16 %v3428
        %v3481 = vunpack.c.h.b16 %v3428
        %v3482 = vunpack.c.l.b16 %v3429
        %v3483 = vunpack.c.h.b16 %v3429
        %v3484 = vpack.c.b16 %v3448, %v3448
        %v3485 = vpack.c.b16 %v3449, %v3449
        %v3486 = vpack.c.b16 %v3450, %v3450
        %v3487 = vpack.c.b16 %v3451, %v3451
        %v3488 = vpack.c.b16 %v3452, %v3452
        %v3489 = vpack.c.b16 %v3453, %v3453
        %v3490 = vpack.c.b16 %v3454, %v3454
        %v3491 = vpack.c.b16 %v3455, %v3455
        %v3492 = vpack.c.b16 %v3456, %v3456
        %v3493 = vpack.c.b16 %v3457, %v3457
        %v3494 = vpack.c.b16 %v3458, %v3458
        %v3495 = vpack.c.b16 %v3459, %v3459
        %v3496 = vpack.c.b16 %v3460, %v3460
        %v3497 = vpack.c.b16 %v3461, %v3461
        %v3498 = vpack.c.b16 %v3462, %v3462
        %v3499 = vpack.c.b16 %v3463, %v3463
        %v3500 = vpack.c.b16 %v3464, %v3464
        %v3501 = vpack.c.b16 %v3465, %v3465
        %v3502 = vpack.c.b16 %v3466, %v3466
        %v3503 = vpack.c.b16 %v3467, %v3467
        %v3504 = vpack.c.b16 %v3468, %v3468
        %v3505 = vpack.c.b16 %v3469, %v3469
        %v3506 = vpack.c.b16 %v3470, %v3470
        %v3507 = vpack.c.b16 %v3471, %v3471
        %v3508 = vpack.c.b16 %v3472, %v3472
        %v3509 = vpack.c.b16 %v3473, %v3473
        %v3510 = vpack.c.b16 %v3474, %v3474
        %v3511 = vpack.c.b16 %v3475, %v3475
        %v3512 = vpack.c.b16 %v3476, %v3476
        %v3513 = vpack.c.b16 %v3477, %v3477
        %v3514 = vpack.c.b16 %v3478, %v3478
        %v3515 = vpack.c.b16 %v3479, %v3479
        %v3516 = vpack.c.b16 %v3480, %v3480
        %v3517 = vpack.c.b16 %v3481, %v3481
        %v3518 = vpack.c.b16 %v3482, %v3482
        %v3519 = vpack.c.b16 %v3483, %v3483
        %3556 = vst [vmem:[#allocation2] sm:$0xf] %v3484
        %3557 = vst [vmem:[#allocation2 + $0xc] sm:$0xf] %v3485
        %3558 = vst [vmem:[#allocation2 + $0x18] sm:$0xf] %v3486
        %3559 = vst [vmem:[#allocation2 + $0x24] sm:$0xf] %v3487
        %3560 = vst [vmem:[#allocation2 + $0x30] sm:$0xf] %v3488
        %3561 = vst [vmem:[#allocation2 + $0x3c] sm:$0xf] %v3489
        %3562 = vst [vmem:[#allocation2 + $0x48] sm:$0xf] %v3490
        %3563 = vst [vmem:[#allocation2 + $0x54] sm:$0xf] %v3491
        %3564 = vst [vmem:[#allocation2 + $0x60] sm:$0xf] %v3492
        %3565 = vst [vmem:[#allocation2 + $0x6c] sm:$0xf] %v3493
        %3566 = vst [vmem:[#allocation2 + $0x78] sm:$0xf] %v3494
        %3567 = vst [vmem:[#allocation2 + $0x84] sm:$0xf] %v3495
        %3568 = vst [vmem:[#allocation2 + $0x90] sm:$0xf] %v3496
        %3569 = vst [vmem:[#allocation2 + $0x9c] sm:$0xf] %v3497
        %3570 = vst [vmem:[#allocation2 + $0xa8] sm:$0xf] %v3498
        %3571 = vst [vmem:[#allocation2 + $0xb4] sm:$0xf] %v3499
        %3572 = vst [vmem:[#allocation2 + $0xc0] sm:$0xf] %v3500
        %3573 = vst [vmem:[#allocation2 + $0xcc] sm:$0xf] %v3501
        %3574 = vst [vmem:[#allocation2 + $0xd8] sm:$0xf] %v3502
        %3575 = vst [vmem:[#allocation2 + $0xe4] sm:$0xf] %v3503
        %3576 = vst [vmem:[#allocation2 + $0xf0] sm:$0xf] %v3504
        %3577 = vst [vmem:[#allocation2 + $0xfc] sm:$0xf] %v3505
        %3578 = vst [vmem:[#allocation2 + $0x108] sm:$0xf] %v3506
        %3579 = vst [vmem:[#allocation2 + $0x114] sm:$0xf] %v3507
        %3580 = vst [vmem:[#allocation2 + $0x120] sm:$0xf] %v3508
        %3581 = vst [vmem:[#allocation2 + $0x12c] sm:$0xf] %v3509
        %3582 = vst [vmem:[#allocation2 + $0x138] sm:$0xf] %v3510
        %3583 = vst [vmem:[#allocation2 + $0x144] sm:$0xf] %v3511
        %3584 = vst [vmem:[#allocation2 + $0x150] sm:$0xf] %v3512
        %3585 = vst [vmem:[#allocation2 + $0x15c] sm:$0xf] %v3513
        %3586 = vst [vmem:[#allocation2 + $0x168] sm:$0xf] %v3514
        %3587 = vst [vmem:[#allocation2 + $0x174] sm:$0xf] %v3515
        %3588 = vst [vmem:[#allocation2 + $0x180] sm:$0xf] %v3516
        %3589 = vst [vmem:[#allocation2 + $0x18c] sm:$0xf] %v3517
        %3590 = vst [vmem:[#allocation2 + $0x198] sm:$0xf] %v3518
        %3591 = vst [vmem:[#allocation2 + $0x1a4] sm:$0xf] %v3519
        %v3592 = vld [vmem:[#allocation3 + $0x1] sm:$0xff]
        %v3593 = vld [vmem:[#allocation3 + $0x9] sm:$0xff]
        %v3594 = vld [vmem:[#allocation3 + $0x19] sm:$0xff]
        %v3595 = vld [vmem:[#allocation3 + $0x21] sm:$0xff]
        %v3596 = vld [vmem:[#allocation3 + $0x31] sm:$0xff]
        %v3597 = vld [vmem:[#allocation3 + $0x39] sm:$0xff]
        %v3598 = vld [vmem:[#allocation3 + $0x49] sm:$0xff]
        %v3599 = vld [vmem:[#allocation3 + $0x51] sm:$0xff]
        %v3600 = vld [vmem:[#allocation3 + $0x61] sm:$0xff]
        %v3601 = vld [vmem:[#allocation3 + $0x69] sm:$0xff]
        %v3602 = vld [vmem:[#allocation3 + $0x79] sm:$0xff]
        %v3603 = vld [vmem:[#allocation3 + $0x81] sm:$0xff]
        %v3604 = vld [vmem:[#allocation3 + $0x91] sm:$0xff]
        %v3605 = vld [vmem:[#allocation3 + $0x99] sm:$0xff]
        %v3606 = vld [vmem:[#allocation3 + $0xa9] sm:$0xff]
        %v3607 = vld [vmem:[#allocation3 + $0xb1] sm:$0xff]
        %v3608 = vld [vmem:[#allocation3 + $0xc1] sm:$0xff]
        %v3609 = vld [vmem:[#allocation3 + $0xc9] sm:$0xff]
        %v3610 = vld [vmem:[#allocation3 + $0xd9] sm:$0xff]
        %v3611 = vld [vmem:[#allocation3 + $0xe1] sm:$0xff]
        %v3612 = vld [vmem:[#allocation3 + $0xf1] sm:$0xff]
        %v3613 = vld [vmem:[#allocation3 + $0xf9] sm:$0xff]
        %v3614 = vld [vmem:[#allocation3 + $0x109] sm:$0xff]
        %v3615 = vld [vmem:[#allocation3 + $0x111] sm:$0xff]
        %v3616 = vld [vmem:[#allocation3 + $0x121] sm:$0xff]
        %v3617 = vld [vmem:[#allocation3 + $0x129] sm:$0xff]
        %v3618 = vld [vmem:[#allocation3 + $0x139] sm:$0xff]
        %v3619 = vld [vmem:[#allocation3 + $0x141] sm:$0xff]
        %v3620 = vld [vmem:[#allocation3 + $0x151] sm:$0xff]
        %v3621 = vld [vmem:[#allocation3 + $0x159] sm:$0xff]
        %v3622 = vld [vmem:[#allocation3 + $0x169] sm:$0xff]
        %v3623 = vld [vmem:[#allocation3 + $0x171] sm:$0xff]
        %v3624 = vld [vmem:[#allocation3 + $0x181] sm:$0xff]
        %v3625 = vld [vmem:[#allocation3 + $0x189] sm:$0xff]
        %v3626 = vld [vmem:[#allocation3 + $0x199] sm:$0xff]
        %v3627 = vld [vmem:[#allocation3 + $0x1a1] sm:$0xff]
        %v3628 = vpack.c.bf16 %v3593, %v3592
        %v3629 = vpack.c.bf16 %v3595, %v3594
        %v3630 = vpack.c.bf16 %v3597, %v3596
        %v3631 = vpack.c.bf16 %v3599, %v3598
        %v3632 = vpack.c.bf16 %v3601, %v3600
        %v3633 = vpack.c.bf16 %v3603, %v3602
        %v3634 = vpack.c.bf16 %v3605, %v3604
        %v3635 = vpack.c.bf16 %v3607, %v3606
        %v3636 = vpack.c.bf16 %v3609, %v3608
        %v3637 = vpack.c.bf16 %v3611, %v3610
        %v3638 = vpack.c.bf16 %v3613, %v3612
        %v3639 = vpack.c.bf16 %v3615, %v3614
        %v3640 = vpack.c.bf16 %v3617, %v3616
        %v3641 = vpack.c.bf16 %v3619, %v3618
        %v3642 = vpack.c.bf16 %v3621, %v3620
        %v3643 = vpack.c.bf16 %v3623, %v3622
        %v3644 = vpack.c.bf16 %v3625, %v3624
        %v3645 = vpack.c.bf16 %v3627, %v3626
        %v3664 = vunpack.c.l.b16 %v3628
        %v3665 = vunpack.c.h.b16 %v3628
        %v3666 = vunpack.c.l.b16 %v3629
        %v3667 = vunpack.c.h.b16 %v3629
        %v3668 = vunpack.c.l.b16 %v3630
        %v3669 = vunpack.c.h.b16 %v3630
        %v3670 = vunpack.c.l.b16 %v3631
        %v3671 = vunpack.c.h.b16 %v3631
        %v3672 = vunpack.c.l.b16 %v3632
        %v3673 = vunpack.c.h.b16 %v3632
        %v3674 = vunpack.c.l.b16 %v3633
        %v3675 = vunpack.c.h.b16 %v3633
        %v3676 = vunpack.c.l.b16 %v3634
        %v3677 = vunpack.c.h.b16 %v3634
        %v3678 = vunpack.c.l.b16 %v3635
        %v3679 = vunpack.c.h.b16 %v3635
        %v3680 = vunpack.c.l.b16 %v3636
        %v3681 = vunpack.c.h.b16 %v3636
        %v3682 = vunpack.c.l.b16 %v3637
        %v3683 = vunpack.c.h.b16 %v3637
        %v3684 = vunpack.c.l.b16 %v3638
        %v3685 = vunpack.c.h.b16 %v3638
        %v3686 = vunpack.c.l.b16 %v3639
        %v3687 = vunpack.c.h.b16 %v3639
        %v3688 = vunpack.c.l.b16 %v3640
        %v3689 = vunpack.c.h.b16 %v3640
        %v3690 = vunpack.c.l.b16 %v3641
        %v3691 = vunpack.c.h.b16 %v3641
        %v3692 = vunpack.c.l.b16 %v3642
        %v3693 = vunpack.c.h.b16 %v3642
        %v3694 = vunpack.c.l.b16 %v3643
        %v3695 = vunpack.c.h.b16 %v3643
        %v3696 = vunpack.c.l.b16 %v3644
        %v3697 = vunpack.c.h.b16 %v3644
        %v3698 = vunpack.c.l.b16 %v3645
        %v3699 = vunpack.c.h.b16 %v3645
        %v3700 = vpack.c.b16 %v3664, %v3664
        %v3701 = vpack.c.b16 %v3665, %v3665
        %v3702 = vpack.c.b16 %v3666, %v3666
        %v3703 = vpack.c.b16 %v3667, %v3667
        %v3704 = vpack.c.b16 %v3668, %v3668
        %v3705 = vpack.c.b16 %v3669, %v3669
        %v3706 = vpack.c.b16 %v3670, %v3670
        %v3707 = vpack.c.b16 %v3671, %v3671
        %v3708 = vpack.c.b16 %v3672, %v3672
        %v3709 = vpack.c.b16 %v3673, %v3673
        %v3710 = vpack.c.b16 %v3674, %v3674
        %v3711 = vpack.c.b16 %v3675, %v3675
        %v3712 = vpack.c.b16 %v3676, %v3676
        %v3713 = vpack.c.b16 %v3677, %v3677
        %v3714 = vpack.c.b16 %v3678, %v3678
        %v3715 = vpack.c.b16 %v3679, %v3679
        %v3716 = vpack.c.b16 %v3680, %v3680
        %v3717 = vpack.c.b16 %v3681, %v3681
        %v3718 = vpack.c.b16 %v3682, %v3682
        %v3719 = vpack.c.b16 %v3683, %v3683
        %v3720 = vpack.c.b16 %v3684, %v3684
        %v3721 = vpack.c.b16 %v3685, %v3685
        %v3722 = vpack.c.b16 %v3686, %v3686
        %v3723 = vpack.c.b16 %v3687, %v3687
        %v3724 = vpack.c.b16 %v3688, %v3688
        %v3725 = vpack.c.b16 %v3689, %v3689
        %v3726 = vpack.c.b16 %v3690, %v3690
        %v3727 = vpack.c.b16 %v3691, %v3691
        %v3728 = vpack.c.b16 %v3692, %v3692
        %v3729 = vpack.c.b16 %v3693, %v3693
        %v3730 = vpack.c.b16 %v3694, %v3694
        %v3731 = vpack.c.b16 %v3695, %v3695
        %v3732 = vpack.c.b16 %v3696, %v3696
        %v3733 = vpack.c.b16 %v3697, %v3697
        %v3734 = vpack.c.b16 %v3698, %v3698
        %v3735 = vpack.c.b16 %v3699, %v3699
        %3772 = vst [vmem:[#allocation2 + $0x4] sm:$0xf] %v3700
        %3773 = vst [vmem:[#allocation2 + $0x10] sm:$0xf] %v3701
        %3774 = vst [vmem:[#allocation2 + $0x1c] sm:$0xf] %v3702
        %3775 = vst [vmem:[#allocation2 + $0x28] sm:$0xf] %v3703
        %3776 = vst [vmem:[#allocation2 + $0x34] sm:$0xf] %v3704
        %3777 = vst [vmem:[#allocation2 + $0x40] sm:$0xf] %v3705
        %3778 = vst [vmem:[#allocation2 + $0x4c] sm:$0xf] %v3706
        %3779 = vst [vmem:[#allocation2 + $0x58] sm:$0xf] %v3707
        %3780 = vst [vmem:[#allocation2 + $0x64] sm:$0xf] %v3708
        %3781 = vst [vmem:[#allocation2 + $0x70] sm:$0xf] %v3709
        %3782 = vst [vmem:[#allocation2 + $0x7c] sm:$0xf] %v3710
        %3783 = vst [vmem:[#allocation2 + $0x88] sm:$0xf] %v3711
        %3784 = vst [vmem:[#allocation2 + $0x94] sm:$0xf] %v3712
        %3785 = vst [vmem:[#allocation2 + $0xa0] sm:$0xf] %v3713
        %3786 = vst [vmem:[#allocation2 + $0xac] sm:$0xf] %v3714
        %3787 = vst [vmem:[#allocation2 + $0xb8] sm:$0xf] %v3715
        %3788 = vst [vmem:[#allocation2 + $0xc4] sm:$0xf] %v3716
        %3789 = vst [vmem:[#allocation2 + $0xd0] sm:$0xf] %v3717
        %3790 = vst [vmem:[#allocation2 + $0xdc] sm:$0xf] %v3718
        %3791 = vst [vmem:[#allocation2 + $0xe8] sm:$0xf] %v3719
        %3792 = vst [vmem:[#allocation2 + $0xf4] sm:$0xf] %v3720
        %3793 = vst [vmem:[#allocation2 + $0x100] sm:$0xf] %v3721
        %3794 = vst [vmem:[#allocation2 + $0x10c] sm:$0xf] %v3722
        %3795 = vst [vmem:[#allocation2 + $0x118] sm:$0xf] %v3723
        %3796 = vst [vmem:[#allocation2 + $0x124] sm:$0xf] %v3724
        %3797 = vst [vmem:[#allocation2 + $0x130] sm:$0xf] %v3725
        %3798 = vst [vmem:[#allocation2 + $0x13c] sm:$0xf] %v3726
        %3799 = vst [vmem:[#allocation2 + $0x148] sm:$0xf] %v3727
        %3800 = vst [vmem:[#allocation2 + $0x154] sm:$0xf] %v3728
        %3801 = vst [vmem:[#allocation2 + $0x160] sm:$0xf] %v3729
        %3802 = vst [vmem:[#allocation2 + $0x16c] sm:$0xf] %v3730
        %3803 = vst [vmem:[#allocation2 + $0x178] sm:$0xf] %v3731
        %3804 = vst [vmem:[#allocation2 + $0x184] sm:$0xf] %v3732
        %3805 = vst [vmem:[#allocation2 + $0x190] sm:$0xf] %v3733
        %3806 = vst [vmem:[#allocation2 + $0x19c] sm:$0xf] %v3734
        %3807 = vst [vmem:[#allocation2 + $0x1a8] sm:$0xf] %v3735
        %v3808 = vld [vmem:[#allocation3 + $0x2] sm:$0xff]
        %v3809 = vld [vmem:[#allocation3 + $0xa] sm:$0xff]
        %v3810 = vld [vmem:[#allocation3 + $0x1a] sm:$0xff]
        %v3811 = vld [vmem:[#allocation3 + $0x22] sm:$0xff]
        %v3812 = vld [vmem:[#allocation3 + $0x32] sm:$0xff]
        %v3813 = vld [vmem:[#allocation3 + $0x3a] sm:$0xff]
        %v3814 = vld [vmem:[#allocation3 + $0x4a] sm:$0xff]
        %v3815 = vld [vmem:[#allocation3 + $0x52] sm:$0xff]
        %v3816 = vld [vmem:[#allocation3 + $0x62] sm:$0xff]
        %v3817 = vld [vmem:[#allocation3 + $0x6a] sm:$0xff]
        %v3818 = vld [vmem:[#allocation3 + $0x7a] sm:$0xff]
        %v3819 = vld [vmem:[#allocation3 + $0x82] sm:$0xff]
        %v3820 = vld [vmem:[#allocation3 + $0x92] sm:$0xff]
        %v3821 = vld [vmem:[#allocation3 + $0x9a] sm:$0xff]
        %v3822 = vld [vmem:[#allocation3 + $0xaa] sm:$0xff]
        %v3823 = vld [vmem:[#allocation3 + $0xb2] sm:$0xff]
        %v3824 = vld [vmem:[#allocation3 + $0xc2] sm:$0xff]
        %v3825 = vld [vmem:[#allocation3 + $0xca] sm:$0xff]
        %v3826 = vld [vmem:[#allocation3 + $0xda] sm:$0xff]
        %v3827 = vld [vmem:[#allocation3 + $0xe2] sm:$0xff]
        %v3828 = vld [vmem:[#allocation3 + $0xf2] sm:$0xff]
        %v3829 = vld [vmem:[#allocation3 + $0xfa] sm:$0xff]
        %v3830 = vld [vmem:[#allocation3 + $0x10a] sm:$0xff]
        %v3831 = vld [vmem:[#allocation3 + $0x112] sm:$0xff]
        %v3832 = vld [vmem:[#allocation3 + $0x122] sm:$0xff]
        %v3833 = vld [vmem:[#allocation3 + $0x12a] sm:$0xff]
        %v3834 = vld [vmem:[#allocation3 + $0x13a] sm:$0xff]
        %v3835 = vld [vmem:[#allocation3 + $0x142] sm:$0xff]
        %v3836 = vld [vmem:[#allocation3 + $0x152] sm:$0xff]
        %v3837 = vld [vmem:[#allocation3 + $0x15a] sm:$0xff]
        %v3838 = vld [vmem:[#allocation3 + $0x16a] sm:$0xff]
        %v3839 = vld [vmem:[#allocation3 + $0x172] sm:$0xff]
        %v3840 = vld [vmem:[#allocation3 + $0x182] sm:$0xff]
        %v3841 = vld [vmem:[#allocation3 + $0x18a] sm:$0xff]
        %v3842 = vld [vmem:[#allocation3 + $0x19a] sm:$0xff]
        %v3843 = vld [vmem:[#allocation3 + $0x1a2] sm:$0xff]
        %v3844 = vpack.c.bf16 %v3809, %v3808
        %v3845 = vpack.c.bf16 %v3811, %v3810
        %v3846 = vpack.c.bf16 %v3813, %v3812
        %v3847 = vpack.c.bf16 %v3815, %v3814
        %v3848 = vpack.c.bf16 %v3817, %v3816
        %v3849 = vpack.c.bf16 %v3819, %v3818
        %v3850 = vpack.c.bf16 %v3821, %v3820
        %v3851 = vpack.c.bf16 %v3823, %v3822
        %v3852 = vpack.c.bf16 %v3825, %v3824
        %v3853 = vpack.c.bf16 %v3827, %v3826
        %v3854 = vpack.c.bf16 %v3829, %v3828
        %v3855 = vpack.c.bf16 %v3831, %v3830
        %v3856 = vpack.c.bf16 %v3833, %v3832
        %v3857 = vpack.c.bf16 %v3835, %v3834
        %v3858 = vpack.c.bf16 %v3837, %v3836
        %v3859 = vpack.c.bf16 %v3839, %v3838
        %v3860 = vpack.c.bf16 %v3841, %v3840
        %v3861 = vpack.c.bf16 %v3843, %v3842
        %v3880 = vunpack.c.l.b16 %v3844
        %v3881 = vunpack.c.h.b16 %v3844
        %v3882 = vunpack.c.l.b16 %v3845
        %v3883 = vunpack.c.h.b16 %v3845
        %v3884 = vunpack.c.l.b16 %v3846
        %v3885 = vunpack.c.h.b16 %v3846
        %v3886 = vunpack.c.l.b16 %v3847
        %v3887 = vunpack.c.h.b16 %v3847
        %v3888 = vunpack.c.l.b16 %v3848
        %v3889 = vunpack.c.h.b16 %v3848
        %v3890 = vunpack.c.l.b16 %v3849
        %v3891 = vunpack.c.h.b16 %v3849
        %v3892 = vunpack.c.l.b16 %v3850
        %v3893 = vunpack.c.h.b16 %v3850
        %v3894 = vunpack.c.l.b16 %v3851
        %v3895 = vunpack.c.h.b16 %v3851
        %v3896 = vunpack.c.l.b16 %v3852
        %v3897 = vunpack.c.h.b16 %v3852
        %v3898 = vunpack.c.l.b16 %v3853
        %v3899 = vunpack.c.h.b16 %v3853
        %v3900 = vunpack.c.l.b16 %v3854
        %v3901 = vunpack.c.h.b16 %v3854
        %v3902 = vunpack.c.l.b16 %v3855
        %v3903 = vunpack.c.h.b16 %v3855
        %v3904 = vunpack.c.l.b16 %v3856
        %v3905 = vunpack.c.h.b16 %v3856
        %v3906 = vunpack.c.l.b16 %v3857
        %v3907 = vunpack.c.h.b16 %v3857
        %v3908 = vunpack.c.l.b16 %v3858
        %v3909 = vunpack.c.h.b16 %v3858
        %v3910 = vunpack.c.l.b16 %v3859
        %v3911 = vunpack.c.h.b16 %v3859
        %v3912 = vunpack.c.l.b16 %v3860
        %v3913 = vunpack.c.h.b16 %v3860
        %v3914 = vunpack.c.l.b16 %v3861
        %v3915 = vunpack.c.h.b16 %v3861
        %v3916 = vpack.c.b16 %v3880, %v3880
        %v3917 = vpack.c.b16 %v3881, %v3881
        %v3918 = vpack.c.b16 %v3882, %v3882
        %v3919 = vpack.c.b16 %v3883, %v3883
        %v3920 = vpack.c.b16 %v3884, %v3884
        %v3921 = vpack.c.b16 %v3885, %v3885
        %v3922 = vpack.c.b16 %v3886, %v3886
        %v3923 = vpack.c.b16 %v3887, %v3887
        %v3924 = vpack.c.b16 %v3888, %v3888
        %v3925 = vpack.c.b16 %v3889, %v3889
        %v3926 = vpack.c.b16 %v3890, %v3890
        %v3927 = vpack.c.b16 %v3891, %v3891
        %v3928 = vpack.c.b16 %v3892, %v3892
        %v3929 = vpack.c.b16 %v3893, %v3893
        %v3930 = vpack.c.b16 %v3894, %v3894
        %v3931 = vpack.c.b16 %v3895, %v3895
        %v3932 = vpack.c.b16 %v3896, %v3896
        %v3933 = vpack.c.b16 %v3897, %v3897
        %v3934 = vpack.c.b16 %v3898, %v3898
        %v3935 = vpack.c.b16 %v3899, %v3899
        %v3936 = vpack.c.b16 %v3900, %v3900
        %v3937 = vpack.c.b16 %v3901, %v3901
        %v3938 = vpack.c.b16 %v3902, %v3902
        %v3939 = vpack.c.b16 %v3903, %v3903
        %v3940 = vpack.c.b16 %v3904, %v3904
        %v3941 = vpack.c.b16 %v3905, %v3905
        %v3942 = vpack.c.b16 %v3906, %v3906
        %v3943 = vpack.c.b16 %v3907, %v3907
        %v3944 = vpack.c.b16 %v3908, %v3908
        %v3945 = vpack.c.b16 %v3909, %v3909
        %v3946 = vpack.c.b16 %v3910, %v3910
        %v3947 = vpack.c.b16 %v3911, %v3911
        %v3948 = vpack.c.b16 %v3912, %v3912
        %v3949 = vpack.c.b16 %v3913, %v3913
        %v3950 = vpack.c.b16 %v3914, %v3914
        %v3951 = vpack.c.b16 %v3915, %v3915
        %3988 = vst [vmem:[#allocation2 + $0x8] sm:$0xf] %v3916
        %3989 = vst [vmem:[#allocation2 + $0x14] sm:$0xf] %v3917
        %3990 = vst [vmem:[#allocation2 + $0x20] sm:$0xf] %v3918
        %3991 = vst [vmem:[#allocation2 + $0x2c] sm:$0xf] %v3919
        %3992 = vst [vmem:[#allocation2 + $0x38] sm:$0xf] %v3920
        %3993 = vst [vmem:[#allocation2 + $0x44] sm:$0xf] %v3921
        %3994 = vst [vmem:[#allocation2 + $0x50] sm:$0xf] %v3922
        %3995 = vst [vmem:[#allocation2 + $0x5c] sm:$0xf] %v3923
        %3996 = vst [vmem:[#allocation2 + $0x68] sm:$0xf] %v3924
        %3997 = vst [vmem:[#allocation2 + $0x74] sm:$0xf] %v3925
        %3998 = vst [vmem:[#allocation2 + $0x80] sm:$0xf] %v3926
        %3999 = vst [vmem:[#allocation2 + $0x8c] sm:$0xf] %v3927
        %4000 = vst [vmem:[#allocation2 + $0x98] sm:$0xf] %v3928
        %4001 = vst [vmem:[#allocation2 + $0xa4] sm:$0xf] %v3929
        %4002 = vst [vmem:[#allocation2 + $0xb0] sm:$0xf] %v3930
        %4003 = vst [vmem:[#allocation2 + $0xbc] sm:$0xf] %v3931
        %4004 = vst [vmem:[#allocation2 + $0xc8] sm:$0xf] %v3932
        %4005 = vst [vmem:[#allocation2 + $0xd4] sm:$0xf] %v3933
        %4006 = vst [vmem:[#allocation2 + $0xe0] sm:$0xf] %v3934
        %4007 = vst [vmem:[#allocation2 + $0xec] sm:$0xf] %v3935
        %4008 = vst [vmem:[#allocation2 + $0xf8] sm:$0xf] %v3936
        %4009 = vst [vmem:[#allocation2 + $0x104] sm:$0xf] %v3937
        %4010 = vst [vmem:[#allocation2 + $0x110] sm:$0xf] %v3938
        %4011 = vst [vmem:[#allocation2 + $0x11c] sm:$0xf] %v3939
        %4012 = vst [vmem:[#allocation2 + $0x128] sm:$0xf] %v3940
        %4013 = vst [vmem:[#allocation2 + $0x134] sm:$0xf] %v3941
        %4014 = vst [vmem:[#allocation2 + $0x140] sm:$0xf] %v3942
        %4015 = vst [vmem:[#allocation2 + $0x14c] sm:$0xf] %v3943
        %4016 = vst [vmem:[#allocation2 + $0x158] sm:$0xf] %v3944
        %4017 = vst [vmem:[#allocation2 + $0x164] sm:$0xf] %v3945
        %4018 = vst [vmem:[#allocation2 + $0x170] sm:$0xf] %v3946
        %4019 = vst [vmem:[#allocation2 + $0x17c] sm:$0xf] %v3947
        %4020 = vst [vmem:[#allocation2 + $0x188] sm:$0xf] %v3948
        %4021 = vst [vmem:[#allocation2 + $0x194] sm:$0xf] %v3949
        %4022 = vst [vmem:[#allocation2 + $0x1a0] sm:$0xf] %v3950
        %4023 = vst [vmem:[#allocation2 + $0x1ac] sm:$0xf] %v3951
        %v4024 = vld [vmem:[#allocation2] sm:$0xff]
        %v4025 = vld [vmem:[#allocation2 + $0x8] sm:$0xf]
        %v4026 = vld [vmem:[#allocation2 + $0xc] sm:$0xff]
        %v4027 = vld [vmem:[#allocation2 + $0x14] sm:$0xf]
        %v4028 = vld [vmem:[#allocation2 + $0x18] sm:$0xff]
        %v4029 = vld [vmem:[#allocation2 + $0x20] sm:$0xf]
        %v4030 = vld [vmem:[#allocation2 + $0x24] sm:$0xff]
        %v4031 = vld [vmem:[#allocation2 + $0x2c] sm:$0xf]
        %v4032 = vld [vmem:[#allocation2 + $0x30] sm:$0xff]
        %v4033 = vld [vmem:[#allocation2 + $0x38] sm:$0xf]
        %v4034 = vld [vmem:[#allocation2 + $0x3c] sm:$0xff]
        %v4035 = vld [vmem:[#allocation2 + $0x44] sm:$0xf]
        %v4036 = vld [vmem:[#allocation2 + $0x48] sm:$0xff]
        %v4037 = vld [vmem:[#allocation2 + $0x50] sm:$0xf]
        %v4038 = vld [vmem:[#allocation2 + $0x54] sm:$0xff]
        %v4039 = vld [vmem:[#allocation2 + $0x5c] sm:$0xf]
        %v4040 = vld [vmem:[#allocation2 + $0x60] sm:$0xff]
        %v4041 = vld [vmem:[#allocation2 + $0x68] sm:$0xf]
        %v4042 = vld [vmem:[#allocation2 + $0x6c] sm:$0xff]
        %v4043 = vld [vmem:[#allocation2 + $0x74] sm:$0xf]
        %v4044 = vld [vmem:[#allocation2 + $0x78] sm:$0xff]
        %v4045 = vld [vmem:[#allocation2 + $0x80] sm:$0xf]
        %v4046 = vld [vmem:[#allocation2 + $0x84] sm:$0xff]
        %v4047 = vld [vmem:[#allocation2 + $0x8c] sm:$0xf]
        %v4048 = vld [vmem:[#allocation2 + $0x90] sm:$0xff]
        %v4049 = vld [vmem:[#allocation2 + $0x98] sm:$0xf]
        %v4050 = vld [vmem:[#allocation2 + $0x9c] sm:$0xff]
        %v4051 = vld [vmem:[#allocation2 + $0xa4] sm:$0xf]
        %v4052 = vld [vmem:[#allocation2 + $0xa8] sm:$0xff]
        %v4053 = vld [vmem:[#allocation2 + $0xb0] sm:$0xf]
        %v4054 = vld [vmem:[#allocation2 + $0xb4] sm:$0xff]
        %v4055 = vld [vmem:[#allocation2 + $0xbc] sm:$0xf]
        %v4056 = vld [vmem:[#allocation2 + $0xc0] sm:$0xff]
        %v4057 = vld [vmem:[#allocation2 + $0xc8] sm:$0xf]
        %v4058 = vld [vmem:[#allocation2 + $0xcc] sm:$0xff]
        %v4059 = vld [vmem:[#allocation2 + $0xd4] sm:$0xf]
        %v4060 = vld [vmem:[#allocation2 + $0xd8] sm:$0xff]
        %v4061 = vld [vmem:[#allocation2 + $0xe0] sm:$0xf]
        %v4062 = vld [vmem:[#allocation2 + $0xe4] sm:$0xff]
        %v4063 = vld [vmem:[#allocation2 + $0xec] sm:$0xf]
        %v4064 = vld [vmem:[#allocation2 + $0xf0] sm:$0xff]
        %v4065 = vld [vmem:[#allocation2 + $0xf8] sm:$0xf]
        %v4066 = vld [vmem:[#allocation2 + $0xfc] sm:$0xff]
        %v4067 = vld [vmem:[#allocation2 + $0x104] sm:$0xf]
        %v4068 = vld [vmem:[#allocation2 + $0x108] sm:$0xff]
        %v4069 = vld [vmem:[#allocation2 + $0x110] sm:$0xf]
        %v4070 = vld [vmem:[#allocation2 + $0x114] sm:$0xff]
        %v4071 = vld [vmem:[#allocation2 + $0x11c] sm:$0xf]
        %v4072 = vld [vmem:[#allocation2 + $0x120] sm:$0xff]
        %v4073 = vld [vmem:[#allocation2 + $0x128] sm:$0xf]
        %v4074 = vld [vmem:[#allocation2 + $0x12c] sm:$0xff]
        %v4075 = vld [vmem:[#allocation2 + $0x134] sm:$0xf]
        %v4076 = vld [vmem:[#allocation2 + $0x138] sm:$0xff]
        %v4077 = vld [vmem:[#allocation2 + $0x140] sm:$0xf]
        %v4078 = vld [vmem:[#allocation2 + $0x144] sm:$0xff]
        %v4079 = vld [vmem:[#allocation2 + $0x14c] sm:$0xf]
        %v4080 = vld [vmem:[#allocation2 + $0x150] sm:$0xff]
        %v4081 = vld [vmem:[#allocation2 + $0x158] sm:$0xf]
        %v4082 = vld [vmem:[#allocation2 + $0x15c] sm:$0xff]
        %v4083 = vld [vmem:[#allocation2 + $0x164] sm:$0xf]
        %v4084 = vld [vmem:[#allocation2 + $0x168] sm:$0xff]
        %v4085 = vld [vmem:[#allocation2 + $0x170] sm:$0xf]
        %v4086 = vld [vmem:[#allocation2 + $0x174] sm:$0xff]
        %v4087 = vld [vmem:[#allocation2 + $0x17c] sm:$0xf]
        %v4088 = vld [vmem:[%s4] sm:$0xf]
        %v4089 = vld [vmem:[%s4 + $0x4] sm:$0xf]
        %v4090 = vld [vmem:[%s4 + $0x8] sm:$0xf]
        %v4091 = vld [vmem:[%s4 + $0xc] sm:$0xf]
        %v4092 = vld [vmem:[%s4 + $0x10] sm:$0xf]
        %v4093 = vld [vmem:[%s4 + $0x14] sm:$0xf]
        %v4094 = vld [vmem:[%s4 + $0x18] sm:$0xf]
        %v4095 = vld [vmem:[%s4 + $0x1c] sm:$0xf]
        %v4096 = vld [vmem:[%s4 + $0x20] sm:$0xf]
        %v4097 = vld [vmem:[%s4 + $0x24] sm:$0xf]
        %v4098 = vld [vmem:[%s4 + $0x28] sm:$0xf]
        %v4099 = vld [vmem:[%s4 + $0x2c] sm:$0xf]
        %v4100 = vld [vmem:[%s4 + $0x30] sm:$0xf]
        %v4101 = vld [vmem:[%s4 + $0x34] sm:$0xf]
        %v4102 = vld [vmem:[%s4 + $0x38] sm:$0xf]
        %v4103 = vld [vmem:[%s4 + $0x3c] sm:$0xf]
        %v4104 = vld [vmem:[%s4 + $0x40] sm:$0xf]
        %v4105 = vld [vmem:[%s4 + $0x44] sm:$0xf]
        %v4106 = vld [vmem:[%s4 + $0x48] sm:$0xf]
        %v4107 = vld [vmem:[%s4 + $0x4c] sm:$0xf]
        %v4108 = vld [vmem:[%s4 + $0x50] sm:$0xf]
        %v4109 = vld [vmem:[%s4 + $0x54] sm:$0xf]
        %v4110 = vld [vmem:[%s4 + $0x58] sm:$0xf]
        %v4111 = vld [vmem:[%s4 + $0x5c] sm:$0xf]
        %v4112 = vld [vmem:[%s4 + $0x60] sm:$0xf]
        %v4113 = vld [vmem:[%s4 + $0x64] sm:$0xf]
        %v4114 = vld [vmem:[%s4 + $0x68] sm:$0xf]
        %v4115 = vld [vmem:[%s4 + $0x6c] sm:$0xf]
        %v4116 = vld [vmem:[%s4 + $0x70] sm:$0xf]
        %v4117 = vld [vmem:[%s4 + $0x74] sm:$0xf]
        %v4118 = vld [vmem:[%s4 + $0x78] sm:$0xf]
        %v4119 = vld [vmem:[%s4 + $0x7c] sm:$0xf]
        %v4120 = vld [vmem:[%s4 + $0x80] sm:$0xf]
        %v4121 = vld [vmem:[%s4 + $0x84] sm:$0xf]
        %v4122 = vld [vmem:[%s4 + $0x88] sm:$0xf]
        %v4123 = vld [vmem:[%s4 + $0x8c] sm:$0xf]
        %v4124 = vld [vmem:[%s4 + $0x90] sm:$0xf]
        %v4125 = vld [vmem:[%s4 + $0x94] sm:$0xf]
        %v4126 = vld [vmem:[%s4 + $0x98] sm:$0xf]
        %v4127 = vld [vmem:[%s4 + $0x9c] sm:$0xf]
        %v4128 = vld [vmem:[%s4 + $0xa0] sm:$0xf]
        %v4129 = vld [vmem:[%s4 + $0xa4] sm:$0xf]
        %v4130 = vld [vmem:[%s4 + $0xa8] sm:$0xf]
        %v4131 = vld [vmem:[%s4 + $0xac] sm:$0xf]
        %v4132 = vld [vmem:[%s4 + $0xb0] sm:$0xf]
        %v4133 = vld [vmem:[%s4 + $0xb4] sm:$0xf]
        %v4134 = vld [vmem:[%s4 + $0xb8] sm:$0xf]
        %v4135 = vld [vmem:[%s4 + $0xbc] sm:$0xf]
        %v4136 = vld [vmem:[#allocation2 + $0x180] sm:$0xff]
        %v4137 = vld [vmem:[#allocation2 + $0x188] sm:$0xf]
        %v4138 = vld [vmem:[#allocation2 + $0x18c] sm:$0xff]
        %v4139 = vld [vmem:[#allocation2 + $0x194] sm:$0xf]
        %s4140 = scalar_lea.vmem %s4, 192
        %v4141 = vld [vmem:[%s4140] sm:$0xf]
        %v4142 = vld [vmem:[%s4140 + $0x4] sm:$0xf]
        %v4143 = vld [vmem:[%s4140 + $0x8] sm:$0xf]
        %v4144 = vld [vmem:[%s4140 + $0xc] sm:$0xf]
        %v4145 = vld [vmem:[%s4140 + $0x10] sm:$0xf]
        %v4146 = vld [vmem:[%s4140 + $0x14] sm:$0xf]
        %v4147 = vld [vmem:[%s4140 + $0x18] sm:$0xf]
        %v4148 = vld [vmem:[%s4140 + $0x1c] sm:$0xf]
        %v4149 = vld [vmem:[%s4140 + $0x20] sm:$0xf]
        %v4150 = vld [vmem:[%s4140 + $0x24] sm:$0xf]
        %v4151 = vld [vmem:[%s4140 + $0x28] sm:$0xf]
        %v4152 = vld [vmem:[%s4140 + $0x2c] sm:$0xf]
        %v4153 = vld [vmem:[%s4140 + $0x30] sm:$0xf]
        %v4154 = vld [vmem:[%s4140 + $0x34] sm:$0xf]
        %v4155 = vld [vmem:[%s4140 + $0x38] sm:$0xf]
        %v4156 = vld [vmem:[%s4140 + $0x3c] sm:$0xf]
        %v4157 = vld [vmem:[%s4140 + $0x40] sm:$0xf]
        %v4158 = vld [vmem:[%s4140 + $0x44] sm:$0xf]
        %v4159 = vld [vmem:[%s4140 + $0x48] sm:$0xf]
        %v4160 = vld [vmem:[%s4140 + $0x4c] sm:$0xf]
        %v4161 = vld [vmem:[%s4140 + $0x50] sm:$0xf]
        %v4162 = vld [vmem:[%s4140 + $0x54] sm:$0xf]
        %v4163 = vld [vmem:[%s4140 + $0x58] sm:$0xf]
        %v4164 = vld [vmem:[%s4140 + $0x5c] sm:$0xf]
        %v4165 = vld [vmem:[%s4140 + $0x60] sm:$0xf]
        %v4166 = vld [vmem:[%s4140 + $0x64] sm:$0xf]
        %v4167 = vld [vmem:[%s4140 + $0x68] sm:$0xf]
        %v4168 = vld [vmem:[%s4140 + $0x6c] sm:$0xf]
        %v4169 = vld [vmem:[%s4140 + $0x70] sm:$0xf]
        %v4170 = vld [vmem:[%s4140 + $0x74] sm:$0xf]
        %v4171 = vld [vmem:[%s4140 + $0x78] sm:$0xf]
        %v4172 = vld [vmem:[%s4140 + $0x7c] sm:$0xf]
        %v4173 = vld [vmem:[%s4140 + $0x80] sm:$0xf]
        %v4174 = vld [vmem:[%s4140 + $0x84] sm:$0xf]
        %v4175 = vld [vmem:[%s4140 + $0x88] sm:$0xf]
        %v4176 = vld [vmem:[%s4140 + $0x8c] sm:$0xf]
        %v4177 = vld [vmem:[%s4140 + $0x90] sm:$0xf]
        %v4178 = vld [vmem:[%s4140 + $0x94] sm:$0xf]
        %v4179 = vld [vmem:[%s4140 + $0x98] sm:$0xf]
        %v4180 = vld [vmem:[%s4140 + $0x9c] sm:$0xf]
        %v4181 = vld [vmem:[%s4140 + $0xa0] sm:$0xf]
        %v4182 = vld [vmem:[%s4140 + $0xa4] sm:$0xf]
        %v4183 = vld [vmem:[%s4140 + $0xa8] sm:$0xf]
        %v4184 = vld [vmem:[%s4140 + $0xac] sm:$0xf]
        %v4185 = vld [vmem:[%s4140 + $0xb0] sm:$0xf]
        %v4186 = vld [vmem:[%s4140 + $0xb4] sm:$0xf]
        %v4187 = vld [vmem:[%s4140 + $0xb8] sm:$0xf]
        %v4188 = vld [vmem:[%s4140 + $0xbc] sm:$0xf]
        %v4253 = vunpack.c.l.b16 %v4028
        %v4254 = vunpack.c.h.b16 %v4028
        %v4255 = vunpack.c.l.b16 %v4029
        %v4256 = vunpack.c.l.b16 %v4030
        %v4257 = vunpack.c.h.b16 %v4030
        %v4258 = vunpack.c.l.b16 %v4031
        %v4259 = vunpack.c.l.b16 %v4032
        %v4260 = vunpack.c.h.b16 %v4032
        %v4261 = vunpack.c.l.b16 %v4033
        %v4262 = vunpack.c.l.b16 %v4034
        %v4263 = vunpack.c.h.b16 %v4034
        %v4264 = vunpack.c.l.b16 %v4035
        %v4265 = vunpack.c.l.b16 %v4036
        %v4266 = vunpack.c.h.b16 %v4036
        %v4267 = vunpack.c.l.b16 %v4037
        %v4268 = vunpack.c.l.b16 %v4038
        %v4269 = vunpack.c.h.b16 %v4038
        %v4270 = vunpack.c.l.b16 %v4039
        %v4271 = vunpack.c.l.b16 %v4040
        %v4272 = vunpack.c.h.b16 %v4040
        %v4273 = vunpack.c.l.b16 %v4041
        %v4274 = vunpack.c.l.b16 %v4042
        %v4275 = vunpack.c.h.b16 %v4042
        %v4276 = vunpack.c.l.b16 %v4043
        %v4277 = vunpack.c.l.b16 %v4044
        %v4278 = vunpack.c.h.b16 %v4044
        %v4279 = vunpack.c.l.b16 %v4045
        %v4280 = vunpack.c.l.b16 %v4046
        %v4281 = vunpack.c.h.b16 %v4046
        %v4282 = vunpack.c.l.b16 %v4047
        %v4283 = vunpack.c.l.b16 %v4048
        %v4284 = vunpack.c.h.b16 %v4048
        %v4285 = vunpack.c.l.b16 %v4049
        %v4286 = vunpack.c.l.b16 %v4050
        %v4287 = vunpack.c.h.b16 %v4050
        %v4288 = vunpack.c.l.b16 %v4051
        %v4289 = vunpack.c.l.b16 %v4052
        %v4290 = vunpack.c.h.b16 %v4052
        %v4291 = vunpack.c.l.b16 %v4053
        %v4292 = vunpack.c.l.b16 %v4054
        %v4293 = vunpack.c.h.b16 %v4054
        %v4294 = vunpack.c.l.b16 %v4055
        %v4295 = vunpack.c.l.b16 %v4056
        %v4296 = vunpack.c.h.b16 %v4056
        %v4297 = vunpack.c.l.b16 %v4057
        %v4298 = vunpack.c.l.b16 %v4058
        %v4299 = vunpack.c.h.b16 %v4058
        %v4300 = vunpack.c.l.b16 %v4059
        %v4301 = vunpack.c.l.b16 %v4060
        %v4302 = vunpack.c.h.b16 %v4060
        %v4303 = vunpack.c.l.b16 %v4061
        %v4304 = vunpack.c.l.b16 %v4062
        %v4305 = vunpack.c.h.b16 %v4062
        %v4306 = vunpack.c.l.b16 %v4063
        %v4307 = vunpack.c.l.b16 %v4064
        %v4308 = vunpack.c.h.b16 %v4064
        %v4309 = vunpack.c.l.b16 %v4065
        %v4310 = vunpack.c.l.b16 %v4066
        %v4311 = vunpack.c.h.b16 %v4066
        %v4312 = vunpack.c.l.b16 %v4067
        %v4313 = vunpack.c.l.b16 %v4068
        %v4314 = vunpack.c.h.b16 %v4068
        %v4315 = vunpack.c.l.b16 %v4069
        %v4316 = vunpack.c.l.b16 %v4070
        %v4317 = vunpack.c.h.b16 %v4070
        %v4318 = vunpack.c.l.b16 %v4071
        %v4319 = vunpack.c.l.b16 %v4072
        %v4320 = vunpack.c.h.b16 %v4072
        %v4321 = vunpack.c.l.b16 %v4073
        %v4322 = vunpack.c.l.b16 %v4074
        %v4323 = vunpack.c.h.b16 %v4074
        %v4324 = vunpack.c.l.b16 %v4075
        %v4325 = vunpack.c.l.b16 %v4076
        %v4326 = vunpack.c.h.b16 %v4076
        %v4327 = vunpack.c.l.b16 %v4077
        %v4328 = vunpack.c.l.b16 %v4078
        %v4329 = vunpack.c.h.b16 %v4078
        %v4330 = vunpack.c.l.b16 %v4079
        %v4331 = vunpack.c.l.b16 %v4080
        %v4332 = vunpack.c.h.b16 %v4080
        %v4333 = vunpack.c.l.b16 %v4081
        %v4334 = vunpack.c.l.b16 %v4082
        %v4335 = vunpack.c.h.b16 %v4082
        %v4336 = vunpack.c.l.b16 %v4083
        %v4337 = vunpack.c.l.b16 %v4084
        %v4338 = vunpack.c.h.b16 %v4084
        %v4339 = vunpack.c.l.b16 %v4085
        %v4340 = vunpack.c.l.b16 %v4086
        %v4341 = vunpack.c.h.b16 %v4086
        %v4342 = vunpack.c.l.b16 %v4087
        %v4343 = vunpack.c.l.b16 %v4136
        %v4344 = vunpack.c.h.b16 %v4136
        %v4345 = vunpack.c.l.b16 %v4137
        %v4346 = vunpack.c.l.b16 %v4138
        %v4347 = vunpack.c.h.b16 %v4138
        %v4348 = vunpack.c.l.b16 %v4139
        %v4349 = vpack.c.b16 %v4256, %v4253
        %v4350 = vpack.c.b16 %v4257, %v4254
        %v4351 = vpack.c.b16 %v4258, %v4255
        %v4352 = vpack.c.b16 %v4262, %v4259
        %v4353 = vpack.c.b16 %v4263, %v4260
        %v4354 = vpack.c.b16 %v4264, %v4261
        %v4355 = vpack.c.b16 %v4268, %v4265
        %v4356 = vpack.c.b16 %v4269, %v4266
        %v4357 = vpack.c.b16 %v4270, %v4267
        %v4358 = vpack.c.b16 %v4274, %v4271
        %v4359 = vpack.c.b16 %v4275, %v4272
        %v4360 = vpack.c.b16 %v4276, %v4273
        %v4361 = vpack.c.b16 %v4280, %v4277
        %v4362 = vpack.c.b16 %v4281, %v4278
        %v4363 = vpack.c.b16 %v4282, %v4279
        %v4364 = vpack.c.b16 %v4286, %v4283
        %v4365 = vpack.c.b16 %v4287, %v4284
        %v4366 = vpack.c.b16 %v4288, %v4285
        %v4367 = vpack.c.b16 %v4292, %v4289
        %v4368 = vpack.c.b16 %v4293, %v4290
        %v4369 = vpack.c.b16 %v4294, %v4291
        %v4370 = vpack.c.b16 %v4298, %v4295
        %v4371 = vpack.c.b16 %v4299, %v4296
        %v4372 = vpack.c.b16 %v4300, %v4297
        %v4373 = vpack.c.b16 %v4304, %v4301
        %v4374 = vpack.c.b16 %v4305, %v4302
        %v4375 = vpack.c.b16 %v4306, %v4303
        %v4376 = vpack.c.b16 %v4310, %v4307
        %v4377 = vpack.c.b16 %v4311, %v4308
        %v4378 = vpack.c.b16 %v4312, %v4309
        %v4379 = vpack.c.b16 %v4316, %v4313
        %v4380 = vpack.c.b16 %v4317, %v4314
        %v4381 = vpack.c.b16 %v4318, %v4315
        %v4382 = vpack.c.b16 %v4322, %v4319
        %v4383 = vpack.c.b16 %v4323, %v4320
        %v4384 = vpack.c.b16 %v4324, %v4321
        %v4385 = vpack.c.b16 %v4328, %v4325
        %v4386 = vpack.c.b16 %v4329, %v4326
        %v4387 = vpack.c.b16 %v4330, %v4327
        %v4388 = vpack.c.b16 %v4334, %v4331
        %v4389 = vpack.c.b16 %v4335, %v4332
        %v4390 = vpack.c.b16 %v4336, %v4333
        %v4391 = vpack.c.b16 %v4340, %v4337
        %v4392 = vpack.c.b16 %v4341, %v4338
        %v4393 = vpack.c.b16 %v4342, %v4339
        %v4394 = vpack.c.b16 %v4346, %v4343
        %v4395 = vpack.c.b16 %v4347, %v4344
        %v4396 = vpack.c.b16 %v4348, %v4345
        %v4493 = vunpack.c.l.b16 %v4141
        %v4494 = vunpack.c.l.b16 %v4142
        %v4495 = vunpack.c.l.b16 %v4143
        %v4496 = vunpack.c.l.b16 %v4144
        %v4497 = vunpack.c.l.b16 %v4145
        %v4498 = vunpack.c.l.b16 %v4146
        %v4499 = vunpack.c.l.b16 %v4147
        %v4500 = vunpack.c.l.b16 %v4148
        %v4501 = vunpack.c.l.b16 %v4149
        %v4502 = vunpack.c.l.b16 %v4150
        %v4503 = vunpack.c.l.b16 %v4151
        %v4504 = vunpack.c.l.b16 %v4152
        %v4505 = vunpack.c.l.b16 %v4153
        %v4506 = vunpack.c.l.b16 %v4154
        %v4507 = vunpack.c.l.b16 %v4155
        %v4508 = vunpack.c.l.b16 %v4156
        %v4509 = vunpack.c.l.b16 %v4157
        %v4510 = vunpack.c.l.b16 %v4158
        %v4511 = vunpack.c.l.b16 %v4159
        %v4512 = vunpack.c.l.b16 %v4160
        %v4513 = vunpack.c.l.b16 %v4161
        %v4514 = vunpack.c.l.b16 %v4162
        %v4515 = vunpack.c.l.b16 %v4163
        %v4516 = vunpack.c.l.b16 %v4164
        %v4517 = vunpack.c.l.b16 %v4165
        %v4518 = vunpack.c.l.b16 %v4166
        %v4519 = vunpack.c.l.b16 %v4167
        %v4520 = vunpack.c.l.b16 %v4168
        %v4521 = vunpack.c.l.b16 %v4169
        %v4522 = vunpack.c.l.b16 %v4170
        %v4523 = vunpack.c.l.b16 %v4171
        %v4524 = vunpack.c.l.b16 %v4172
        %v4525 = vunpack.c.l.b16 %v4173
        %v4526 = vunpack.c.l.b16 %v4174
        %v4527 = vunpack.c.l.b16 %v4175
        %v4528 = vunpack.c.l.b16 %v4176
        %v4529 = vunpack.c.l.b16 %v4177
        %v4530 = vunpack.c.l.b16 %v4178
        %v4531 = vunpack.c.l.b16 %v4179
        %v4532 = vunpack.c.l.b16 %v4180
        %v4533 = vunpack.c.l.b16 %v4181
        %v4534 = vunpack.c.l.b16 %v4182
        %v4535 = vunpack.c.l.b16 %v4183
        %v4536 = vunpack.c.l.b16 %v4184
        %v4537 = vunpack.c.l.b16 %v4185
        %v4538 = vunpack.c.l.b16 %v4186
        %v4539 = vunpack.c.l.b16 %v4187
        %v4540 = vunpack.c.l.b16 %v4188
        %v4541 = vpack.c.b16 %v4494, %v4493
        %v4542 = vpack.c.b16 %v4496, %v4495
        %v4543 = vpack.c.b16 %v4498, %v4497
        %v4544 = vpack.c.b16 %v4500, %v4499
        %v4545 = vpack.c.b16 %v4502, %v4501
        %v4546 = vpack.c.b16 %v4504, %v4503
        %v4547 = vpack.c.b16 %v4506, %v4505
        %v4548 = vpack.c.b16 %v4508, %v4507
        %v4549 = vpack.c.b16 %v4510, %v4509
        %v4550 = vpack.c.b16 %v4512, %v4511
        %v4551 = vpack.c.b16 %v4514, %v4513
        %v4552 = vpack.c.b16 %v4516, %v4515
        %v4553 = vpack.c.b16 %v4518, %v4517
        %v4554 = vpack.c.b16 %v4520, %v4519
        %v4555 = vpack.c.b16 %v4522, %v4521
        %v4556 = vpack.c.b16 %v4524, %v4523
        %v4557 = vpack.c.b16 %v4526, %v4525
        %v4558 = vpack.c.b16 %v4528, %v4527
        %v4559 = vpack.c.b16 %v4530, %v4529
        %v4560 = vpack.c.b16 %v4532, %v4531
        %v4561 = vpack.c.b16 %v4534, %v4533
        %v4562 = vpack.c.b16 %v4536, %v4535
        %v4563 = vpack.c.b16 %v4538, %v4537
        %v4564 = vpack.c.b16 %v4540, %v4539
        %4589 = vmatprep.subr.bf16.mxu0 0
        %4590 = vmatpush1.bf16.msra.mxu0 %v4548
        %4591 = vmatprep.subr.bf16.mxu0 0
        %4592 = vmatpush1.bf16.msra.mxu0 %v4547
        %4593 = vmatprep.subr.bf16.mxu0 0
        %4594 = vmatpush1.bf16.msra.mxu0 %v4546
        %4595 = vmatprep.subr.bf16.mxu0 0
        %4596 = vmatpush1.bf16.msra.mxu0 %v4545
        %4597 = vmatprep.subr.bf16.mxu0 0
        %4598 = vmatpush1.bf16.msra.mxu0 %v4544
        %4599 = vmatprep.subr.bf16.mxu0 0
        %4600 = vmatpush1.bf16.msra.mxu0 %v4543
        %4601 = vmatprep.subr.bf16.mxu0 0
        %4602 = vmatpush1.bf16.msra.mxu0 %v4542
        %4603 = vmatprep.subr.bf16.mxu0 0
        %4604 = vmatpush1.bf16.msra.mxu0 %v4541
        %4605 = vmatprep.subr.bf16.mxu0 0
        %4606 = vmatpush2.bf16.msra.mxu0 %v4556
        %4607 = vmatprep.subr.bf16.mxu0 0
        %4608 = vmatpush2.bf16.msra.mxu0 %v4555
        %4609 = vmatprep.subr.bf16.mxu0 0
        %4610 = vmatpush2.bf16.msra.mxu0 %v4554
        %4611 = vmatprep.subr.bf16.mxu0 0
        %4612 = vmatpush2.bf16.msra.mxu0 %v4553
        %4613 = vmatprep.subr.bf16.mxu0 0
        %4614 = vmatpush2.bf16.msra.mxu0 %v4552
        %4615 = vmatprep.subr.bf16.mxu0 0
        %4616 = vmatpush2.bf16.msra.mxu0 %v4551
        %4617 = vmatprep.subr.bf16.mxu0 0
        %4618 = vmatpush2.bf16.msra.mxu0 %v4550
        %4619 = vmatprep.subr.bf16.mxu0 0
        %4620 = vmatpush2.bf16.msra.mxu0 %v4549
        %4621 = vmatprep.mubr.bf16.mxu0 %v4350
        %4622 = vmatmul.mubr.bf16.gmra.mxu0 %v4349
        %v4623 = vpop.f32.mrf.mxu0
        %v4624 = vadd.f32 0.0, %v4623
        %v4625 = vpop.f32.mrf.mxu0
        %v4626 = vpop.f32.mrf.mxu0
        %v4627 = vadd.f32 0.0, %v4626
        %v4628 = vpop.f32.mrf.mxu0
        %4629 = vmatprep.mubr.bf16.mxu0 %v4353
        %4630 = vmatmul.mubr.bf16.gmra.mxu0 %v4352
        %v4631 = vpop.f32.mrf.mxu0
        %v4632 = vadd.f32 0.0, %v4631
        %v4633 = vpop.f32.mrf.mxu0
        %v4634 = vpop.f32.mrf.mxu0
        %v4635 = vadd.f32 0.0, %v4634
        %v4636 = vpop.f32.mrf.mxu0
        %4637 = vmatprep.mubr.bf16.mxu0 %v4356
        %4638 = vmatmul.mubr.bf16.gmra.mxu0 %v4355
        %v4639 = vpop.f32.mrf.mxu0
        %v4640 = vadd.f32 0.0, %v4639
        %v4641 = vpop.f32.mrf.mxu0
        %v4642 = vpop.f32.mrf.mxu0
        %v4643 = vadd.f32 0.0, %v4642
        %v4644 = vpop.f32.mrf.mxu0
        %4645 = vmatprep.mubr.bf16.mxu0 %v4359
        %4646 = vmatmul.mubr.bf16.gmra.mxu0 %v4358
        %v4647 = vpop.f32.mrf.mxu0
        %v4648 = vadd.f32 0.0, %v4647
        %v4649 = vpop.f32.mrf.mxu0
        %v4650 = vpop.f32.mrf.mxu0
        %v4651 = vadd.f32 0.0, %v4650
        %v4652 = vpop.f32.mrf.mxu0
        %4653 = vmatprep.mubr.bf16.mxu0 %v4362
        %4654 = vmatmul.mubr.bf16.gmra.mxu0 %v4361
        %v4655 = vpop.f32.mrf.mxu0
        %v4656 = vadd.f32 0.0, %v4655
        %v4657 = vpop.f32.mrf.mxu0
        %v4658 = vpop.f32.mrf.mxu0
        %v4659 = vadd.f32 0.0, %v4658
        %v4660 = vpop.f32.mrf.mxu0
        %4661 = vmatprep.mubr.bf16.mxu0 %v4365
        %4662 = vmatmul.mubr.bf16.gmra.mxu0 %v4364
        %v4663 = vpop.f32.mrf.mxu0
        %v4664 = vadd.f32 0.0, %v4663
        %v4665 = vpop.f32.mrf.mxu0
        %v4666 = vpop.f32.mrf.mxu0
        %v4667 = vadd.f32 0.0, %v4666
        %v4668 = vpop.f32.mrf.mxu0
        %4669 = vmatprep.mubr.bf16.mxu0 %v4368
        %4670 = vmatmul.mubr.bf16.gmra.mxu0 %v4367
        %v4671 = vpop.f32.mrf.mxu0
        %v4672 = vadd.f32 0.0, %v4671
        %v4673 = vpop.f32.mrf.mxu0
        %v4674 = vpop.f32.mrf.mxu0
        %v4675 = vadd.f32 0.0, %v4674
        %v4676 = vpop.f32.mrf.mxu0
        %4677 = vmatprep.mubr.bf16.mxu0 %v4371
        %4678 = vmatmul.mubr.bf16.gmra.mxu0 %v4370
        %v4679 = vpop.f32.mrf.mxu0
        %v4680 = vadd.f32 0.0, %v4679
        %v4681 = vpop.f32.mrf.mxu0
        %v4682 = vpop.f32.mrf.mxu0
        %v4683 = vadd.f32 0.0, %v4682
        %v4684 = vpop.f32.mrf.mxu0
        %4685 = vmatprep.mubr.bf16.mxu0 %v4374
        %4686 = vmatmul.mubr.bf16.gmra.mxu0 %v4373
        %v4687 = vpop.f32.mrf.mxu0
        %v4688 = vadd.f32 0.0, %v4687
        %v4689 = vpop.f32.mrf.mxu0
        %v4690 = vpop.f32.mrf.mxu0
        %v4691 = vadd.f32 0.0, %v4690
        %v4692 = vpop.f32.mrf.mxu0
        %4693 = vmatprep.mubr.bf16.mxu0 %v4377
        %4694 = vmatmul.mubr.bf16.gmra.mxu0 %v4376
        %v4695 = vpop.f32.mrf.mxu0
        %v4696 = vadd.f32 0.0, %v4695
        %v4697 = vpop.f32.mrf.mxu0
        %v4698 = vpop.f32.mrf.mxu0
        %v4699 = vadd.f32 0.0, %v4698
        %v4700 = vpop.f32.mrf.mxu0
        %4701 = vmatprep.mubr.bf16.mxu0 %v4380
        %4702 = vmatmul.mubr.bf16.gmra.mxu0 %v4379
        %v4703 = vpop.f32.mrf.mxu0
        %v4704 = vadd.f32 0.0, %v4703
        %v4705 = vpop.f32.mrf.mxu0
        %v4706 = vpop.f32.mrf.mxu0
        %v4707 = vadd.f32 0.0, %v4706
        %v4708 = vpop.f32.mrf.mxu0
        %4709 = vmatprep.mubr.bf16.mxu0 %v4383
        %4710 = vmatmul.mubr.bf16.gmra.mxu0 %v4382
        %v4711 = vpop.f32.mrf.mxu0
        %v4712 = vadd.f32 0.0, %v4711
        %v4713 = vpop.f32.mrf.mxu0
        %v4714 = vpop.f32.mrf.mxu0
        %v4715 = vadd.f32 0.0, %v4714
        %v4716 = vpop.f32.mrf.mxu0
        %4717 = vmatprep.mubr.bf16.mxu0 %v4386
        %4718 = vmatmul.mubr.bf16.gmra.mxu0 %v4385
        %v4719 = vpop.f32.mrf.mxu0
        %v4720 = vadd.f32 0.0, %v4719
        %v4721 = vpop.f32.mrf.mxu0
        %v4722 = vpop.f32.mrf.mxu0
        %v4723 = vadd.f32 0.0, %v4722
        %v4724 = vpop.f32.mrf.mxu0
        %4725 = vmatprep.mubr.bf16.mxu0 %v4389
        %4726 = vmatmul.mubr.bf16.gmra.mxu0 %v4388
        %v4727 = vpop.f32.mrf.mxu0
        %v4728 = vadd.f32 0.0, %v4727
        %v4729 = vpop.f32.mrf.mxu0
        %v4730 = vpop.f32.mrf.mxu0
        %v4731 = vadd.f32 0.0, %v4730
        %v4732 = vpop.f32.mrf.mxu0
        %4733 = vmatprep.mubr.bf16.mxu0 %v4392
        %4734 = vmatmul.mubr.bf16.gmra.mxu0 %v4391
        %v4735 = vpop.f32.mrf.mxu0
        %v4736 = vadd.f32 0.0, %v4735
        %v4737 = vpop.f32.mrf.mxu0
        %v4738 = vpop.f32.mrf.mxu0
        %v4739 = vadd.f32 0.0, %v4738
        %v4740 = vpop.f32.mrf.mxu0
        %4741 = vmatprep.mubr.bf16.mxu0 %v4395
        %4742 = vmatmul.mubr.bf16.gmra.mxu0 %v4394
        %v4743 = vpop.f32.mrf.mxu0
        %v4744 = vadd.f32 0.0, %v4743
        %v4745 = vpop.f32.mrf.mxu0
        %v4746 = vpop.f32.mrf.mxu0
        %v4747 = vadd.f32 0.0, %v4746
        %v4748 = vpop.f32.mrf.mxu0
        %4749 = vdwg.mxu0
        %4750 = vmatprep.subr.bf16.mxu0 0
        %4751 = vmatpush1.bf16.msra.mxu0 %v4564
        %4752 = vmatprep.subr.bf16.mxu0 0
        %4753 = vmatpush1.bf16.msra.mxu0 %v4563
        %4754 = vmatprep.subr.bf16.mxu0 0
        %4755 = vmatpush1.bf16.msra.mxu0 %v4562
        %4756 = vmatprep.subr.bf16.mxu0 0
        %4757 = vmatpush1.bf16.msra.mxu0 %v4561
        %4758 = vmatprep.subr.bf16.mxu0 0
        %4759 = vmatpush1.bf16.msra.mxu0 %v4560
        %4760 = vmatprep.subr.bf16.mxu0 0
        %4761 = vmatpush1.bf16.msra.mxu0 %v4559
        %4762 = vmatprep.subr.bf16.mxu0 0
        %4763 = vmatpush1.bf16.msra.mxu0 %v4558
        %4764 = vmatprep.subr.bf16.mxu0 0
        %4765 = vmatpush1.bf16.msra.mxu0 %v4557
        %4766 = vmatprep.subr.bf16.mxu0 0
        %4767 = vmatpush2.bf16.msra.mxu0 0
        %4768 = vmatprep.subr.bf16.mxu0 0
        %4769 = vmatpush2.bf16.msra.mxu0 0
        %4770 = vmatprep.subr.bf16.mxu0 0
        %4771 = vmatpush2.bf16.msra.mxu0 0
        %4772 = vmatprep.subr.bf16.mxu0 0
        %4773 = vmatpush2.bf16.msra.mxu0 0
        %4774 = vmatprep.subr.bf16.mxu0 0
        %4775 = vmatpush2.bf16.msra.mxu0 0
        %4776 = vmatprep.subr.bf16.mxu0 0
        %4777 = vmatpush2.bf16.msra.mxu0 0
        %4778 = vmatprep.subr.bf16.mxu0 0
        %4779 = vmatpush2.bf16.msra.mxu0 0
        %4780 = vmatprep.subr.bf16.mxu0 0
        %4781 = vmatpush2.bf16.msra.mxu0 0
        %4782 = vmatprep.mubr.bf16.mxu0 0
        %4783 = vmatmul.mubr.bf16.gmra.mxu0 %v4351
        %v4784 = vpop.f32.mrf.mxu0
        %v4785 = vadd.f32 %v4624, %v4784
        %v4786 = vpop.f32.mrf.mxu0
        %v4787 = vpop.f32.mrf.mxu0
        %v4788 = vadd.f32 %v4627, %v4787
        %v4789 = vpop.f32.mrf.mxu0
        %4790 = vmatprep.mubr.bf16.mxu0 0
        %4791 = vmatmul.mubr.bf16.gmra.mxu0 %v4354
        %v4792 = vpop.f32.mrf.mxu0
        %v4793 = vadd.f32 %v4632, %v4792
        %v4794 = vpop.f32.mrf.mxu0
        %v4795 = vpop.f32.mrf.mxu0
        %v4796 = vadd.f32 %v4635, %v4795
        %v4797 = vpop.f32.mrf.mxu0
        %4798 = vmatprep.mubr.bf16.mxu0 0
        %4799 = vmatmul.mubr.bf16.gmra.mxu0 %v4357
        %v4800 = vpop.f32.mrf.mxu0
        %v4801 = vadd.f32 %v4640, %v4800
        %v4802 = vpop.f32.mrf.mxu0
        %v4803 = vpop.f32.mrf.mxu0
        %v4804 = vadd.f32 %v4643, %v4803
        %v4805 = vpop.f32.mrf.mxu0
        %4806 = vmatprep.mubr.bf16.mxu0 0
        %4807 = vmatmul.mubr.bf16.gmra.mxu0 %v4360
        %v4808 = vpop.f32.mrf.mxu0
        %v4809 = vadd.f32 %v4648, %v4808
        %v4810 = vpop.f32.mrf.mxu0
        %v4811 = vpop.f32.mrf.mxu0
        %v4812 = vadd.f32 %v4651, %v4811
        %v4813 = vpop.f32.mrf.mxu0
        %4814 = vmatprep.mubr.bf16.mxu0 0
        %4815 = vmatmul.mubr.bf16.gmra.mxu0 %v4363
        %v4816 = vpop.f32.mrf.mxu0
        %v4817 = vadd.f32 %v4656, %v4816
        %v4818 = vpop.f32.mrf.mxu0
        %v4819 = vpop.f32.mrf.mxu0
        %v4820 = vadd.f32 %v4659, %v4819
        %v4821 = vpop.f32.mrf.mxu0
        %4822 = vmatprep.mubr.bf16.mxu0 0
        %4823 = vmatmul.mubr.bf16.gmra.mxu0 %v4366
        %v4824 = vpop.f32.mrf.mxu0
        %v4825 = vadd.f32 %v4664, %v4824
        %v4826 = vpop.f32.mrf.mxu0
        %v4827 = vpop.f32.mrf.mxu0
        %v4828 = vadd.f32 %v4667, %v4827
        %v4829 = vpop.f32.mrf.mxu0
        %4830 = vmatprep.mubr.bf16.mxu0 0
        %4831 = vmatmul.mubr.bf16.gmra.mxu0 %v4369
        %v4832 = vpop.f32.mrf.mxu0
        %v4833 = vadd.f32 %v4672, %v4832
        %v4834 = vpop.f32.mrf.mxu0
        %v4835 = vpop.f32.mrf.mxu0
        %v4836 = vadd.f32 %v4675, %v4835
        %v4837 = vpop.f32.mrf.mxu0
        %4838 = vmatprep.mubr.bf16.mxu0 0
        %4839 = vmatmul.mubr.bf16.gmra.mxu0 %v4372
        %v4840 = vpop.f32.mrf.mxu0
        %v4841 = vadd.f32 %v4680, %v4840
        %v4842 = vpop.f32.mrf.mxu0
        %v4843 = vpop.f32.mrf.mxu0
        %v4844 = vadd.f32 %v4683, %v4843
        %v4845 = vpop.f32.mrf.mxu0
        %4846 = vmatprep.mubr.bf16.mxu0 0
        %4847 = vmatmul.mubr.bf16.gmra.mxu0 %v4375
        %v4848 = vpop.f32.mrf.mxu0
        %v4849 = vadd.f32 %v4688, %v4848
        %v4850 = vpop.f32.mrf.mxu0
        %v4851 = vpop.f32.mrf.mxu0
        %v4852 = vadd.f32 %v4691, %v4851
        %v4853 = vpop.f32.mrf.mxu0
        %4854 = vmatprep.mubr.bf16.mxu0 0
        %4855 = vmatmul.mubr.bf16.gmra.mxu0 %v4378
        %v4856 = vpop.f32.mrf.mxu0
        %v4857 = vadd.f32 %v4696, %v4856
        %v4858 = vpop.f32.mrf.mxu0
        %v4859 = vpop.f32.mrf.mxu0
        %v4860 = vadd.f32 %v4699, %v4859
        %v4861 = vpop.f32.mrf.mxu0
        %4862 = vmatprep.mubr.bf16.mxu0 0
        %4863 = vmatmul.mubr.bf16.gmra.mxu0 %v4381
        %v4864 = vpop.f32.mrf.mxu0
        %v4865 = vadd.f32 %v4704, %v4864
        %v4866 = vpop.f32.mrf.mxu0
        %v4867 = vpop.f32.mrf.mxu0
        %v4868 = vadd.f32 %v4707, %v4867
        %v4869 = vpop.f32.mrf.mxu0
        %4870 = vmatprep.mubr.bf16.mxu0 0
        %4871 = vmatmul.mubr.bf16.gmra.mxu0 %v4384
        %v4872 = vpop.f32.mrf.mxu0
        %v4873 = vadd.f32 %v4712, %v4872
        %v4874 = vpop.f32.mrf.mxu0
        %v4875 = vpop.f32.mrf.mxu0
        %v4876 = vadd.f32 %v4715, %v4875
        %v4877 = vpop.f32.mrf.mxu0
        %4878 = vmatprep.mubr.bf16.mxu0 0
        %4879 = vmatmul.mubr.bf16.gmra.mxu0 %v4387
        %v4880 = vpop.f32.mrf.mxu0
        %v4881 = vadd.f32 %v4720, %v4880
        %v4882 = vpop.f32.mrf.mxu0
        %v4883 = vpop.f32.mrf.mxu0
        %v4884 = vadd.f32 %v4723, %v4883
        %v4885 = vpop.f32.mrf.mxu0
        %4886 = vmatprep.mubr.bf16.mxu0 0
        %4887 = vmatmul.mubr.bf16.gmra.mxu0 %v4390
        %v4888 = vpop.f32.mrf.mxu0
        %v4889 = vadd.f32 %v4728, %v4888
        %v4890 = vpop.f32.mrf.mxu0
        %v4891 = vpop.f32.mrf.mxu0
        %v4892 = vadd.f32 %v4731, %v4891
        %v4893 = vpop.f32.mrf.mxu0
        %4894 = vmatprep.mubr.bf16.mxu0 0
        %4895 = vmatmul.mubr.bf16.gmra.mxu0 %v4393
        %v4896 = vpop.f32.mrf.mxu0
        %v4897 = vadd.f32 %v4736, %v4896
        %v4898 = vpop.f32.mrf.mxu0
        %v4899 = vpop.f32.mrf.mxu0
        %v4900 = vadd.f32 %v4739, %v4899
        %v4901 = vpop.f32.mrf.mxu0
        %4902 = vmatprep.mubr.bf16.mxu0 0
        %4903 = vmatmul.mubr.bf16.gmra.mxu0 %v4396
        %v4904 = vpop.f32.mrf.mxu0
        %v4905 = vadd.f32 %v4744, %v4904
        %v4906 = vpop.f32.mrf.mxu0
        %v4907 = vpop.f32.mrf.mxu0
        %v4908 = vadd.f32 %v4747, %v4907
        %v4909 = vpop.f32.mrf.mxu0
        %4910 = vdwg.mxu0
        %v4915 = vunpack.c.l.b16 %v4024
        %v4916 = vunpack.c.h.b16 %v4024
        %v4917 = vunpack.c.l.b16 %v4025
        %v4918 = vunpack.c.l.b16 %v4026
        %v4919 = vunpack.c.h.b16 %v4026
        %v4920 = vunpack.c.l.b16 %v4027
        %v4921 = vpack.c.b16 %v4918, %v4915
        %v4922 = vpack.c.b16 %v4919, %v4916
        %v4923 = vpack.c.b16 %v4920, %v4917
        %v4975 = vunpack.c.l.b16 %v4088
        %v4976 = vunpack.c.l.b16 %v4089
        %v4977 = vunpack.c.l.b16 %v4090
        %v4978 = vunpack.c.l.b16 %v4091
        %v4979 = vunpack.c.l.b16 %v4092
        %v4980 = vunpack.c.l.b16 %v4093
        %v4981 = vunpack.c.l.b16 %v4094
        %v4982 = vunpack.c.l.b16 %v4095
        %v4983 = vunpack.c.l.b16 %v4096
        %v4984 = vunpack.c.l.b16 %v4097
        %v4985 = vunpack.c.l.b16 %v4098
        %v4986 = vunpack.c.l.b16 %v4099
        %v4987 = vunpack.c.l.b16 %v4100
        %v4988 = vunpack.c.l.b16 %v4101
        %v4989 = vunpack.c.l.b16 %v4102
        %v4990 = vunpack.c.l.b16 %v4103
        %v4991 = vunpack.c.l.b16 %v4104
        %v4992 = vunpack.c.l.b16 %v4105
        %v4993 = vunpack.c.l.b16 %v4106
        %v4994 = vunpack.c.l.b16 %v4107
        %v4995 = vunpack.c.l.b16 %v4108
        %v4996 = vunpack.c.l.b16 %v4109
        %v4997 = vunpack.c.l.b16 %v4110
        %v4998 = vunpack.c.l.b16 %v4111
        %v4999 = vunpack.c.l.b16 %v4112
        %v5000 = vunpack.c.l.b16 %v4113
        %v5001 = vunpack.c.l.b16 %v4114
        %v5002 = vunpack.c.l.b16 %v4115
        %v5003 = vunpack.c.l.b16 %v4116
        %v5004 = vunpack.c.l.b16 %v4117
        %v5005 = vunpack.c.l.b16 %v4118
        %v5006 = vunpack.c.l.b16 %v4119
        %v5007 = vunpack.c.l.b16 %v4120
        %v5008 = vunpack.c.l.b16 %v4121
        %v5009 = vunpack.c.l.b16 %v4122
        %v5010 = vunpack.c.l.b16 %v4123
        %v5011 = vunpack.c.l.b16 %v4124
        %v5012 = vunpack.c.l.b16 %v4125
        %v5013 = vunpack.c.l.b16 %v4126
        %v5014 = vunpack.c.l.b16 %v4127
        %v5015 = vunpack.c.l.b16 %v4128
        %v5016 = vunpack.c.l.b16 %v4129
        %v5017 = vunpack.c.l.b16 %v4130
        %v5018 = vunpack.c.l.b16 %v4131
        %v5019 = vunpack.c.l.b16 %v4132
        %v5020 = vunpack.c.l.b16 %v4133
        %v5021 = vunpack.c.l.b16 %v4134
        %v5022 = vunpack.c.l.b16 %v4135
        %v5023 = vpack.c.b16 %v4976, %v4975
        %v5024 = vpack.c.b16 %v4978, %v4977
        %v5025 = vpack.c.b16 %v4980, %v4979
        %v5026 = vpack.c.b16 %v4982, %v4981
        %v5027 = vpack.c.b16 %v4984, %v4983
        %v5028 = vpack.c.b16 %v4986, %v4985
        %v5029 = vpack.c.b16 %v4988, %v4987
        %v5030 = vpack.c.b16 %v4990, %v4989
        %v5031 = vpack.c.b16 %v4992, %v4991
        %v5032 = vpack.c.b16 %v4994, %v4993
        %v5033 = vpack.c.b16 %v4996, %v4995
        %v5034 = vpack.c.b16 %v4998, %v4997
        %v5035 = vpack.c.b16 %v5000, %v4999
        %v5036 = vpack.c.b16 %v5002, %v5001
        %v5037 = vpack.c.b16 %v5004, %v5003
        %v5038 = vpack.c.b16 %v5006, %v5005
        %v5039 = vpack.c.b16 %v5008, %v5007
        %v5040 = vpack.c.b16 %v5010, %v5009
        %v5041 = vpack.c.b16 %v5012, %v5011
        %v5042 = vpack.c.b16 %v5014, %v5013
        %v5043 = vpack.c.b16 %v5016, %v5015
        %v5044 = vpack.c.b16 %v5018, %v5017
        %v5045 = vpack.c.b16 %v5020, %v5019
        %v5046 = vpack.c.b16 %v5022, %v5021
        %5071 = vmatprep.subr.bf16.mxu0 0
        %5072 = vmatpush1.bf16.msra.mxu0 %v5030
        %5073 = vmatprep.subr.bf16.mxu0 0
        %5074 = vmatpush1.bf16.msra.mxu0 %v5029
        %5075 = vmatprep.subr.bf16.mxu0 0
        %5076 = vmatpush1.bf16.msra.mxu0 %v5028
        %5077 = vmatprep.subr.bf16.mxu0 0
        %5078 = vmatpush1.bf16.msra.mxu0 %v5027
        %5079 = vmatprep.subr.bf16.mxu0 0
        %5080 = vmatpush1.bf16.msra.mxu0 %v5026
        %5081 = vmatprep.subr.bf16.mxu0 0
        %5082 = vmatpush1.bf16.msra.mxu0 %v5025
        %5083 = vmatprep.subr.bf16.mxu0 0
        %5084 = vmatpush1.bf16.msra.mxu0 %v5024
        %5085 = vmatprep.subr.bf16.mxu0 0
        %5086 = vmatpush1.bf16.msra.mxu0 %v5023
        %5087 = vmatprep.subr.bf16.mxu0 0
        %5088 = vmatpush2.bf16.msra.mxu0 %v5038
        %5089 = vmatprep.subr.bf16.mxu0 0
        %5090 = vmatpush2.bf16.msra.mxu0 %v5037
        %5091 = vmatprep.subr.bf16.mxu0 0
        %5092 = vmatpush2.bf16.msra.mxu0 %v5036
        %5093 = vmatprep.subr.bf16.mxu0 0
        %5094 = vmatpush2.bf16.msra.mxu0 %v5035
        %5095 = vmatprep.subr.bf16.mxu0 0
        %5096 = vmatpush2.bf16.msra.mxu0 %v5034
        %5097 = vmatprep.subr.bf16.mxu0 0
        %5098 = vmatpush2.bf16.msra.mxu0 %v5033
        %5099 = vmatprep.subr.bf16.mxu0 0
        %5100 = vmatpush2.bf16.msra.mxu0 %v5032
        %5101 = vmatprep.subr.bf16.mxu0 0
        %5102 = vmatpush2.bf16.msra.mxu0 %v5031
        %5103 = vmatprep.mubr.bf16.mxu0 %v4922
        %5104 = vmatmul.mubr.bf16.gmra.mxu0 %v4921
        %v5105 = vpop.f32.mrf.mxu0
        %v5106 = vadd.f32 %v4785, %v5105
        %v5107 = vpop.f32.mrf.mxu0
        %v5108 = vpop.f32.mrf.mxu0
        %v5109 = vadd.f32 %v4788, %v5108
        %v5110 = vpop.f32.mrf.mxu0
        %5111 = vmatprep.mubr.bf16.mxu0 %v4350
        %5112 = vmatmul.mubr.bf16.gmra.mxu0 %v4349
        %v5113 = vpop.f32.mrf.mxu0
        %v5114 = vadd.f32 %v4793, %v5113
        %v5115 = vpop.f32.mrf.mxu0
        %v5116 = vpop.f32.mrf.mxu0
        %v5117 = vadd.f32 %v4796, %v5116
        %v5118 = vpop.f32.mrf.mxu0
        %5119 = vmatprep.mubr.bf16.mxu0 %v4353
        %5120 = vmatmul.mubr.bf16.gmra.mxu0 %v4352
        %v5121 = vpop.f32.mrf.mxu0
        %v5122 = vadd.f32 %v4801, %v5121
        %v5123 = vpop.f32.mrf.mxu0
        %v5124 = vpop.f32.mrf.mxu0
        %v5125 = vadd.f32 %v4804, %v5124
        %v5126 = vpop.f32.mrf.mxu0
        %5127 = vmatprep.mubr.bf16.mxu0 %v4356
        %5128 = vmatmul.mubr.bf16.gmra.mxu0 %v4355
        %v5129 = vpop.f32.mrf.mxu0
        %v5130 = vadd.f32 %v4809, %v5129
        %v5131 = vpop.f32.mrf.mxu0
        %v5132 = vpop.f32.mrf.mxu0
        %v5133 = vadd.f32 %v4812, %v5132
        %v5134 = vpop.f32.mrf.mxu0
        %5135 = vmatprep.mubr.bf16.mxu0 %v4359
        %5136 = vmatmul.mubr.bf16.gmra.mxu0 %v4358
        %v5137 = vpop.f32.mrf.mxu0
        %v5138 = vadd.f32 %v4817, %v5137
        %v5139 = vpop.f32.mrf.mxu0
        %v5140 = vpop.f32.mrf.mxu0
        %v5141 = vadd.f32 %v4820, %v5140
        %v5142 = vpop.f32.mrf.mxu0
        %5143 = vmatprep.mubr.bf16.mxu0 %v4362
        %5144 = vmatmul.mubr.bf16.gmra.mxu0 %v4361
        %v5145 = vpop.f32.mrf.mxu0
        %v5146 = vadd.f32 %v4825, %v5145
        %v5147 = vpop.f32.mrf.mxu0
        %v5148 = vpop.f32.mrf.mxu0
        %v5149 = vadd.f32 %v4828, %v5148
        %v5150 = vpop.f32.mrf.mxu0
        %5151 = vmatprep.mubr.bf16.mxu0 %v4365
        %5152 = vmatmul.mubr.bf16.gmra.mxu0 %v4364
        %v5153 = vpop.f32.mrf.mxu0
        %v5154 = vadd.f32 %v4833, %v5153
        %v5155 = vpop.f32.mrf.mxu0
        %v5156 = vpop.f32.mrf.mxu0
        %v5157 = vadd.f32 %v4836, %v5156
        %v5158 = vpop.f32.mrf.mxu0
        %5159 = vmatprep.mubr.bf16.mxu0 %v4368
        %5160 = vmatmul.mubr.bf16.gmra.mxu0 %v4367
        %v5161 = vpop.f32.mrf.mxu0
        %v5162 = vadd.f32 %v4841, %v5161
        %v5163 = vpop.f32.mrf.mxu0
        %v5164 = vpop.f32.mrf.mxu0
        %v5165 = vadd.f32 %v4844, %v5164
        %v5166 = vpop.f32.mrf.mxu0
        %5167 = vmatprep.mubr.bf16.mxu0 %v4371
        %5168 = vmatmul.mubr.bf16.gmra.mxu0 %v4370
        %v5169 = vpop.f32.mrf.mxu0
        %v5170 = vadd.f32 %v4849, %v5169
        %v5171 = vpop.f32.mrf.mxu0
        %v5172 = vpop.f32.mrf.mxu0
        %v5173 = vadd.f32 %v4852, %v5172
        %v5174 = vpop.f32.mrf.mxu0
        %5175 = vmatprep.mubr.bf16.mxu0 %v4374
        %5176 = vmatmul.mubr.bf16.gmra.mxu0 %v4373
        %v5177 = vpop.f32.mrf.mxu0
        %v5178 = vadd.f32 %v4857, %v5177
        %v5179 = vpop.f32.mrf.mxu0
        %v5180 = vpop.f32.mrf.mxu0
        %v5181 = vadd.f32 %v4860, %v5180
        %v5182 = vpop.f32.mrf.mxu0
        %5183 = vmatprep.mubr.bf16.mxu0 %v4377
        %5184 = vmatmul.mubr.bf16.gmra.mxu0 %v4376
        %v5185 = vpop.f32.mrf.mxu0
        %v5186 = vadd.f32 %v4865, %v5185
        %v5187 = vpop.f32.mrf.mxu0
        %v5188 = vpop.f32.mrf.mxu0
        %v5189 = vadd.f32 %v4868, %v5188
        %v5190 = vpop.f32.mrf.mxu0
        %5191 = vmatprep.mubr.bf16.mxu0 %v4380
        %5192 = vmatmul.mubr.bf16.gmra.mxu0 %v4379
        %v5193 = vpop.f32.mrf.mxu0
        %v5194 = vadd.f32 %v4873, %v5193
        %v5195 = vpop.f32.mrf.mxu0
        %v5196 = vpop.f32.mrf.mxu0
        %v5197 = vadd.f32 %v4876, %v5196
        %v5198 = vpop.f32.mrf.mxu0
        %5199 = vmatprep.mubr.bf16.mxu0 %v4383
        %5200 = vmatmul.mubr.bf16.gmra.mxu0 %v4382
        %v5201 = vpop.f32.mrf.mxu0
        %v5202 = vadd.f32 %v4881, %v5201
        %v5203 = vpop.f32.mrf.mxu0
        %v5204 = vpop.f32.mrf.mxu0
        %v5205 = vadd.f32 %v4884, %v5204
        %v5206 = vpop.f32.mrf.mxu0
        %5207 = vmatprep.mubr.bf16.mxu0 %v4386
        %5208 = vmatmul.mubr.bf16.gmra.mxu0 %v4385
        %v5209 = vpop.f32.mrf.mxu0
        %v5210 = vadd.f32 %v4889, %v5209
        %v5211 = vpop.f32.mrf.mxu0
        %v5212 = vpop.f32.mrf.mxu0
        %v5213 = vadd.f32 %v4892, %v5212
        %v5214 = vpop.f32.mrf.mxu0
        %5215 = vmatprep.mubr.bf16.mxu0 %v4389
        %5216 = vmatmul.mubr.bf16.gmra.mxu0 %v4388
        %v5217 = vpop.f32.mrf.mxu0
        %v5218 = vadd.f32 %v4897, %v5217
        %v5219 = vpop.f32.mrf.mxu0
        %v5220 = vpop.f32.mrf.mxu0
        %v5221 = vadd.f32 %v4900, %v5220
        %v5222 = vpop.f32.mrf.mxu0
        %5223 = vmatprep.mubr.bf16.mxu0 %v4392
        %5224 = vmatmul.mubr.bf16.gmra.mxu0 %v4391
        %v5225 = vpop.f32.mrf.mxu0
        %v5226 = vadd.f32 %v4905, %v5225
        %v5227 = vpop.f32.mrf.mxu0
        %v5228 = vpop.f32.mrf.mxu0
        %v5229 = vadd.f32 %v4908, %v5228
        %v5230 = vpop.f32.mrf.mxu0
        %5231 = vdwg.mxu0
        %5232 = vmatprep.subr.bf16.mxu0 0
        %5233 = vmatpush1.bf16.msra.mxu0 %v5046
        %5234 = vmatprep.subr.bf16.mxu0 0
        %5235 = vmatpush1.bf16.msra.mxu0 %v5045
        %5236 = vmatprep.subr.bf16.mxu0 0
        %5237 = vmatpush1.bf16.msra.mxu0 %v5044
        %5238 = vmatprep.subr.bf16.mxu0 0
        %5239 = vmatpush1.bf16.msra.mxu0 %v5043
        %5240 = vmatprep.subr.bf16.mxu0 0
        %5241 = vmatpush1.bf16.msra.mxu0 %v5042
        %5242 = vmatprep.subr.bf16.mxu0 0
        %5243 = vmatpush1.bf16.msra.mxu0 %v5041
        %5244 = vmatprep.subr.bf16.mxu0 0
        %5245 = vmatpush1.bf16.msra.mxu0 %v5040
        %5246 = vmatprep.subr.bf16.mxu0 0
        %5247 = vmatpush1.bf16.msra.mxu0 %v5039
        %5248 = vmatprep.subr.bf16.mxu0 0
        %5249 = vmatpush2.bf16.msra.mxu0 0
        %5250 = vmatprep.subr.bf16.mxu0 0
        %5251 = vmatpush2.bf16.msra.mxu0 0
        %5252 = vmatprep.subr.bf16.mxu0 0
        %5253 = vmatpush2.bf16.msra.mxu0 0
        %5254 = vmatprep.subr.bf16.mxu0 0
        %5255 = vmatpush2.bf16.msra.mxu0 0
        %5256 = vmatprep.subr.bf16.mxu0 0
        %5257 = vmatpush2.bf16.msra.mxu0 0
        %5258 = vmatprep.subr.bf16.mxu0 0
        %5259 = vmatpush2.bf16.msra.mxu0 0
        %5260 = vmatprep.subr.bf16.mxu0 0
        %5261 = vmatpush2.bf16.msra.mxu0 0
        %5262 = vmatprep.subr.bf16.mxu0 0
        %5263 = vmatpush2.bf16.msra.mxu0 0
        %5264 = vmatprep.mubr.bf16.mxu0 0
        %5265 = vmatmul.mubr.bf16.gmra.mxu0 %v4923
        %v5266 = vpop.f32.mrf.mxu0
        %v5267 = vadd.f32 %v5106, %v5266
        %v5268 = vpop.f32.mrf.mxu0
        %v5269 = vpop.f32.mrf.mxu0
        %v5270 = vadd.f32 %v5109, %v5269
        %v5271 = vpop.f32.mrf.mxu0
        %5272 = vmatprep.mubr.bf16.mxu0 0
        %5273 = vmatmul.mubr.bf16.gmra.mxu0 %v4351
        %v5274 = vpop.f32.mrf.mxu0
        %v5275 = vadd.f32 %v5114, %v5274
        %v5276 = vpop.f32.mrf.mxu0
        %v5277 = vpop.f32.mrf.mxu0
        %v5278 = vadd.f32 %v5117, %v5277
        %v5279 = vpop.f32.mrf.mxu0
        %5280 = vmatprep.mubr.bf16.mxu0 0
        %5281 = vmatmul.mubr.bf16.gmra.mxu0 %v4354
        %v5282 = vpop.f32.mrf.mxu0
        %v5283 = vadd.f32 %v5122, %v5282
        %v5284 = vpop.f32.mrf.mxu0
        %v5285 = vpop.f32.mrf.mxu0
        %v5286 = vadd.f32 %v5125, %v5285
        %v5287 = vpop.f32.mrf.mxu0
        %5288 = vmatprep.mubr.bf16.mxu0 0
        %5289 = vmatmul.mubr.bf16.gmra.mxu0 %v4357
        %v5290 = vpop.f32.mrf.mxu0
        %v5291 = vadd.f32 %v5130, %v5290
        %v5292 = vpop.f32.mrf.mxu0
        %v5293 = vpop.f32.mrf.mxu0
        %v5294 = vadd.f32 %v5133, %v5293
        %v5295 = vpop.f32.mrf.mxu0
        %5296 = vmatprep.mubr.bf16.mxu0 0
        %5297 = vmatmul.mubr.bf16.gmra.mxu0 %v4360
        %v5298 = vpop.f32.mrf.mxu0
        %v5299 = vadd.f32 %v5138, %v5298
        %v5300 = vpop.f32.mrf.mxu0
        %v5301 = vpop.f32.mrf.mxu0
        %v5302 = vadd.f32 %v5141, %v5301
        %v5303 = vpop.f32.mrf.mxu0
        %5304 = vmatprep.mubr.bf16.mxu0 0
        %5305 = vmatmul.mubr.bf16.gmra.mxu0 %v4363
        %v5306 = vpop.f32.mrf.mxu0
        %v5307 = vadd.f32 %v5146, %v5306
        %v5308 = vpop.f32.mrf.mxu0
        %v5309 = vpop.f32.mrf.mxu0
        %v5310 = vadd.f32 %v5149, %v5309
        %v5311 = vpop.f32.mrf.mxu0
        %5312 = vmatprep.mubr.bf16.mxu0 0
        %5313 = vmatmul.mubr.bf16.gmra.mxu0 %v4366
        %v5314 = vpop.f32.mrf.mxu0
        %v5315 = vadd.f32 %v5154, %v5314
        %v5316 = vpop.f32.mrf.mxu0
        %v5317 = vpop.f32.mrf.mxu0
        %v5318 = vadd.f32 %v5157, %v5317
        %v5319 = vpop.f32.mrf.mxu0
        %5320 = vmatprep.mubr.bf16.mxu0 0
        %5321 = vmatmul.mubr.bf16.gmra.mxu0 %v4369
        %v5322 = vpop.f32.mrf.mxu0
        %v5323 = vadd.f32 %v5162, %v5322
        %v5324 = vpop.f32.mrf.mxu0
        %v5325 = vpop.f32.mrf.mxu0
        %v5326 = vadd.f32 %v5165, %v5325
        %v5327 = vpop.f32.mrf.mxu0
        %5328 = vmatprep.mubr.bf16.mxu0 0
        %5329 = vmatmul.mubr.bf16.gmra.mxu0 %v4372
        %v5330 = vpop.f32.mrf.mxu0
        %v5331 = vadd.f32 %v5170, %v5330
        %v5332 = vpop.f32.mrf.mxu0
        %v5333 = vpop.f32.mrf.mxu0
        %v5334 = vadd.f32 %v5173, %v5333
        %v5335 = vpop.f32.mrf.mxu0
        %5336 = vmatprep.mubr.bf16.mxu0 0
        %5337 = vmatmul.mubr.bf16.gmra.mxu0 %v4375
        %v5338 = vpop.f32.mrf.mxu0
        %v5339 = vadd.f32 %v5178, %v5338
        %v5340 = vpop.f32.mrf.mxu0
        %v5341 = vpop.f32.mrf.mxu0
        %v5342 = vadd.f32 %v5181, %v5341
        %v5343 = vpop.f32.mrf.mxu0
        %5344 = vmatprep.mubr.bf16.mxu0 0
        %5345 = vmatmul.mubr.bf16.gmra.mxu0 %v4378
        %v5346 = vpop.f32.mrf.mxu0
        %v5347 = vadd.f32 %v5186, %v5346
        %v5348 = vpop.f32.mrf.mxu0
        %v5349 = vpop.f32.mrf.mxu0
        %v5350 = vadd.f32 %v5189, %v5349
        %v5351 = vpop.f32.mrf.mxu0
        %5352 = vmatprep.mubr.bf16.mxu0 0
        %5353 = vmatmul.mubr.bf16.gmra.mxu0 %v4381
        %v5354 = vpop.f32.mrf.mxu0
        %v5355 = vadd.f32 %v5194, %v5354
        %v5356 = vpop.f32.mrf.mxu0
        %v5357 = vpop.f32.mrf.mxu0
        %v5358 = vadd.f32 %v5197, %v5357
        %v5359 = vpop.f32.mrf.mxu0
        %5360 = vmatprep.mubr.bf16.mxu0 0
        %5361 = vmatmul.mubr.bf16.gmra.mxu0 %v4384
        %v5362 = vpop.f32.mrf.mxu0
        %v5363 = vadd.f32 %v5202, %v5362
        %v5364 = vpop.f32.mrf.mxu0
        %v5365 = vpop.f32.mrf.mxu0
        %v5366 = vadd.f32 %v5205, %v5365
        %v5367 = vpop.f32.mrf.mxu0
        %5368 = vmatprep.mubr.bf16.mxu0 0
        %5369 = vmatmul.mubr.bf16.gmra.mxu0 %v4387
        %v5370 = vpop.f32.mrf.mxu0
        %v5371 = vadd.f32 %v5210, %v5370
        %v5372 = vpop.f32.mrf.mxu0
        %v5373 = vpop.f32.mrf.mxu0
        %v5374 = vadd.f32 %v5213, %v5373
        %v5375 = vpop.f32.mrf.mxu0
        %5376 = vmatprep.mubr.bf16.mxu0 0
        %5377 = vmatmul.mubr.bf16.gmra.mxu0 %v4390
        %v5378 = vpop.f32.mrf.mxu0
        %v5379 = vadd.f32 %v5218, %v5378
        %v5380 = vpop.f32.mrf.mxu0
        %v5381 = vpop.f32.mrf.mxu0
        %v5382 = vadd.f32 %v5221, %v5381
        %v5383 = vpop.f32.mrf.mxu0
        %5384 = vmatprep.mubr.bf16.mxu0 0
        %5385 = vmatmul.mubr.bf16.gmra.mxu0 %v4393
        %v5386 = vpop.f32.mrf.mxu0
        %v5387 = vadd.f32 %v5226, %v5386
        %v5388 = vpop.f32.mrf.mxu0
        %v5389 = vpop.f32.mrf.mxu0
        %v5390 = vadd.f32 %v5229, %v5389
        %v5391 = vpop.f32.mrf.mxu0
        %5392 = vdwg.mxu0
        %v5393 = vld [vmem:[#allocation2 + $0x30] sm:$0xff]
        %v5394 = vld [vmem:[#allocation2 + $0x38] sm:$0xf]
        %v5395 = vld [vmem:[#allocation2 + $0x3c] sm:$0xff]
        %v5396 = vld [vmem:[#allocation2 + $0x44] sm:$0xf]
        %v5397 = vld [vmem:[#allocation2 + $0x48] sm:$0xff]
        %v5398 = vld [vmem:[#allocation2 + $0x50] sm:$0xf]
        %v5399 = vld [vmem:[#allocation2 + $0x54] sm:$0xff]
        %v5400 = vld [vmem:[#allocation2 + $0x5c] sm:$0xf]
        %v5401 = vld [vmem:[#allocation2 + $0x60] sm:$0xff]
        %v5402 = vld [vmem:[#allocation2 + $0x68] sm:$0xf]
        %v5403 = vld [vmem:[#allocation2 + $0x6c] sm:$0xff]
        %v5404 = vld [vmem:[#allocation2 + $0x74] sm:$0xf]
        %v5405 = vld [vmem:[#allocation2 + $0x78] sm:$0xff]
        %v5406 = vld [vmem:[#allocation2 + $0x80] sm:$0xf]
        %v5407 = vld [vmem:[#allocation2 + $0x84] sm:$0xff]
        %v5408 = vld [vmem:[#allocation2 + $0x8c] sm:$0xf]
        %v5409 = vld [vmem:[#allocation2 + $0x90] sm:$0xff]
        %v5410 = vld [vmem:[#allocation2 + $0x98] sm:$0xf]
        %v5411 = vld [vmem:[#allocation2 + $0x9c] sm:$0xff]
        %v5412 = vld [vmem:[#allocation2 + $0xa4] sm:$0xf]
        %v5413 = vld [vmem:[#allocation2 + $0xa8] sm:$0xff]
        %v5414 = vld [vmem:[#allocation2 + $0xb0] sm:$0xf]
        %v5415 = vld [vmem:[#allocation2 + $0xb4] sm:$0xff]
        %v5416 = vld [vmem:[#allocation2 + $0xbc] sm:$0xf]
        %v5417 = vld [vmem:[#allocation2 + $0xc0] sm:$0xff]
        %v5418 = vld [vmem:[#allocation2 + $0xc8] sm:$0xf]
        %v5419 = vld [vmem:[#allocation2 + $0xcc] sm:$0xff]
        %v5420 = vld [vmem:[#allocation2 + $0xd4] sm:$0xf]
        %v5421 = vld [vmem:[#allocation2 + $0xd8] sm:$0xff]
        %v5422 = vld [vmem:[#allocation2 + $0xe0] sm:$0xf]
        %v5423 = vld [vmem:[#allocation2 + $0xe4] sm:$0xff]
        %v5424 = vld [vmem:[#allocation2 + $0xec] sm:$0xf]
        %v5425 = vld [vmem:[#allocation2 + $0xf0] sm:$0xff]
        %v5426 = vld [vmem:[#allocation2 + $0xf8] sm:$0xf]
        %v5427 = vld [vmem:[#allocation2 + $0xfc] sm:$0xff]
        %v5428 = vld [vmem:[#allocation2 + $0x104] sm:$0xf]
        %v5429 = vld [vmem:[#allocation2 + $0x108] sm:$0xff]
        %v5430 = vld [vmem:[#allocation2 + $0x110] sm:$0xf]
        %v5431 = vld [vmem:[#allocation2 + $0x114] sm:$0xff]
        %v5432 = vld [vmem:[#allocation2 + $0x11c] sm:$0xf]
        %v5433 = vld [vmem:[#allocation2 + $0x120] sm:$0xff]
        %v5434 = vld [vmem:[#allocation2 + $0x128] sm:$0xf]
        %v5435 = vld [vmem:[#allocation2 + $0x12c] sm:$0xff]
        %v5436 = vld [vmem:[#allocation2 + $0x134] sm:$0xf]
        %v5437 = vld [vmem:[#allocation2 + $0x138] sm:$0xff]
        %v5438 = vld [vmem:[#allocation2 + $0x140] sm:$0xf]
        %v5439 = vld [vmem:[#allocation2 + $0x144] sm:$0xff]
        %v5440 = vld [vmem:[#allocation2 + $0x14c] sm:$0xf]
        %v5441 = vld [vmem:[#allocation2 + $0x150] sm:$0xff]
        %v5442 = vld [vmem:[#allocation2 + $0x158] sm:$0xf]
        %v5443 = vld [vmem:[#allocation2 + $0x15c] sm:$0xff]
        %v5444 = vld [vmem:[#allocation2 + $0x164] sm:$0xf]
        %v5445 = vld [vmem:[#allocation2 + $0x168] sm:$0xff]
        %v5446 = vld [vmem:[#allocation2 + $0x170] sm:$0xf]
        %v5447 = vld [vmem:[#allocation2 + $0x174] sm:$0xff]
        %v5448 = vld [vmem:[#allocation2 + $0x17c] sm:$0xf]
        %v5449 = vld [vmem:[#allocation2 + $0x180] sm:$0xff]
        %v5450 = vld [vmem:[#allocation2 + $0x188] sm:$0xf]
        %v5451 = vld [vmem:[#allocation2 + $0x18c] sm:$0xff]
        %v5452 = vld [vmem:[#allocation2 + $0x194] sm:$0xf]
        %v5453 = vld [vmem:[#allocation2 + $0x198] sm:$0xff]
        %v5454 = vld [vmem:[#allocation2 + $0x1a0] sm:$0xf]
        %v5455 = vld [vmem:[#allocation2 + $0x1a4] sm:$0xff]
        %v5456 = vld [vmem:[#allocation2 + $0x1ac] sm:$0xf]
        %s5457 = scalar_lea.vmem %s4, 384
        %v5458 = vld [vmem:[%s5457] sm:$0xf]
        %v5459 = vld [vmem:[%s5457 + $0x4] sm:$0xf]
        %v5460 = vld [vmem:[%s5457 + $0x8] sm:$0xf]
        %v5461 = vld [vmem:[%s5457 + $0xc] sm:$0xf]
        %v5462 = vld [vmem:[%s5457 + $0x10] sm:$0xf]
        %v5463 = vld [vmem:[%s5457 + $0x14] sm:$0xf]
        %v5464 = vld [vmem:[%s5457 + $0x18] sm:$0xf]
        %v5465 = vld [vmem:[%s5457 + $0x1c] sm:$0xf]
        %v5466 = vld [vmem:[%s5457 + $0x20] sm:$0xf]
        %v5467 = vld [vmem:[%s5457 + $0x24] sm:$0xf]
        %v5468 = vld [vmem:[%s5457 + $0x28] sm:$0xf]
        %v5469 = vld [vmem:[%s5457 + $0x2c] sm:$0xf]
        %v5470 = vld [vmem:[%s5457 + $0x30] sm:$0xf]
        %v5471 = vld [vmem:[%s5457 + $0x34] sm:$0xf]
        %v5472 = vld [vmem:[%s5457 + $0x38] sm:$0xf]
        %v5473 = vld [vmem:[%s5457 + $0x3c] sm:$0xf]
        %v5474 = vld [vmem:[%s5457 + $0x40] sm:$0xf]
        %v5475 = vld [vmem:[%s5457 + $0x44] sm:$0xf]
        %v5476 = vld [vmem:[%s5457 + $0x48] sm:$0xf]
        %v5477 = vld [vmem:[%s5457 + $0x4c] sm:$0xf]
        %v5478 = vld [vmem:[%s5457 + $0x50] sm:$0xf]
        %v5479 = vld [vmem:[%s5457 + $0x54] sm:$0xf]
        %v5480 = vld [vmem:[%s5457 + $0x58] sm:$0xf]
        %v5481 = vld [vmem:[%s5457 + $0x5c] sm:$0xf]
        %v5482 = vld [vmem:[%s5457 + $0x60] sm:$0xf]
        %v5483 = vld [vmem:[%s5457 + $0x64] sm:$0xf]
        %v5484 = vld [vmem:[%s5457 + $0x68] sm:$0xf]
        %v5485 = vld [vmem:[%s5457 + $0x6c] sm:$0xf]
        %v5486 = vld [vmem:[%s5457 + $0x70] sm:$0xf]
        %v5487 = vld [vmem:[%s5457 + $0x74] sm:$0xf]
        %v5488 = vld [vmem:[%s5457 + $0x78] sm:$0xf]
        %v5489 = vld [vmem:[%s5457 + $0x7c] sm:$0xf]
        %v5490 = vld [vmem:[%s5457 + $0x80] sm:$0xf]
        %v5491 = vld [vmem:[%s5457 + $0x84] sm:$0xf]
        %v5492 = vld [vmem:[%s5457 + $0x88] sm:$0xf]
        %v5493 = vld [vmem:[%s5457 + $0x8c] sm:$0xf]
        %v5494 = vld [vmem:[%s5457 + $0x90] sm:$0xf]
        %v5495 = vld [vmem:[%s5457 + $0x94] sm:$0xf]
        %v5496 = vld [vmem:[%s5457 + $0x98] sm:$0xf]
        %v5497 = vld [vmem:[%s5457 + $0x9c] sm:$0xf]
        %v5498 = vld [vmem:[%s5457 + $0xa0] sm:$0xf]
        %v5499 = vld [vmem:[%s5457 + $0xa4] sm:$0xf]
        %v5500 = vld [vmem:[%s5457 + $0xa8] sm:$0xf]
        %v5501 = vld [vmem:[%s5457 + $0xac] sm:$0xf]
        %v5502 = vld [vmem:[%s5457 + $0xb0] sm:$0xf]
        %v5503 = vld [vmem:[%s5457 + $0xb4] sm:$0xf]
        %v5504 = vld [vmem:[%s5457 + $0xb8] sm:$0xf]
        %v5505 = vld [vmem:[%s5457 + $0xbc] sm:$0xf]
        %v5570 = vunpack.c.l.b16 %v5393
        %v5571 = vunpack.c.h.b16 %v5393
        %v5572 = vunpack.c.l.b16 %v5394
        %v5573 = vunpack.c.l.b16 %v5395
        %v5574 = vunpack.c.h.b16 %v5395
        %v5575 = vunpack.c.l.b16 %v5396
        %v5576 = vunpack.c.l.b16 %v5397
        %v5577 = vunpack.c.h.b16 %v5397
        %v5578 = vunpack.c.l.b16 %v5398
        %v5579 = vunpack.c.l.b16 %v5399
        %v5580 = vunpack.c.h.b16 %v5399
        %v5581 = vunpack.c.l.b16 %v5400
        %v5582 = vunpack.c.l.b16 %v5401
        %v5583 = vunpack.c.h.b16 %v5401
        %v5584 = vunpack.c.l.b16 %v5402
        %v5585 = vunpack.c.l.b16 %v5403
        %v5586 = vunpack.c.h.b16 %v5403
        %v5587 = vunpack.c.l.b16 %v5404
        %v5588 = vunpack.c.l.b16 %v5405
        %v5589 = vunpack.c.h.b16 %v5405
        %v5590 = vunpack.c.l.b16 %v5406
        %v5591 = vunpack.c.l.b16 %v5407
        %v5592 = vunpack.c.h.b16 %v5407
        %v5593 = vunpack.c.l.b16 %v5408
        %v5594 = vunpack.c.l.b16 %v5409
        %v5595 = vunpack.c.h.b16 %v5409
        %v5596 = vunpack.c.l.b16 %v5410
        %v5597 = vunpack.c.l.b16 %v5411
        %v5598 = vunpack.c.h.b16 %v5411
        %v5599 = vunpack.c.l.b16 %v5412
        %v5600 = vunpack.c.l.b16 %v5413
        %v5601 = vunpack.c.h.b16 %v5413
        %v5602 = vunpack.c.l.b16 %v5414
        %v5603 = vunpack.c.l.b16 %v5415
        %v5604 = vunpack.c.h.b16 %v5415
        %v5605 = vunpack.c.l.b16 %v5416
        %v5606 = vunpack.c.l.b16 %v5417
        %v5607 = vunpack.c.h.b16 %v5417
        %v5608 = vunpack.c.l.b16 %v5418
        %v5609 = vunpack.c.l.b16 %v5419
        %v5610 = vunpack.c.h.b16 %v5419
        %v5611 = vunpack.c.l.b16 %v5420
        %v5612 = vunpack.c.l.b16 %v5421
        %v5613 = vunpack.c.h.b16 %v5421
        %v5614 = vunpack.c.l.b16 %v5422
        %v5615 = vunpack.c.l.b16 %v5423
        %v5616 = vunpack.c.h.b16 %v5423
        %v5617 = vunpack.c.l.b16 %v5424
        %v5618 = vunpack.c.l.b16 %v5425
        %v5619 = vunpack.c.h.b16 %v5425
        %v5620 = vunpack.c.l.b16 %v5426
        %v5621 = vunpack.c.l.b16 %v5427
        %v5622 = vunpack.c.h.b16 %v5427
        %v5623 = vunpack.c.l.b16 %v5428
        %v5624 = vunpack.c.l.b16 %v5429
        %v5625 = vunpack.c.h.b16 %v5429
        %v5626 = vunpack.c.l.b16 %v5430
        %v5627 = vunpack.c.l.b16 %v5431
        %v5628 = vunpack.c.h.b16 %v5431
        %v5629 = vunpack.c.l.b16 %v5432
        %v5630 = vunpack.c.l.b16 %v5433
        %v5631 = vunpack.c.h.b16 %v5433
        %v5632 = vunpack.c.l.b16 %v5434
        %v5633 = vunpack.c.l.b16 %v5435
        %v5634 = vunpack.c.h.b16 %v5435
        %v5635 = vunpack.c.l.b16 %v5436
        %v5636 = vunpack.c.l.b16 %v5437
        %v5637 = vunpack.c.h.b16 %v5437
        %v5638 = vunpack.c.l.b16 %v5438
        %v5639 = vunpack.c.l.b16 %v5439
        %v5640 = vunpack.c.h.b16 %v5439
        %v5641 = vunpack.c.l.b16 %v5440
        %v5642 = vunpack.c.l.b16 %v5441
        %v5643 = vunpack.c.h.b16 %v5441
        %v5644 = vunpack.c.l.b16 %v5442
        %v5645 = vunpack.c.l.b16 %v5443
        %v5646 = vunpack.c.h.b16 %v5443
        %v5647 = vunpack.c.l.b16 %v5444
        %v5648 = vunpack.c.l.b16 %v5445
        %v5649 = vunpack.c.h.b16 %v5445
        %v5650 = vunpack.c.l.b16 %v5446
        %v5651 = vunpack.c.l.b16 %v5447
        %v5652 = vunpack.c.h.b16 %v5447
        %v5653 = vunpack.c.l.b16 %v5448
        %v5654 = vunpack.c.l.b16 %v5449
        %v5655 = vunpack.c.h.b16 %v5449
        %v5656 = vunpack.c.l.b16 %v5450
        %v5657 = vunpack.c.l.b16 %v5451
        %v5658 = vunpack.c.h.b16 %v5451
        %v5659 = vunpack.c.l.b16 %v5452
        %v5660 = vunpack.c.l.b16 %v5453
        %v5661 = vunpack.c.h.b16 %v5453
        %v5662 = vunpack.c.l.b16 %v5454
        %v5663 = vunpack.c.l.b16 %v5455
        %v5664 = vunpack.c.h.b16 %v5455
        %v5665 = vunpack.c.l.b16 %v5456
        %v5666 = vpack.c.b16 %v5573, %v5570
        %v5667 = vpack.c.b16 %v5574, %v5571
        %v5668 = vpack.c.b16 %v5575, %v5572
        %v5669 = vpack.c.b16 %v5579, %v5576
        %v5670 = vpack.c.b16 %v5580, %v5577
        %v5671 = vpack.c.b16 %v5581, %v5578
        %v5672 = vpack.c.b16 %v5585, %v5582
        %v5673 = vpack.c.b16 %v5586, %v5583
        %v5674 = vpack.c.b16 %v5587, %v5584
        %v5675 = vpack.c.b16 %v5591, %v5588
        %v5676 = vpack.c.b16 %v5592, %v5589
        %v5677 = vpack.c.b16 %v5593, %v5590
        %v5678 = vpack.c.b16 %v5597, %v5594
        %v5679 = vpack.c.b16 %v5598, %v5595
        %v5680 = vpack.c.b16 %v5599, %v5596
        %v5681 = vpack.c.b16 %v5603, %v5600
        %v5682 = vpack.c.b16 %v5604, %v5601
        %v5683 = vpack.c.b16 %v5605, %v5602
        %v5684 = vpack.c.b16 %v5609, %v5606
        %v5685 = vpack.c.b16 %v5610, %v5607
        %v5686 = vpack.c.b16 %v5611, %v5608
        %v5687 = vpack.c.b16 %v5615, %v5612
        %v5688 = vpack.c.b16 %v5616, %v5613
        %v5689 = vpack.c.b16 %v5617, %v5614
        %v5690 = vpack.c.b16 %v5621, %v5618
        %v5691 = vpack.c.b16 %v5622, %v5619
        %v5692 = vpack.c.b16 %v5623, %v5620
        %v5693 = vpack.c.b16 %v5627, %v5624
        %v5694 = vpack.c.b16 %v5628, %v5625
        %v5695 = vpack.c.b16 %v5629, %v5626
        %v5696 = vpack.c.b16 %v5633, %v5630
        %v5697 = vpack.c.b16 %v5634, %v5631
        %v5698 = vpack.c.b16 %v5635, %v5632
        %v5699 = vpack.c.b16 %v5639, %v5636
        %v5700 = vpack.c.b16 %v5640, %v5637
        %v5701 = vpack.c.b16 %v5641, %v5638
        %v5702 = vpack.c.b16 %v5645, %v5642
        %v5703 = vpack.c.b16 %v5646, %v5643
        %v5704 = vpack.c.b16 %v5647, %v5644
        %v5705 = vpack.c.b16 %v5651, %v5648
        %v5706 = vpack.c.b16 %v5652, %v5649
        %v5707 = vpack.c.b16 %v5653, %v5650
        %v5708 = vpack.c.b16 %v5657, %v5654
        %v5709 = vpack.c.b16 %v5658, %v5655
        %v5710 = vpack.c.b16 %v5659, %v5656
        %v5711 = vpack.c.b16 %v5663, %v5660
        %v5712 = vpack.c.b16 %v5664, %v5661
        %v5713 = vpack.c.b16 %v5665, %v5662
        %v5810 = vunpack.c.l.b16 %v5458
        %v5811 = vunpack.c.l.b16 %v5459
        %v5812 = vunpack.c.l.b16 %v5460
        %v5813 = vunpack.c.l.b16 %v5461
        %v5814 = vunpack.c.l.b16 %v5462
        %v5815 = vunpack.c.l.b16 %v5463
        %v5816 = vunpack.c.l.b16 %v5464
        %v5817 = vunpack.c.l.b16 %v5465
        %v5818 = vunpack.c.l.b16 %v5466
        %v5819 = vunpack.c.l.b16 %v5467
        %v5820 = vunpack.c.l.b16 %v5468
        %v5821 = vunpack.c.l.b16 %v5469
        %v5822 = vunpack.c.l.b16 %v5470
        %v5823 = vunpack.c.l.b16 %v5471
        %v5824 = vunpack.c.l.b16 %v5472
        %v5825 = vunpack.c.l.b16 %v5473
        %v5826 = vunpack.c.l.b16 %v5474
        %v5827 = vunpack.c.l.b16 %v5475
        %v5828 = vunpack.c.l.b16 %v5476
        %v5829 = vunpack.c.l.b16 %v5477
        %v5830 = vunpack.c.l.b16 %v5478
        %v5831 = vunpack.c.l.b16 %v5479
        %v5832 = vunpack.c.l.b16 %v5480
        %v5833 = vunpack.c.l.b16 %v5481
        %v5834 = vunpack.c.l.b16 %v5482
        %v5835 = vunpack.c.l.b16 %v5483
        %v5836 = vunpack.c.l.b16 %v5484
        %v5837 = vunpack.c.l.b16 %v5485
        %v5838 = vunpack.c.l.b16 %v5486
        %v5839 = vunpack.c.l.b16 %v5487
        %v5840 = vunpack.c.l.b16 %v5488
        %v5841 = vunpack.c.l.b16 %v5489
        %v5842 = vunpack.c.l.b16 %v5490
        %v5843 = vunpack.c.l.b16 %v5491
        %v5844 = vunpack.c.l.b16 %v5492
        %v5845 = vunpack.c.l.b16 %v5493
        %v5846 = vunpack.c.l.b16 %v5494
        %v5847 = vunpack.c.l.b16 %v5495
        %v5848 = vunpack.c.l.b16 %v5496
        %v5849 = vunpack.c.l.b16 %v5497
        %v5850 = vunpack.c.l.b16 %v5498
        %v5851 = vunpack.c.l.b16 %v5499
        %v5852 = vunpack.c.l.b16 %v5500
        %v5853 = vunpack.c.l.b16 %v5501
        %v5854 = vunpack.c.l.b16 %v5502
        %v5855 = vunpack.c.l.b16 %v5503
        %v5856 = vunpack.c.l.b16 %v5504
        %v5857 = vunpack.c.l.b16 %v5505
        %v5858 = vpack.c.b16 %v5811, %v5810
        %v5859 = vpack.c.b16 %v5813, %v5812
        %v5860 = vpack.c.b16 %v5815, %v5814
        %v5861 = vpack.c.b16 %v5817, %v5816
        %v5862 = vpack.c.b16 %v5819, %v5818
        %v5863 = vpack.c.b16 %v5821, %v5820
        %v5864 = vpack.c.b16 %v5823, %v5822
        %v5865 = vpack.c.b16 %v5825, %v5824
        %v5866 = vpack.c.b16 %v5827, %v5826
        %v5867 = vpack.c.b16 %v5829, %v5828
        %v5868 = vpack.c.b16 %v5831, %v5830
        %v5869 = vpack.c.b16 %v5833, %v5832
        %v5870 = vpack.c.b16 %v5835, %v5834
        %v5871 = vpack.c.b16 %v5837, %v5836
        %v5872 = vpack.c.b16 %v5839, %v5838
        %v5873 = vpack.c.b16 %v5841, %v5840
        %v5874 = vpack.c.b16 %v5843, %v5842
        %v5875 = vpack.c.b16 %v5845, %v5844
        %v5876 = vpack.c.b16 %v5847, %v5846
        %v5877 = vpack.c.b16 %v5849, %v5848
        %v5878 = vpack.c.b16 %v5851, %v5850
        %v5879 = vpack.c.b16 %v5853, %v5852
        %v5880 = vpack.c.b16 %v5855, %v5854
        %v5881 = vpack.c.b16 %v5857, %v5856
        %5906 = vmatprep.subr.bf16.mxu0 0
        %5907 = vmatpush1.bf16.msra.mxu0 %v5865
        %5908 = vmatprep.subr.bf16.mxu0 0
        %5909 = vmatpush1.bf16.msra.mxu0 %v5864
        %5910 = vmatprep.subr.bf16.mxu0 0
        %5911 = vmatpush1.bf16.msra.mxu0 %v5863
        %5912 = vmatprep.subr.bf16.mxu0 0
        %5913 = vmatpush1.bf16.msra.mxu0 %v5862
        %5914 = vmatprep.subr.bf16.mxu0 0
        %5915 = vmatpush1.bf16.msra.mxu0 %v5861
        %5916 = vmatprep.subr.bf16.mxu0 0
        %5917 = vmatpush1.bf16.msra.mxu0 %v5860
        %5918 = vmatprep.subr.bf16.mxu0 0
        %5919 = vmatpush1.bf16.msra.mxu0 %v5859
        %5920 = vmatprep.subr.bf16.mxu0 0
        %5921 = vmatpush1.bf16.msra.mxu0 %v5858
        %5922 = vmatprep.subr.bf16.mxu0 0
        %5923 = vmatpush2.bf16.msra.mxu0 %v5873
        %5924 = vmatprep.subr.bf16.mxu0 0
        %5925 = vmatpush2.bf16.msra.mxu0 %v5872
        %5926 = vmatprep.subr.bf16.mxu0 0
        %5927 = vmatpush2.bf16.msra.mxu0 %v5871
        %5928 = vmatprep.subr.bf16.mxu0 0
        %5929 = vmatpush2.bf16.msra.mxu0 %v5870
        %5930 = vmatprep.subr.bf16.mxu0 0
        %5931 = vmatpush2.bf16.msra.mxu0 %v5869
        %5932 = vmatprep.subr.bf16.mxu0 0
        %5933 = vmatpush2.bf16.msra.mxu0 %v5868
        %5934 = vmatprep.subr.bf16.mxu0 0
        %5935 = vmatpush2.bf16.msra.mxu0 %v5867
        %5936 = vmatprep.subr.bf16.mxu0 0
        %5937 = vmatpush2.bf16.msra.mxu0 %v5866
        %5938 = vmatprep.mubr.bf16.mxu0 %v5667
        %5939 = vmatmul.mubr.bf16.gmra.mxu0 %v5666
        %v5940 = vpop.f32.mrf.mxu0
        %v5941 = vadd.f32 0.0, %v5940
        %v5942 = vpop.f32.mrf.mxu0
        %v5943 = vpop.f32.mrf.mxu0
        %v5944 = vadd.f32 0.0, %v5943
        %v5945 = vpop.f32.mrf.mxu0
        %5946 = vmatprep.mubr.bf16.mxu0 %v5670
        %5947 = vmatmul.mubr.bf16.gmra.mxu0 %v5669
        %v5948 = vpop.f32.mrf.mxu0
        %v5949 = vadd.f32 0.0, %v5948
        %v5950 = vpop.f32.mrf.mxu0
        %v5951 = vpop.f32.mrf.mxu0
        %v5952 = vadd.f32 0.0, %v5951
        %v5953 = vpop.f32.mrf.mxu0
        %5954 = vmatprep.mubr.bf16.mxu0 %v5673
        %5955 = vmatmul.mubr.bf16.gmra.mxu0 %v5672
        %v5956 = vpop.f32.mrf.mxu0
        %v5957 = vadd.f32 0.0, %v5956
        %v5958 = vpop.f32.mrf.mxu0
        %v5959 = vpop.f32.mrf.mxu0
        %v5960 = vadd.f32 0.0, %v5959
        %v5961 = vpop.f32.mrf.mxu0
        %5962 = vmatprep.mubr.bf16.mxu0 %v5676
        %5963 = vmatmul.mubr.bf16.gmra.mxu0 %v5675
        %v5964 = vpop.f32.mrf.mxu0
        %v5965 = vadd.f32 0.0, %v5964
        %v5966 = vpop.f32.mrf.mxu0
        %v5967 = vpop.f32.mrf.mxu0
        %v5968 = vadd.f32 0.0, %v5967
        %v5969 = vpop.f32.mrf.mxu0
        %5970 = vmatprep.mubr.bf16.mxu0 %v5679
        %5971 = vmatmul.mubr.bf16.gmra.mxu0 %v5678
        %v5972 = vpop.f32.mrf.mxu0
        %v5973 = vadd.f32 0.0, %v5972
        %v5974 = vpop.f32.mrf.mxu0
        %v5975 = vpop.f32.mrf.mxu0
        %v5976 = vadd.f32 0.0, %v5975
        %v5977 = vpop.f32.mrf.mxu0
        %5978 = vmatprep.mubr.bf16.mxu0 %v5682
        %5979 = vmatmul.mubr.bf16.gmra.mxu0 %v5681
        %v5980 = vpop.f32.mrf.mxu0
        %v5981 = vadd.f32 0.0, %v5980
        %v5982 = vpop.f32.mrf.mxu0
        %v5983 = vpop.f32.mrf.mxu0
        %v5984 = vadd.f32 0.0, %v5983
        %v5985 = vpop.f32.mrf.mxu0
        %5986 = vmatprep.mubr.bf16.mxu0 %v5685
        %5987 = vmatmul.mubr.bf16.gmra.mxu0 %v5684
        %v5988 = vpop.f32.mrf.mxu0
        %v5989 = vadd.f32 0.0, %v5988
        %v5990 = vpop.f32.mrf.mxu0
        %v5991 = vpop.f32.mrf.mxu0
        %v5992 = vadd.f32 0.0, %v5991
        %v5993 = vpop.f32.mrf.mxu0
        %5994 = vmatprep.mubr.bf16.mxu0 %v5688
        %5995 = vmatmul.mubr.bf16.gmra.mxu0 %v5687
        %v5996 = vpop.f32.mrf.mxu0
        %v5997 = vadd.f32 0.0, %v5996
        %v5998 = vpop.f32.mrf.mxu0
        %v5999 = vpop.f32.mrf.mxu0
        %v6000 = vadd.f32 0.0, %v5999
        %v6001 = vpop.f32.mrf.mxu0
        %6002 = vmatprep.mubr.bf16.mxu0 %v5691
        %6003 = vmatmul.mubr.bf16.gmra.mxu0 %v5690
        %v6004 = vpop.f32.mrf.mxu0
        %v6005 = vadd.f32 0.0, %v6004
        %v6006 = vpop.f32.mrf.mxu0
        %v6007 = vpop.f32.mrf.mxu0
        %v6008 = vadd.f32 0.0, %v6007
        %v6009 = vpop.f32.mrf.mxu0
        %6010 = vmatprep.mubr.bf16.mxu0 %v5694
        %6011 = vmatmul.mubr.bf16.gmra.mxu0 %v5693
        %v6012 = vpop.f32.mrf.mxu0
        %v6013 = vadd.f32 0.0, %v6012
        %v6014 = vpop.f32.mrf.mxu0
        %v6015 = vpop.f32.mrf.mxu0
        %v6016 = vadd.f32 0.0, %v6015
        %v6017 = vpop.f32.mrf.mxu0
        %6018 = vmatprep.mubr.bf16.mxu0 %v5697
        %6019 = vmatmul.mubr.bf16.gmra.mxu0 %v5696
        %v6020 = vpop.f32.mrf.mxu0
        %v6021 = vadd.f32 0.0, %v6020
        %v6022 = vpop.f32.mrf.mxu0
        %v6023 = vpop.f32.mrf.mxu0
        %v6024 = vadd.f32 0.0, %v6023
        %v6025 = vpop.f32.mrf.mxu0
        %6026 = vmatprep.mubr.bf16.mxu0 %v5700
        %6027 = vmatmul.mubr.bf16.gmra.mxu0 %v5699
        %v6028 = vpop.f32.mrf.mxu0
        %v6029 = vadd.f32 0.0, %v6028
        %v6030 = vpop.f32.mrf.mxu0
        %v6031 = vpop.f32.mrf.mxu0
        %v6032 = vadd.f32 0.0, %v6031
        %v6033 = vpop.f32.mrf.mxu0
        %6034 = vmatprep.mubr.bf16.mxu0 %v5703
        %6035 = vmatmul.mubr.bf16.gmra.mxu0 %v5702
        %v6036 = vpop.f32.mrf.mxu0
        %v6037 = vadd.f32 0.0, %v6036
        %v6038 = vpop.f32.mrf.mxu0
        %v6039 = vpop.f32.mrf.mxu0
        %v6040 = vadd.f32 0.0, %v6039
        %v6041 = vpop.f32.mrf.mxu0
        %6042 = vmatprep.mubr.bf16.mxu0 %v5706
        %6043 = vmatmul.mubr.bf16.gmra.mxu0 %v5705
        %v6044 = vpop.f32.mrf.mxu0
        %v6045 = vadd.f32 0.0, %v6044
        %v6046 = vpop.f32.mrf.mxu0
        %v6047 = vpop.f32.mrf.mxu0
        %v6048 = vadd.f32 0.0, %v6047
        %v6049 = vpop.f32.mrf.mxu0
        %6050 = vmatprep.mubr.bf16.mxu0 %v5709
        %6051 = vmatmul.mubr.bf16.gmra.mxu0 %v5708
        %v6052 = vpop.f32.mrf.mxu0
        %v6053 = vadd.f32 0.0, %v6052
        %v6054 = vpop.f32.mrf.mxu0
        %v6055 = vpop.f32.mrf.mxu0
        %v6056 = vadd.f32 0.0, %v6055
        %v6057 = vpop.f32.mrf.mxu0
        %6058 = vmatprep.mubr.bf16.mxu0 %v5712
        %6059 = vmatmul.mubr.bf16.gmra.mxu0 %v5711
        %v6060 = vpop.f32.mrf.mxu0
        %v6061 = vadd.f32 0.0, %v6060
        %v6062 = vpop.f32.mrf.mxu0
        %v6063 = vpop.f32.mrf.mxu0
        %v6064 = vadd.f32 0.0, %v6063
        %v6065 = vpop.f32.mrf.mxu0
        %6066 = vdwg.mxu0
        %6067 = vmatprep.subr.bf16.mxu0 0
        %6068 = vmatpush1.bf16.msra.mxu0 %v5881
        %6069 = vmatprep.subr.bf16.mxu0 0
        %6070 = vmatpush1.bf16.msra.mxu0 %v5880
        %6071 = vmatprep.subr.bf16.mxu0 0
        %6072 = vmatpush1.bf16.msra.mxu0 %v5879
        %6073 = vmatprep.subr.bf16.mxu0 0
        %6074 = vmatpush1.bf16.msra.mxu0 %v5878
        %6075 = vmatprep.subr.bf16.mxu0 0
        %6076 = vmatpush1.bf16.msra.mxu0 %v5877
        %6077 = vmatprep.subr.bf16.mxu0 0
        %6078 = vmatpush1.bf16.msra.mxu0 %v5876
        %6079 = vmatprep.subr.bf16.mxu0 0
        %6080 = vmatpush1.bf16.msra.mxu0 %v5875
        %6081 = vmatprep.subr.bf16.mxu0 0
        %6082 = vmatpush1.bf16.msra.mxu0 %v5874
        %6083 = vmatprep.subr.bf16.mxu0 0
        %6084 = vmatpush2.bf16.msra.mxu0 0
        %6085 = vmatprep.subr.bf16.mxu0 0
        %6086 = vmatpush2.bf16.msra.mxu0 0
        %6087 = vmatprep.subr.bf16.mxu0 0
        %6088 = vmatpush2.bf16.msra.mxu0 0
        %6089 = vmatprep.subr.bf16.mxu0 0
        %6090 = vmatpush2.bf16.msra.mxu0 0
        %6091 = vmatprep.subr.bf16.mxu0 0
        %6092 = vmatpush2.bf16.msra.mxu0 0
        %6093 = vmatprep.subr.bf16.mxu0 0
        %6094 = vmatpush2.bf16.msra.mxu0 0
        %6095 = vmatprep.subr.bf16.mxu0 0
        %6096 = vmatpush2.bf16.msra.mxu0 0
        %6097 = vmatprep.subr.bf16.mxu0 0
        %6098 = vmatpush2.bf16.msra.mxu0 0
        %6099 = vmatprep.mubr.bf16.mxu0 0
        %6100 = vmatmul.mubr.bf16.gmra.mxu0 %v5668
        %v6101 = vpop.f32.mrf.mxu0
        %v6102 = vadd.f32 %v5941, %v6101
        %v6103 = vpop.f32.mrf.mxu0
        %v6104 = vpop.f32.mrf.mxu0
        %v6105 = vadd.f32 %v5944, %v6104
        %v6106 = vpop.f32.mrf.mxu0
        %6107 = vmatprep.mubr.bf16.mxu0 0
        %6108 = vmatmul.mubr.bf16.gmra.mxu0 %v5671
        %v6109 = vpop.f32.mrf.mxu0
        %v6110 = vadd.f32 %v5949, %v6109
        %v6111 = vpop.f32.mrf.mxu0
        %v6112 = vpop.f32.mrf.mxu0
        %v6113 = vadd.f32 %v5952, %v6112
        %v6114 = vpop.f32.mrf.mxu0
        %6115 = vmatprep.mubr.bf16.mxu0 0
        %6116 = vmatmul.mubr.bf16.gmra.mxu0 %v5674
        %v6117 = vpop.f32.mrf.mxu0
        %v6118 = vadd.f32 %v5957, %v6117
        %v6119 = vpop.f32.mrf.mxu0
        %v6120 = vpop.f32.mrf.mxu0
        %v6121 = vadd.f32 %v5960, %v6120
        %v6122 = vpop.f32.mrf.mxu0
        %6123 = vmatprep.mubr.bf16.mxu0 0
        %6124 = vmatmul.mubr.bf16.gmra.mxu0 %v5677
        %v6125 = vpop.f32.mrf.mxu0
        %v6126 = vadd.f32 %v5965, %v6125
        %v6127 = vpop.f32.mrf.mxu0
        %v6128 = vpop.f32.mrf.mxu0
        %v6129 = vadd.f32 %v5968, %v6128
        %v6130 = vpop.f32.mrf.mxu0
        %6131 = vmatprep.mubr.bf16.mxu0 0
        %6132 = vmatmul.mubr.bf16.gmra.mxu0 %v5680
        %v6133 = vpop.f32.mrf.mxu0
        %v6134 = vadd.f32 %v5973, %v6133
        %v6135 = vpop.f32.mrf.mxu0
        %v6136 = vpop.f32.mrf.mxu0
        %v6137 = vadd.f32 %v5976, %v6136
        %v6138 = vpop.f32.mrf.mxu0
        %6139 = vmatprep.mubr.bf16.mxu0 0
        %6140 = vmatmul.mubr.bf16.gmra.mxu0 %v5683
        %v6141 = vpop.f32.mrf.mxu0
        %v6142 = vadd.f32 %v5981, %v6141
        %v6143 = vpop.f32.mrf.mxu0
        %v6144 = vpop.f32.mrf.mxu0
        %v6145 = vadd.f32 %v5984, %v6144
        %v6146 = vpop.f32.mrf.mxu0
        %6147 = vmatprep.mubr.bf16.mxu0 0
        %6148 = vmatmul.mubr.bf16.gmra.mxu0 %v5686
        %v6149 = vpop.f32.mrf.mxu0
        %v6150 = vadd.f32 %v5989, %v6149
        %v6151 = vpop.f32.mrf.mxu0
        %v6152 = vpop.f32.mrf.mxu0
        %v6153 = vadd.f32 %v5992, %v6152
        %v6154 = vpop.f32.mrf.mxu0
        %6155 = vmatprep.mubr.bf16.mxu0 0
        %6156 = vmatmul.mubr.bf16.gmra.mxu0 %v5689
        %v6157 = vpop.f32.mrf.mxu0
        %v6158 = vadd.f32 %v5997, %v6157
        %v6159 = vpop.f32.mrf.mxu0
        %v6160 = vpop.f32.mrf.mxu0
        %v6161 = vadd.f32 %v6000, %v6160
        %v6162 = vpop.f32.mrf.mxu0
        %6163 = vmatprep.mubr.bf16.mxu0 0
        %6164 = vmatmul.mubr.bf16.gmra.mxu0 %v5692
        %v6165 = vpop.f32.mrf.mxu0
        %v6166 = vadd.f32 %v6005, %v6165
        %v6167 = vpop.f32.mrf.mxu0
        %v6168 = vpop.f32.mrf.mxu0
        %v6169 = vadd.f32 %v6008, %v6168
        %v6170 = vpop.f32.mrf.mxu0
        %6171 = vmatprep.mubr.bf16.mxu0 0
        %6172 = vmatmul.mubr.bf16.gmra.mxu0 %v5695
        %v6173 = vpop.f32.mrf.mxu0
        %v6174 = vadd.f32 %v6013, %v6173
        %v6175 = vpop.f32.mrf.mxu0
        %v6176 = vpop.f32.mrf.mxu0
        %v6177 = vadd.f32 %v6016, %v6176
        %v6178 = vpop.f32.mrf.mxu0
        %6179 = vmatprep.mubr.bf16.mxu0 0
        %6180 = vmatmul.mubr.bf16.gmra.mxu0 %v5698
        %v6181 = vpop.f32.mrf.mxu0
        %v6182 = vadd.f32 %v6021, %v6181
        %v6183 = vpop.f32.mrf.mxu0
        %v6184 = vpop.f32.mrf.mxu0
        %v6185 = vadd.f32 %v6024, %v6184
        %v6186 = vpop.f32.mrf.mxu0
        %6187 = vmatprep.mubr.bf16.mxu0 0
        %6188 = vmatmul.mubr.bf16.gmra.mxu0 %v5701
        %v6189 = vpop.f32.mrf.mxu0
        %v6190 = vadd.f32 %v6029, %v6189
        %v6191 = vpop.f32.mrf.mxu0
        %v6192 = vpop.f32.mrf.mxu0
        %v6193 = vadd.f32 %v6032, %v6192
        %v6194 = vpop.f32.mrf.mxu0
        %6195 = vmatprep.mubr.bf16.mxu0 0
        %6196 = vmatmul.mubr.bf16.gmra.mxu0 %v5704
        %v6197 = vpop.f32.mrf.mxu0
        %v6198 = vadd.f32 %v6037, %v6197
        %v6199 = vpop.f32.mrf.mxu0
        %v6200 = vpop.f32.mrf.mxu0
        %v6201 = vadd.f32 %v6040, %v6200
        %v6202 = vpop.f32.mrf.mxu0
        %6203 = vmatprep.mubr.bf16.mxu0 0
        %6204 = vmatmul.mubr.bf16.gmra.mxu0 %v5707
        %v6205 = vpop.f32.mrf.mxu0
        %v6206 = vadd.f32 %v6045, %v6205
        %v6207 = vpop.f32.mrf.mxu0
        %v6208 = vpop.f32.mrf.mxu0
        %v6209 = vadd.f32 %v6048, %v6208
        %v6210 = vpop.f32.mrf.mxu0
        %6211 = vmatprep.mubr.bf16.mxu0 0
        %6212 = vmatmul.mubr.bf16.gmra.mxu0 %v5710
        %v6213 = vpop.f32.mrf.mxu0
        %v6214 = vadd.f32 %v6053, %v6213
        %v6215 = vpop.f32.mrf.mxu0
        %v6216 = vpop.f32.mrf.mxu0
        %v6217 = vadd.f32 %v6056, %v6216
        %v6218 = vpop.f32.mrf.mxu0
        %6219 = vmatprep.mubr.bf16.mxu0 0
        %6220 = vmatmul.mubr.bf16.gmra.mxu0 %v5713
        %v6221 = vpop.f32.mrf.mxu0
        %v6222 = vadd.f32 %v6061, %v6221
        %v6223 = vpop.f32.mrf.mxu0
        %v6224 = vpop.f32.mrf.mxu0
        %v6225 = vadd.f32 %v6064, %v6224
        %v6226 = vpop.f32.mrf.mxu0
        %6227 = vdwg.mxu0
        %v6228 = vadd.f32 %v5267, %v6102
        %v6229 = vadd.f32 %v5270, %v6105
        %v6230 = vadd.f32 %v5275, %v6110
        %v6231 = vadd.f32 %v5278, %v6113
        %v6232 = vadd.f32 %v5283, %v6118
        %v6233 = vadd.f32 %v5286, %v6121
        %v6234 = vadd.f32 %v5291, %v6126
        %v6235 = vadd.f32 %v5294, %v6129
        %v6236 = vadd.f32 %v5299, %v6134
        %v6237 = vadd.f32 %v5302, %v6137
        %v6238 = vadd.f32 %v5307, %v6142
        %v6239 = vadd.f32 %v5310, %v6145
        %v6240 = vadd.f32 %v5315, %v6150
        %v6241 = vadd.f32 %v5318, %v6153
        %v6242 = vadd.f32 %v5323, %v6158
        %v6243 = vadd.f32 %v5326, %v6161
        %v6244 = vadd.f32 %v5331, %v6166
        %v6245 = vadd.f32 %v5334, %v6169
        %v6246 = vadd.f32 %v5339, %v6174
        %v6247 = vadd.f32 %v5342, %v6177
        %v6248 = vadd.f32 %v5347, %v6182
        %v6249 = vadd.f32 %v5350, %v6185
        %v6250 = vadd.f32 %v5355, %v6190
        %v6251 = vadd.f32 %v5358, %v6193
        %v6252 = vadd.f32 %v5363, %v6198
        %v6253 = vadd.f32 %v5366, %v6201
        %v6254 = vadd.f32 %v5371, %v6206
        %v6255 = vadd.f32 %v5374, %v6209
        %v6256 = vadd.f32 %v5379, %v6214
        %v6257 = vadd.f32 %v5382, %v6217
        %v6258 = vadd.f32 %v5387, %v6222
        %v6259 = vadd.f32 %v5390, %v6225
        %v6260 = vld [vmem:[%s5] sm:$0x1]
        %v6262 = vlaneseq
        %v6263 = vshrl.u32 %v6262, 7
        %v6264 = vsub.s32 0, %v6263
        %v6265 = vrot.slane %v6260, %v6264
        %v6267 = vmul.f32 %v6228, %v6265
        %v6268 = vmul.f32 %v6229, %v6265
        %v6269 = vmul.f32 %v6230, %v6265
        %v6270 = vmul.f32 %v6231, %v6265
        %v6271 = vmul.f32 %v6232, %v6265
        %v6272 = vmul.f32 %v6233, %v6265
        %v6273 = vmul.f32 %v6234, %v6265
        %v6274 = vmul.f32 %v6235, %v6265
        %v6275 = vmul.f32 %v6236, %v6265
        %v6276 = vmul.f32 %v6237, %v6265
        %v6277 = vmul.f32 %v6238, %v6265
        %v6278 = vmul.f32 %v6239, %v6265
        %v6279 = vmul.f32 %v6240, %v6265
        %v6280 = vmul.f32 %v6241, %v6265
        %v6281 = vmul.f32 %v6242, %v6265
        %v6282 = vmul.f32 %v6243, %v6265
        %v6283 = vmul.f32 %v6244, %v6265
        %v6284 = vmul.f32 %v6245, %v6265
        %v6285 = vmul.f32 %v6246, %v6265
        %v6286 = vmul.f32 %v6247, %v6265
        %v6287 = vmul.f32 %v6248, %v6265
        %v6288 = vmul.f32 %v6249, %v6265
        %v6289 = vmul.f32 %v6250, %v6265
        %v6290 = vmul.f32 %v6251, %v6265
        %v6291 = vmul.f32 %v6252, %v6265
        %v6292 = vmul.f32 %v6253, %v6265
        %v6293 = vmul.f32 %v6254, %v6265
        %v6294 = vmul.f32 %v6255, %v6265
        %v6295 = vmul.f32 %v6256, %v6265
        %v6296 = vmul.f32 %v6257, %v6265
        %v6297 = vmul.f32 %v6258, %v6265
        %v6298 = vmul.f32 %v6259, %v6265
        %v6299 = vld [vmem:[%s6] sm:$0x1]
        %v6301 = vlaneseq
        %v6302 = vshrl.u32 %v6301, 7
        %v6303 = vsub.s32 0, %v6302
        %v6304 = vrot.slane %v6299, %v6303
        %v6306 = vadd.f32 %v6267, %v6304
        %v6307 = vadd.f32 %v6268, %v6304
        %v6308 = vadd.f32 %v6269, %v6304
        %v6309 = vadd.f32 %v6270, %v6304
        %v6310 = vadd.f32 %v6271, %v6304
        %v6311 = vadd.f32 %v6272, %v6304
        %v6312 = vadd.f32 %v6273, %v6304
        %v6313 = vadd.f32 %v6274, %v6304
        %v6314 = vadd.f32 %v6275, %v6304
        %v6315 = vadd.f32 %v6276, %v6304
        %v6316 = vadd.f32 %v6277, %v6304
        %v6317 = vadd.f32 %v6278, %v6304
        %v6318 = vadd.f32 %v6279, %v6304
        %v6319 = vadd.f32 %v6280, %v6304
        %v6320 = vadd.f32 %v6281, %v6304
        %v6321 = vadd.f32 %v6282, %v6304
        %v6322 = vadd.f32 %v6283, %v6304
        %v6323 = vadd.f32 %v6284, %v6304
        %v6324 = vadd.f32 %v6285, %v6304
        %v6325 = vadd.f32 %v6286, %v6304
        %v6326 = vadd.f32 %v6287, %v6304
        %v6327 = vadd.f32 %v6288, %v6304
        %v6328 = vadd.f32 %v6289, %v6304
        %v6329 = vadd.f32 %v6290, %v6304
        %v6330 = vadd.f32 %v6291, %v6304
        %v6331 = vadd.f32 %v6292, %v6304
        %v6332 = vadd.f32 %v6293, %v6304
        %v6333 = vadd.f32 %v6294, %v6304
        %v6334 = vadd.f32 %v6295, %v6304
        %v6335 = vadd.f32 %v6296, %v6304
        %v6336 = vadd.f32 %v6297, %v6304
        %v6337 = vadd.f32 %v6298, %v6304
        %v6338 = vld [vmem:[#allocation4] sm:$0xff]
        %v6339 = vld [vmem:[#allocation4 + $0x8] sm:$0xff]
        %v6340 = vld [vmem:[#allocation4 + $0x10] sm:$0xff]
        %v6341 = vld [vmem:[#allocation4 + $0x18] sm:$0xff]
        %v6342 = vld [vmem:[#allocation4 + $0x20] sm:$0xff]
        %v6343 = vld [vmem:[#allocation4 + $0x28] sm:$0xff]
        %v6344 = vld [vmem:[#allocation4 + $0x30] sm:$0xff]
        %v6345 = vld [vmem:[#allocation4 + $0x38] sm:$0xff]
        %v6346 = vld [vmem:[#allocation4 + $0x40] sm:$0xff]
        %v6347 = vld [vmem:[#allocation4 + $0x48] sm:$0xff]
        %v6348 = vld [vmem:[#allocation4 + $0x50] sm:$0xff]
        %v6349 = vld [vmem:[#allocation4 + $0x58] sm:$0xff]
        %v6350 = vld [vmem:[#allocation4 + $0x60] sm:$0xff]
        %v6351 = vld [vmem:[#allocation4 + $0x68] sm:$0xff]
        %v6352 = vld [vmem:[#allocation4 + $0x70] sm:$0xff]
        %v6353 = vld [vmem:[#allocation4 + $0x78] sm:$0xff]
        %v6354 = vld [vmem:[#allocation4 + $0x80] sm:$0xff]
        %v6355 = vld [vmem:[#allocation4 + $0x88] sm:$0xff]
        %v6356 = vld [vmem:[#allocation4 + $0x90] sm:$0xff]
        %v6357 = vld [vmem:[#allocation4 + $0x98] sm:$0xff]
        %v6358 = vld [vmem:[#allocation4 + $0xa0] sm:$0xff]
        %v6359 = vld [vmem:[#allocation4 + $0xa8] sm:$0xff]
        %v6360 = vld [vmem:[#allocation4 + $0xb0] sm:$0xff]
        %v6361 = vld [vmem:[#allocation4 + $0xb8] sm:$0xff]
        %v6362 = vld [vmem:[#allocation4 + $0xc0] sm:$0xff]
        %v6363 = vld [vmem:[#allocation4 + $0xc8] sm:$0xff]
        %v6364 = vld [vmem:[#allocation4 + $0xd0] sm:$0xff]
        %v6365 = vld [vmem:[#allocation4 + $0xd8] sm:$0xff]
        %v6366 = vld [vmem:[#allocation4 + $0xe0] sm:$0xff]
        %v6367 = vld [vmem:[#allocation4 + $0xe8] sm:$0xff]
        %v6368 = vld [vmem:[#allocation4 + $0xf0] sm:$0xff]
        %v6369 = vld [vmem:[#allocation4 + $0xf8] sm:$0xff]
        %v6370 = vadd.f32 %v6306, %v6338
        %v6371 = vadd.f32 %v6307, %v6339
        %v6372 = vadd.f32 %v6308, %v6340
        %v6373 = vadd.f32 %v6309, %v6341
        %v6374 = vadd.f32 %v6310, %v6342
        %v6375 = vadd.f32 %v6311, %v6343
        %v6376 = vadd.f32 %v6312, %v6344
        %v6377 = vadd.f32 %v6313, %v6345
        %v6378 = vadd.f32 %v6314, %v6346
        %v6379 = vadd.f32 %v6315, %v6347
        %v6380 = vadd.f32 %v6316, %v6348
        %v6381 = vadd.f32 %v6317, %v6349
        %v6382 = vadd.f32 %v6318, %v6350
        %v6383 = vadd.f32 %v6319, %v6351
        %v6384 = vadd.f32 %v6320, %v6352
        %v6385 = vadd.f32 %v6321, %v6353
        %v6386 = vadd.f32 %v6322, %v6354
        %v6387 = vadd.f32 %v6323, %v6355
        %v6388 = vadd.f32 %v6324, %v6356
        %v6389 = vadd.f32 %v6325, %v6357
        %v6390 = vadd.f32 %v6326, %v6358
        %v6391 = vadd.f32 %v6327, %v6359
        %v6392 = vadd.f32 %v6328, %v6360
        %v6393 = vadd.f32 %v6329, %v6361
        %v6394 = vadd.f32 %v6330, %v6362
        %v6395 = vadd.f32 %v6331, %v6363
        %v6396 = vadd.f32 %v6332, %v6364
        %v6397 = vadd.f32 %v6333, %v6365
        %v6398 = vadd.f32 %v6334, %v6366
        %v6399 = vadd.f32 %v6335, %v6367
        %v6400 = vadd.f32 %v6336, %v6368
        %v6401 = vadd.f32 %v6337, %v6369
        %v6402 = vmax.f32 %v6370, 0.0
        %v6403 = vmax.f32 %v6371, 0.0
        %v6404 = vmax.f32 %v6372, 0.0
        %v6405 = vmax.f32 %v6373, 0.0
        %v6406 = vmax.f32 %v6374, 0.0
        %v6407 = vmax.f32 %v6375, 0.0
        %v6408 = vmax.f32 %v6376, 0.0
        %v6409 = vmax.f32 %v6377, 0.0
        %v6410 = vmax.f32 %v6378, 0.0
        %v6411 = vmax.f32 %v6379, 0.0
        %v6412 = vmax.f32 %v6380, 0.0
        %v6413 = vmax.f32 %v6381, 0.0
        %v6414 = vmax.f32 %v6382, 0.0
        %v6415 = vmax.f32 %v6383, 0.0
        %v6416 = vmax.f32 %v6384, 0.0
        %v6417 = vmax.f32 %v6385, 0.0
        %v6418 = vmax.f32 %v6386, 0.0
        %v6419 = vmax.f32 %v6387, 0.0
        %v6420 = vmax.f32 %v6388, 0.0
        %v6421 = vmax.f32 %v6389, 0.0
        %v6422 = vmax.f32 %v6390, 0.0
        %v6423 = vmax.f32 %v6391, 0.0
        %v6424 = vmax.f32 %v6392, 0.0
        %v6425 = vmax.f32 %v6393, 0.0
        %v6426 = vmax.f32 %v6394, 0.0
        %v6427 = vmax.f32 %v6395, 0.0
        %v6428 = vmax.f32 %v6396, 0.0
        %v6429 = vmax.f32 %v6397, 0.0
        %v6430 = vmax.f32 %v6398, 0.0
        %v6431 = vmax.f32 %v6399, 0.0
        %v6432 = vmax.f32 %v6400, 0.0
        %v6433 = vmax.f32 %v6401, 0.0
        %6434 = vst [vmem:[%s271] sm:$0xff] %v6402
        %6435 = vst [vmem:[%s271 + $0x8] sm:$0xff] %v6403
        %6436 = vst [vmem:[%s271 + $0x10] sm:$0xff] %v6404
        %6437 = vst [vmem:[%s271 + $0x18] sm:$0xff] %v6405
        %6438 = vst [vmem:[%s271 + $0x20] sm:$0xff] %v6406
        %6439 = vst [vmem:[%s271 + $0x28] sm:$0xff] %v6407
        %6440 = vst [vmem:[%s271 + $0x30] sm:$0xff] %v6408
        %6441 = vst [vmem:[%s271 + $0x38] sm:$0xff] %v6409
        %6442 = vst [vmem:[%s271 + $0x40] sm:$0xff] %v6410
        %6443 = vst [vmem:[%s271 + $0x48] sm:$0xff] %v6411
        %6444 = vst [vmem:[%s271 + $0x50] sm:$0xff] %v6412
        %6445 = vst [vmem:[%s271 + $0x58] sm:$0xff] %v6413
        %6446 = vst [vmem:[%s271 + $0x60] sm:$0xff] %v6414
        %6447 = vst [vmem:[%s271 + $0x68] sm:$0xff] %v6415
        %6448 = vst [vmem:[%s271 + $0x70] sm:$0xff] %v6416
        %6449 = vst [vmem:[%s271 + $0x78] sm:$0xff] %v6417
        %6450 = vst [vmem:[%s271 + $0x80] sm:$0xff] %v6418
        %6451 = vst [vmem:[%s271 + $0x88] sm:$0xff] %v6419
        %6452 = vst [vmem:[%s271 + $0x90] sm:$0xff] %v6420
        %6453 = vst [vmem:[%s271 + $0x98] sm:$0xff] %v6421
        %6454 = vst [vmem:[%s271 + $0xa0] sm:$0xff] %v6422
        %6455 = vst [vmem:[%s271 + $0xa8] sm:$0xff] %v6423
        %6456 = vst [vmem:[%s271 + $0xb0] sm:$0xff] %v6424
        %6457 = vst [vmem:[%s271 + $0xb8] sm:$0xff] %v6425
        %6458 = vst [vmem:[%s271 + $0xc0] sm:$0xff] %v6426
        %6459 = vst [vmem:[%s271 + $0xc8] sm:$0xff] %v6427
        %6460 = vst [vmem:[%s271 + $0xd0] sm:$0xff] %v6428
        %6461 = vst [vmem:[%s271 + $0xd8] sm:$0xff] %v6429
        %6462 = vst [vmem:[%s271 + $0xe0] sm:$0xff] %v6430
        %6463 = vst [vmem:[%s271 + $0xe8] sm:$0xff] %v6431
        %6464 = vst [vmem:[%s271 + $0xf0] sm:$0xff] %v6432
        %6465 = vst [vmem:[%s271 + $0xf8] sm:$0xff] %v6433
        %s6466 = sand.u32 %s181, 1
        %s6467 = scalar_lea.sflag [#allocation6], %s6466
        %s6468 = sand.u32 %s181, 1
        %s6469 = smul.addr %s6468, 256
        %s6470 = scalar_lea.vmem [#allocation5], %s6469
        // Predicated region
        $region49: #{tpu_custom_call.1} parent=47 // pred_check
          %p6471 = pneg %p191
        $region50: #{tpu_custom_call.1} parent=47 // pred_check_branch
          %6473 = sbr.rel (%p6471) target = $region52
        $region51: #{tpu_custom_call.1} parent=47 // pred_region
          %s6475 = ssub.s32 4096, 4096
          %6476 = vsyncadd %s6467, %s6475
          %s6477 = smul.addr %s21, 32
          %s6478 = smul.addr %s6477, 128
          %s6479 = scalar_lea.hbm %s7, %s6478
          %s6480 = sshll.u32 %s6470, 4
          %s6481 = int_to_ptr.vmem [resolvable:$true] %s6480
          %6486 = dma.vmem_to_hbm [thread:$0]  %s6481, 4096, %s6479, %s6467, 128, 128, 8
        $region52: #{tpu_custom_call.1} parent=47 // pred_fallthru
          _
      $region48: #{tpu_custom_call.1} parent=5 // pred_fallthru
        _
      %p6487 = scmp.le.s32.totalorder 2, %s16
      // Predicated region
      $region53: #{tpu_custom_call.1} parent=5 // pred_check
        %p6488 = pneg %p6487
      $region54: #{tpu_custom_call.1} parent=5 // pred_check_branch
        %6490 = sbr.rel (%p6488) target = $region56
      $region55: #{tpu_custom_call.1} parent=5 // pred_region
        %s6491 = ssub.s32 %s16, 2
        // Predicated region
        $region57: #{tpu_custom_call.1} parent=55 // pred_check
          %p6492 = pneg %p197
        $region58: #{tpu_custom_call.1} parent=55 // pred_check_branch
          %6494 = sbr.rel (%p6492) target = $region60
        $region59: #{tpu_custom_call.1} parent=55 // pred_region
          %s6495 = sand.u32 %s182, 1
          %s6496 = scalar_lea.sflag [#allocation6], %s6495
          %s6497 = sand.u32 %s182, 1
          %s6498 = smul.addr %s6497, 256
          %s6499 = scalar_lea.vmem [#allocation5], %s6498
          %6500 = dma.done %s6496, 4096
        $region60: #{tpu_custom_call.1} parent=55 // pred_fallthru
          _
      $region56: #{tpu_custom_call.1} parent=5 // pred_fallthru
        _
    $region6: #{tpu_custom_call.1} parent=1 // loop_footer
      %s20 = sadd.s32 1, %s16
    $region7: #{tpu_custom_call.1} parent=1 // loop_footer_branch
      %15 = sbr.rel target = $region3
    $region8: #{tpu_custom_call.1} parent=1 // loop_exit
      _
    %6501 = vsyncpa [#allocation6], 1
    %s6502 = scalar_lea.sflag [#allocation6], 1
    %6503 = vsyncpa %s6502, 1

</llo_original>
